<compile_context>
chip_gen: v6e
topology: v6e:2x2x1
jax: 0.10.0
libtpu: 0.0.40
codegen_flags: <defaults>
</compile_context>

<pallas_src>
import numpy as np

import jax
import jax.numpy as jnp
from jax.experimental import pallas as pl
from jax.experimental.pallas import tpu as pltpu


# ---------------------------------------------------------------------------
# One-time host-side constant builders (hoisted out of the per-call path).
# ---------------------------------------------------------------------------
def _bilinear_matrix_np(out_size, in_size):
    """Interpolation matrix for F.interpolate(mode='bilinear', align_corners=True)."""
    m = np.zeros((out_size, in_size), np.float32)
    if out_size == 1:
        m[0, 0] = 1.0
        return m
    src = np.arange(out_size, dtype=np.float64) * (in_size - 1) / (out_size - 1)
    lo = np.clip(np.floor(src).astype(np.int64), 0, in_size - 1)
    hi = np.clip(lo + 1, 0, in_size - 1)
    frac = src - lo
    for i in range(out_size):
        m[i, lo[i]] += 1.0 - frac[i]
        m[i, hi[i]] += frac[i]
    return m


def _gather_ops_T(h_in, w_in, kh, kw, stride, padding):
    """Per-tap spatial gather operators S[t] of shape (P_in, P_out).

    For a channel-major activation A (C, P_in), `A @ S[t]` gathers, for every
    output position, the input value read by kernel tap t (0 where the tap
    lands in the zero padding).  Turns the in-kernel im2col of every conv into
    plain MXU matmuls (no strided VMEM access needed)."""
    h_out = (h_in + 2 * padding - kh) // stride + 1
    w_out = (w_in + 2 * padding - kw) // stride + 1
    ops = np.zeros((kh * kw, h_in * w_in, h_out * w_out), np.float32)
    for dy in range(kh):
        for dx in range(kw):
            t = dy * kw + dx
            for oy in range(h_out):
                iy = oy * stride + dy - padding
                if not (0 <= iy < h_in):
                    continue
                for ox in range(w_out):
                    ix = ox * stride + dx - padding
                    if 0 <= ix < w_in:
                        ops[t, iy * w_in + ix, oy * w_out + ox] = 1.0
    return ops, h_out, w_out


def precompute_dke_constants(params, H, W):
    """Preprocess all weights / spatial operators once: per-tap channel-mixing
    matrices, per-layer gather operators, and the head-folded bilinear
    upsample operator (P3, H*W)."""
    w1, w2, wn, wh = params["b1_w"], params["b2_w"], params["nk_w"], params["hd_w"]
    c1, c_in = w1.shape[0], w1.shape[1]
    c2 = w2.shape[0]
    cn = wn.shape[0]

    # geometry of the conv stack (3x3/s2/p1, 3x3/s2/p1, 1x1, 3x3/s1/p1)
    s1, H1, W1 = _gather_ops_T(H, W, 3, 3, stride=2, padding=1)
    s2, H2, W2 = _gather_ops_T(H1, W1, 3, 3, stride=2, padding=1)
    s3, H3, W3 = _gather_ops_T(H2, W2, 3, 3, stride=1, padding=1)

    # bilinear upsample (align_corners=True) folded into a single operator:
    #   out[oy*W+ox] = sum_q  y[q] * wh_m[oy, ry(q)] * ww_m[ox, rx(q)]
    wh_m = _bilinear_matrix_np(H, H3)                       # (H, H3)
    ww_m = _bilinear_matrix_np(W, W3)                       # (W, W3)
    up = np.einsum("hr,ws->hwrs", wh_m, ww_m).reshape(H * W, H3 * W3)
    up_t = np.ascontiguousarray(up.T)                       # (P3, H*W)

    return {
        # conv1 (3x3 s2 p1): per-tap gather ops on the raw input + weight mats
        "s1t": jnp.asarray(s1),                                          # (9, H*W, P1)
        "w1t": jnp.transpose(w1, (2, 3, 0, 1)).reshape(9, c1, c_in),     # (9, c1, cin)
        "b1": params["b1_b"].reshape(c1, 1),
        # conv2 (3x3 s2 p1)
        "s2t": jnp.asarray(s2),                                          # (9, P1, P2)
        "w2t": jnp.transpose(w2, (2, 3, 0, 1)).reshape(9, c2, c1),       # (9, c2, c1)
        "b2": params["b2_b"].reshape(c2, 1),
        # neck 1x1
        "wnt": wn.reshape(cn, c2),                                       # (cn, c2)
        "bn": params["nk_b"].reshape(cn, 1),
        # head 3x3 (single output channel) as per-tap (1, cn) weight rows
        "s3t": jnp.asarray(s3),                                          # (9, P2, P3)
        "whr": jnp.transpose(wh, (2, 3, 0, 1)).reshape(9, 1, cn),        # (9, 1, cn)
        "bh": params["hd_b"].reshape(1, 1),
        # bilinear upsample operator (head output row -> lane-dense out row)
        "upT": jnp.asarray(up_t),                                        # (P3, H*W)
    }


# ---------------------------------------------------------------------------
# Fused Pallas kernel: one batch element per grid step, everything in VMEM.
# ---------------------------------------------------------------------------
def _dke_fused_kernel(x_ref, s1t_ref, w1t_ref, b1_ref, s2t_ref, w2t_ref, b2_ref,
                      wnt_ref, bn_ref, s3t_ref, whr_ref, bh_ref, upT_ref, o_ref):
    f32 = jnp.float32
    x = x_ref[0]                                                        # (Cin, H*W)

    # ---- backbone conv1 (3x3 s2 p1) + ReLU: per-tap gather + channel mix ----
    a1 = b1_ref[...]                                                    # (C1, 1)
    for t in range(s1t_ref.shape[0]):
        g = jnp.dot(x, s1t_ref[t], preferred_element_type=f32)         # (Cin, P1)
        a1 = a1 + jnp.dot(w1t_ref[t], g, preferred_element_type=f32)   # (C1, P1)
    a1 = jnp.maximum(a1, 0.0)

    # ---- backbone conv2 (3x3 s2 p1) + ReLU ----------------------------------
    a2 = b2_ref[...]                                                    # (C2, 1)
    for t in range(s2t_ref.shape[0]):
        g = jnp.dot(a1, s2t_ref[t], preferred_element_type=f32)        # (C1, P2)
        a2 = a2 + jnp.dot(w2t_ref[t], g, preferred_element_type=f32)   # (C2, P2)
    a2 = jnp.maximum(a2, 0.0)

    # ---- neck 1x1 conv + ReLU -----------------------------------------------
    a3 = jnp.dot(wnt_ref[...], a2, preferred_element_type=f32) + bn_ref[...]
    a3 = jnp.maximum(a3, 0.0)                                           # (Cn, P3)

    # ---- head 3x3 s1 p1 (single output channel); MXU row-reduction ----------
    y = bh_ref[...]                                                     # (1, 1)
    for t in range(s3t_ref.shape[0]):
        g = jnp.dot(a3, s3t_ref[t], preferred_element_type=f32)        # (Cn, P3)
        y = y + jnp.dot(whr_ref[t], g, preferred_element_type=f32)     # (1, P3)

    # ---- bilinear upsample (align_corners=True) as one operator matmul ------
    out = jnp.dot(y, upT_ref[...], preferred_element_type=f32)         # (1, H*W)
    o_ref[0] = out.astype(o_ref.dtype)


# ---------------------------------------------------------------------------
# Wrapper: only a free NCHW -> (N, C, H*W) reshape outside the kernel.
# ---------------------------------------------------------------------------
def _const_spec(arr):
    n = arr.ndim
    return pl.BlockSpec(arr.shape, lambda b, _n=n: (0,) * _n)


def _dke_apply(consts, x_nchw):
    N, C, H, W = x_nchw.shape
    x_cm = x_nchw.reshape(N, C, H * W).astype(jnp.float32)

    order = ("s1t", "w1t", "b1", "s2t", "w2t", "b2",
             "wnt", "bn", "s3t", "whr", "bh", "upT")
    const_args = [consts[k] for k in order]

    out = pl.pallas_call(
        _dke_fused_kernel,
        out_shape=jax.ShapeDtypeStruct((N, 1, H * W), jnp.float32),
        grid_spec=pltpu.PrefetchScalarGridSpec(
            num_scalar_prefetch=0,
            grid=(N,),
            in_specs=[pl.BlockSpec((1, C, H * W), lambda b: (b, 0, 0))]
                     + [_const_spec(a) for a in const_args],
            out_specs=pl.BlockSpec((1, 1, H * W), lambda b: (b, 0, 0)),
        ),
        compiler_params=pltpu.CompilerParams(
            dimension_semantics=("parallel",)),
    )(x_cm, *const_args)
    return out.reshape(N, 1, H, W)


_dke_apply_jit = jax.jit(_dke_apply)


def dke_forward(consts, x_nchw, batch=None, is_training=True):
    if batch is None:
        batch = {}
    pred = _dke_apply_jit(consts, x_nchw)
    batch["pred"] = pred
    # TODO(synk): `self.decode(batch, neck_out, is_training)` is an external
    # postprocessing module not defined in the reference; passthrough here.
    result = {}
    result.update({"pred": batch["pred"]})
    return result


# ---------------------------------------------------------------------------
# Deterministic synthetic parameters (same architecture instantiation):
#   backbone: 3x3/s2 (Cin->16)+ReLU, 3x3/s2 (16->32)+ReLU
#   neck    : 1x1 (32->16)+ReLU
#   head    : 3x3 (16->1), then bilinear align_corners upsample to (H, W)
# ---------------------------------------------------------------------------
def init_dke_params(key, c_in=4):
    ks = jax.random.split(key, 8)

    def conv_w(k, o, i, kh, kw):
        return (jax.random.normal(k, (o, i, kh, kw), jnp.float32)
                * (2.0 / (i * kh * kw)) ** 0.5)

    def bias(k, o):
        return 0.1 * jax.random.normal(k, (o,), jnp.float32)

    return {
        "b1_w": conv_w(ks[0], 16, c_in, 3, 3), "b1_b": bias(ks[4], 16),
        "b2_w": conv_w(ks[1], 32, 16, 3, 3),   "b2_b": bias(ks[5], 32),
        "nk_w": conv_w(ks[2], 16, 32, 1, 1),   "nk_b": bias(ks[6], 16),
        "hd_w": conv_w(ks[3], 1, 16, 3, 3),    "hd_b": bias(ks[7], 1),
    }


# ---------------------------------------------------------------------------
# Pure-JAX reference (lax conv + interpolation matrices) for validation.
# ---------------------------------------------------------------------------
def _reference_forward(params, x_nchw):
    hp = jax.lax.Precision.HIGHEST

    def conv(x, w, b, stride, pad):
        y = jax.lax.conv_general_dilated(
            x, w, window_strides=(stride, stride),
            padding=((pad, pad), (pad, pad)),
            dimension_numbers=("NCHW", "OIHW", "NCHW"),
            precision=hp)
        return y + b.reshape(1, -1, 1, 1)

    f = jax.nn.relu(conv(x_nchw, params["b1_w"], params["b1_b"], 2, 1))
    f = jax.nn.relu(conv(f, params["b2_w"], params["b2_b"], 2, 1))
    n = jax.nn.relu(conv(f, params["nk_w"], params["nk_b"], 1, 0))
    y = conv(n, params["hd_w"], params["hd_b"], 1, 1)
    H, W = x_nchw.shape[2], x_nchw.shape[3]
    wh_m = jnp.asarray(_bilinear_matrix_np(H, y.shape[2]))
    ww_m = jnp.asarray(_bilinear_matrix_np(W, y.shape[3]))
    return jnp.einsum("Hh,nchw,Ww->ncHW", wh_m, y, ww_m, precision=hp)


if __name__ == "__main__":
    key = jax.random.PRNGKey(0)
    k_param, k_x = jax.random.split(key)
    x = jax.random.normal(k_x, (2, 4, 16, 16), jnp.float32)   # NCHW input
    params = init_dke_params(k_param, c_in=4)
    consts = precompute_dke_constants(params, H=16, W=16)      # one-time hoist

    result = dke_forward(consts, x, batch={}, is_training=True)
    pred = jax.block_until_ready(result["pred"])
    assert pred.shape == (2, 1, 16, 16)
    assert bool(jnp.all(jnp.isfinite(pred)))

    ref = jax.block_until_ready(_reference_forward(params, x))
    err = float(jnp.max(jnp.abs(pred - ref)))
    scale = float(jnp.max(jnp.abs(ref)))
    assert err <= 1e-2 * max(1.0, scale), f"mismatch: err={err} scale={scale}"
    print("KERNEL_OK")
</pallas_src>

<mosaic_0001>
module attributes {stable_mosaic.version = 11 : i64} {
  func.func @_dke_fused_kernel(%arg0: i32, %arg1: memref<1x4x256xf32, #tpu.memory_space<vmem>>, %arg2: memref<9x256x64xf32, #tpu.memory_space<vmem>>, %arg3: memref<9x16x4xf32, #tpu.memory_space<vmem>>, %arg4: memref<16x1xf32, #tpu.memory_space<vmem>>, %arg5: memref<9x64x16xf32, #tpu.memory_space<vmem>>, %arg6: memref<9x32x16xf32, #tpu.memory_space<vmem>>, %arg7: memref<32x1xf32, #tpu.memory_space<vmem>>, %arg8: memref<16x32xf32, #tpu.memory_space<vmem>>, %arg9: memref<16x1xf32, #tpu.memory_space<vmem>>, %arg10: memref<9x16x16xf32, #tpu.memory_space<vmem>>, %arg11: memref<9x1x16xf32, #tpu.memory_space<vmem>>, %arg12: memref<1x1xf32, #tpu.memory_space<vmem>>, %arg13: memref<16x256xf32, #tpu.memory_space<vmem>>, %arg14: memref<1x1x256xf32, #tpu.memory_space<vmem>>) attributes {dimension_semantics = [#tpu.dimension_semantics<parallel>], iteration_bounds = array<i64: 2>, scalar_prefetch = 0 : i64, scratch_operands = 0 : i64, tpu.core_type = #tpu.core_type<tc>, window_params = [{transform_indices = @transform_0, window_bounds = array<i64: 1, 4, 256>}, {pipeline_mode = #tpu.pipeline_mode<synchronous>, transform_indices = @transform_1, window_bounds = array<i64: 9, 256, 64>}, {pipeline_mode = #tpu.pipeline_mode<synchronous>, transform_indices = @transform_2, window_bounds = array<i64: 9, 16, 4>}, {pipeline_mode = #tpu.pipeline_mode<synchronous>, transform_indices = @transform_3, window_bounds = array<i64: 16, 1>}, {pipeline_mode = #tpu.pipeline_mode<synchronous>, transform_indices = @transform_4, window_bounds = array<i64: 9, 64, 16>}, {pipeline_mode = #tpu.pipeline_mode<synchronous>, transform_indices = @transform_5, window_bounds = array<i64: 9, 32, 16>}, {pipeline_mode = #tpu.pipeline_mode<synchronous>, transform_indices = @transform_6, window_bounds = array<i64: 32, 1>}, {pipeline_mode = #tpu.pipeline_mode<synchronous>, transform_indices = @transform_7, window_bounds = array<i64: 16, 32>}, {pipeline_mode = #tpu.pipeline_mode<synchronous>, transform_indices = @transform_8, window_bounds = array<i64: 16, 1>}, {pipeline_mode = #tpu.pipeline_mode<synchronous>, transform_indices = @transform_9, window_bounds = array<i64: 9, 16, 16>}, {pipeline_mode = #tpu.pipeline_mode<synchronous>, transform_indices = @transform_10, window_bounds = array<i64: 9, 1, 16>}, {pipeline_mode = #tpu.pipeline_mode<synchronous>, transform_indices = @transform_11, window_bounds = array<i64: 1, 1>}, {pipeline_mode = #tpu.pipeline_mode<synchronous>, transform_indices = @transform_12, window_bounds = array<i64: 16, 256>}, {transform_indices = @transform_13, window_bounds = array<i64: 1, 1, 256>}]} {
    %c0 = arith.constant 0 : index
    %c0_0 = arith.constant 0 : index
    %c0_1 = arith.constant 0 : index
    %0 = vector.load %arg1[%c0, %c0_0, %c0_1] : memref<1x4x256xf32, #tpu.memory_space<vmem>>, vector<1x4x256xf32>
    %1 = vector.shape_cast %0 : vector<1x4x256xf32> to vector<4x256xf32>
    %c0_2 = arith.constant 0 : index
    %c0_3 = arith.constant 0 : index
    %2 = vector.load %arg4[%c0_2, %c0_3] : memref<16x1xf32, #tpu.memory_space<vmem>>, vector<16x1xf32>
    %c0_4 = arith.constant 0 : index
    %c0_5 = arith.constant 0 : index
    %c0_6 = arith.constant 0 : index
    %3 = vector.load %arg2[%c0_4, %c0_5, %c0_6] : memref<9x256x64xf32, #tpu.memory_space<vmem>>, vector<1x256x64xf32>
    %4 = vector.shape_cast %3 : vector<1x256x64xf32> to vector<256x64xf32>
    %cst = arith.constant dense<0.000000e+00> : vector<4x64xf32>
    %5 = tpu.matmul %1, %4, %cst {dimension_numbers = #tpu.dot_dimension_numbers<[1], [0], [0], [1], [0, 0, 1, 1], [], []>} : vector<4x256xf32>, vector<256x64xf32>, vector<4x64xf32> -> vector<4x64xf32>
    %c0_7 = arith.constant 0 : index
    %c0_8 = arith.constant 0 : index
    %c0_9 = arith.constant 0 : index
    %6 = vector.load %arg3[%c0_7, %c0_8, %c0_9] : memref<9x16x4xf32, #tpu.memory_space<vmem>>, vector<1x16x4xf32>
    %7 = vector.shape_cast %6 : vector<1x16x4xf32> to vector<16x4xf32>
    %cst_10 = arith.constant dense<0.000000e+00> : vector<16x64xf32>
    %8 = tpu.matmul %7, %5, %cst_10 {dimension_numbers = #tpu.dot_dimension_numbers<[1], [0], [0], [1], [0, 0, 1, 1], [], []>} : vector<16x4xf32>, vector<4x64xf32>, vector<16x64xf32> -> vector<16x64xf32>
    %9 = vector.broadcast %2 : vector<16x1xf32> to vector<16x64xf32>
    %10 = arith.addf %9, %8 : vector<16x64xf32>
    %c1 = arith.constant 1 : index
    %c0_11 = arith.constant 0 : index
    %c0_12 = arith.constant 0 : index
    %11 = vector.load %arg2[%c1, %c0_11, %c0_12] : memref<9x256x64xf32, #tpu.memory_space<vmem>>, vector<1x256x64xf32>
    %12 = vector.shape_cast %11 : vector<1x256x64xf32> to vector<256x64xf32>
    %cst_13 = arith.constant dense<0.000000e+00> : vector<4x64xf32>
    %13 = tpu.matmul %1, %12, %cst_13 {dimension_numbers = #tpu.dot_dimension_numbers<[1], [0], [0], [1], [0, 0, 1, 1], [], []>} : vector<4x256xf32>, vector<256x64xf32>, vector<4x64xf32> -> vector<4x64xf32>
    %c1_14 = arith.constant 1 : index
    %c0_15 = arith.constant 0 : index
    %c0_16 = arith.constant 0 : index
    %14 = vector.load %arg3[%c1_14, %c0_15, %c0_16] : memref<9x16x4xf32, #tpu.memory_space<vmem>>, vector<1x16x4xf32>
    %15 = vector.shape_cast %14 : vector<1x16x4xf32> to vector<16x4xf32>
    %cst_17 = arith.constant dense<0.000000e+00> : vector<16x64xf32>
    %16 = tpu.matmul %15, %13, %cst_17 {dimension_numbers = #tpu.dot_dimension_numbers<[1], [0], [0], [1], [0, 0, 1, 1], [], []>} : vector<16x4xf32>, vector<4x64xf32>, vector<16x64xf32> -> vector<16x64xf32>
    %17 = arith.addf %10, %16 : vector<16x64xf32>
    %c2 = arith.constant 2 : index
    %c0_18 = arith.constant 0 : index
    %c0_19 = arith.constant 0 : index
    %18 = vector.load %arg2[%c2, %c0_18, %c0_19] : memref<9x256x64xf32, #tpu.memory_space<vmem>>, vector<1x256x64xf32>
    %19 = vector.shape_cast %18 : vector<1x256x64xf32> to vector<256x64xf32>
    %cst_20 = arith.constant dense<0.000000e+00> : vector<4x64xf32>
    %20 = tpu.matmul %1, %19, %cst_20 {dimension_numbers = #tpu.dot_dimension_numbers<[1], [0], [0], [1], [0, 0, 1, 1], [], []>} : vector<4x256xf32>, vector<256x64xf32>, vector<4x64xf32> -> vector<4x64xf32>
    %c2_21 = arith.constant 2 : index
    %c0_22 = arith.constant 0 : index
    %c0_23 = arith.constant 0 : index
    %21 = vector.load %arg3[%c2_21, %c0_22, %c0_23] : memref<9x16x4xf32, #tpu.memory_space<vmem>>, vector<1x16x4xf32>
    %22 = vector.shape_cast %21 : vector<1x16x4xf32> to vector<16x4xf32>
    %cst_24 = arith.constant dense<0.000000e+00> : vector<16x64xf32>
    %23 = tpu.matmul %22, %20, %cst_24 {dimension_numbers = #tpu.dot_dimension_numbers<[1], [0], [0], [1], [0, 0, 1, 1], [], []>} : vector<16x4xf32>, vector<4x64xf32>, vector<16x64xf32> -> vector<16x64xf32>
    %24 = arith.addf %17, %23 : vector<16x64xf32>
    %c3 = arith.constant 3 : index
    %c0_25 = arith.constant 0 : index
    %c0_26 = arith.constant 0 : index
    %25 = vector.load %arg2[%c3, %c0_25, %c0_26] : memref<9x256x64xf32, #tpu.memory_space<vmem>>, vector<1x256x64xf32>
    %26 = vector.shape_cast %25 : vector<1x256x64xf32> to vector<256x64xf32>
    %cst_27 = arith.constant dense<0.000000e+00> : vector<4x64xf32>
    %27 = tpu.matmul %1, %26, %cst_27 {dimension_numbers = #tpu.dot_dimension_numbers<[1], [0], [0], [1], [0, 0, 1, 1], [], []>} : vector<4x256xf32>, vector<256x64xf32>, vector<4x64xf32> -> vector<4x64xf32>
    %c3_28 = arith.constant 3 : index
    %c0_29 = arith.constant 0 : index
    %c0_30 = arith.constant 0 : index
    %28 = vector.load %arg3[%c3_28, %c0_29, %c0_30] : memref<9x16x4xf32, #tpu.memory_space<vmem>>, vector<1x16x4xf32>
    %29 = vector.shape_cast %28 : vector<1x16x4xf32> to vector<16x4xf32>
    %cst_31 = arith.constant dense<0.000000e+00> : vector<16x64xf32>
    %30 = tpu.matmul %29, %27, %cst_31 {dimension_numbers = #tpu.dot_dimension_numbers<[1], [0], [0], [1], [0, 0, 1, 1], [], []>} : vector<16x4xf32>, vector<4x64xf32>, vector<16x64xf32> -> vector<16x64xf32>
    %31 = arith.addf %24, %30 : vector<16x64xf32>
    %c4 = arith.constant 4 : index
    %c0_32 = arith.constant 0 : index
    %c0_33 = arith.constant 0 : index
    %32 = vector.load %arg2[%c4, %c0_32, %c0_33] : memref<9x256x64xf32, #tpu.memory_space<vmem>>, vector<1x256x64xf32>
    %33 = vector.shape_cast %32 : vector<1x256x64xf32> to vector<256x64xf32>
    %cst_34 = arith.constant dense<0.000000e+00> : vector<4x64xf32>
    %34 = tpu.matmul %1, %33, %cst_34 {dimension_numbers = #tpu.dot_dimension_numbers<[1], [0], [0], [1], [0, 0, 1, 1], [], []>} : vector<4x256xf32>, vector<256x64xf32>, vector<4x64xf32> -> vector<4x64xf32>
    %c4_35 = arith.constant 4 : index
    %c0_36 = arith.constant 0 : index
    %c0_37 = arith.constant 0 : index
    %35 = vector.load %arg3[%c4_35, %c0_36, %c0_37] : memref<9x16x4xf32, #tpu.memory_space<vmem>>, vector<1x16x4xf32>
    %36 = vector.shape_cast %35 : vector<1x16x4xf32> to vector<16x4xf32>
    %cst_38 = arith.constant dense<0.000000e+00> : vector<16x64xf32>
    %37 = tpu.matmul %36, %34, %cst_38 {dimension_numbers = #tpu.dot_dimension_numbers<[1], [0], [0], [1], [0, 0, 1, 1], [], []>} : vector<16x4xf32>, vector<4x64xf32>, vector<16x64xf32> -> vector<16x64xf32>
    %38 = arith.addf %31, %37 : vector<16x64xf32>
    %c5 = arith.constant 5 : index
    %c0_39 = arith.constant 0 : index
    %c0_40 = arith.constant 0 : index
    %39 = vector.load %arg2[%c5, %c0_39, %c0_40] : memref<9x256x64xf32, #tpu.memory_space<vmem>>, vector<1x256x64xf32>
    %40 = vector.shape_cast %39 : vector<1x256x64xf32> to vector<256x64xf32>
    %cst_41 = arith.constant dense<0.000000e+00> : vector<4x64xf32>
    %41 = tpu.matmul %1, %40, %cst_41 {dimension_numbers = #tpu.dot_dimension_numbers<[1], [0], [0], [1], [0, 0, 1, 1], [], []>} : vector<4x256xf32>, vector<256x64xf32>, vector<4x64xf32> -> vector<4x64xf32>
    %c5_42 = arith.constant 5 : index
    %c0_43 = arith.constant 0 : index
    %c0_44 = arith.constant 0 : index
    %42 = vector.load %arg3[%c5_42, %c0_43, %c0_44] : memref<9x16x4xf32, #tpu.memory_space<vmem>>, vector<1x16x4xf32>
    %43 = vector.shape_cast %42 : vector<1x16x4xf32> to vector<16x4xf32>
    %cst_45 = arith.constant dense<0.000000e+00> : vector<16x64xf32>
    %44 = tpu.matmul %43, %41, %cst_45 {dimension_numbers = #tpu.dot_dimension_numbers<[1], [0], [0], [1], [0, 0, 1, 1], [], []>} : vector<16x4xf32>, vector<4x64xf32>, vector<16x64xf32> -> vector<16x64xf32>
    %45 = arith.addf %38, %44 : vector<16x64xf32>
    %c6 = arith.constant 6 : index
    %c0_46 = arith.constant 0 : index
    %c0_47 = arith.constant 0 : index
    %46 = vector.load %arg2[%c6, %c0_46, %c0_47] : memref<9x256x64xf32, #tpu.memory_space<vmem>>, vector<1x256x64xf32>
    %47 = vector.shape_cast %46 : vector<1x256x64xf32> to vector<256x64xf32>
    %cst_48 = arith.constant dense<0.000000e+00> : vector<4x64xf32>
    %48 = tpu.matmul %1, %47, %cst_48 {dimension_numbers = #tpu.dot_dimension_numbers<[1], [0], [0], [1], [0, 0, 1, 1], [], []>} : vector<4x256xf32>, vector<256x64xf32>, vector<4x64xf32> -> vector<4x64xf32>
    %c6_49 = arith.constant 6 : index
    %c0_50 = arith.constant 0 : index
    %c0_51 = arith.constant 0 : index
    %49 = vector.load %arg3[%c6_49, %c0_50, %c0_51] : memref<9x16x4xf32, #tpu.memory_space<vmem>>, vector<1x16x4xf32>
    %50 = vector.shape_cast %49 : vector<1x16x4xf32> to vector<16x4xf32>
    %cst_52 = arith.constant dense<0.000000e+00> : vector<16x64xf32>
    %51 = tpu.matmul %50, %48, %cst_52 {dimension_numbers = #tpu.dot_dimension_numbers<[1], [0], [0], [1], [0, 0, 1, 1], [], []>} : vector<16x4xf32>, vector<4x64xf32>, vector<16x64xf32> -> vector<16x64xf32>
    %52 = arith.addf %45, %51 : vector<16x64xf32>
    %c7 = arith.constant 7 : index
    %c0_53 = arith.constant 0 : index
    %c0_54 = arith.constant 0 : index
    %53 = vector.load %arg2[%c7, %c0_53, %c0_54] : memref<9x256x64xf32, #tpu.memory_space<vmem>>, vector<1x256x64xf32>
    %54 = vector.shape_cast %53 : vector<1x256x64xf32> to vector<256x64xf32>
    %cst_55 = arith.constant dense<0.000000e+00> : vector<4x64xf32>
    %55 = tpu.matmul %1, %54, %cst_55 {dimension_numbers = #tpu.dot_dimension_numbers<[1], [0], [0], [1], [0, 0, 1, 1], [], []>} : vector<4x256xf32>, vector<256x64xf32>, vector<4x64xf32> -> vector<4x64xf32>
    %c7_56 = arith.constant 7 : index
    %c0_57 = arith.constant 0 : index
    %c0_58 = arith.constant 0 : index
    %56 = vector.load %arg3[%c7_56, %c0_57, %c0_58] : memref<9x16x4xf32, #tpu.memory_space<vmem>>, vector<1x16x4xf32>
    %57 = vector.shape_cast %56 : vector<1x16x4xf32> to vector<16x4xf32>
    %cst_59 = arith.constant dense<0.000000e+00> : vector<16x64xf32>
    %58 = tpu.matmul %57, %55, %cst_59 {dimension_numbers = #tpu.dot_dimension_numbers<[1], [0], [0], [1], [0, 0, 1, 1], [], []>} : vector<16x4xf32>, vector<4x64xf32>, vector<16x64xf32> -> vector<16x64xf32>
    %59 = arith.addf %52, %58 : vector<16x64xf32>
    %c8 = arith.constant 8 : index
    %c0_60 = arith.constant 0 : index
    %c0_61 = arith.constant 0 : index
    %60 = vector.load %arg2[%c8, %c0_60, %c0_61] : memref<9x256x64xf32, #tpu.memory_space<vmem>>, vector<1x256x64xf32>
    %61 = vector.shape_cast %60 : vector<1x256x64xf32> to vector<256x64xf32>
    %cst_62 = arith.constant dense<0.000000e+00> : vector<4x64xf32>
    %62 = tpu.matmul %1, %61, %cst_62 {dimension_numbers = #tpu.dot_dimension_numbers<[1], [0], [0], [1], [0, 0, 1, 1], [], []>} : vector<4x256xf32>, vector<256x64xf32>, vector<4x64xf32> -> vector<4x64xf32>
    %c8_63 = arith.constant 8 : index
    %c0_64 = arith.constant 0 : index
    %c0_65 = arith.constant 0 : index
    %63 = vector.load %arg3[%c8_63, %c0_64, %c0_65] : memref<9x16x4xf32, #tpu.memory_space<vmem>>, vector<1x16x4xf32>
    %64 = vector.shape_cast %63 : vector<1x16x4xf32> to vector<16x4xf32>
    %cst_66 = arith.constant dense<0.000000e+00> : vector<16x64xf32>
    %65 = tpu.matmul %64, %62, %cst_66 {dimension_numbers = #tpu.dot_dimension_numbers<[1], [0], [0], [1], [0, 0, 1, 1], [], []>} : vector<16x4xf32>, vector<4x64xf32>, vector<16x64xf32> -> vector<16x64xf32>
    %66 = arith.addf %59, %65 : vector<16x64xf32>
    %cst_67 = arith.constant 0.000000e+00 : f32
    %67 = vector.broadcast %cst_67 : f32 to vector<16x64xf32>
    %68 = arith.maximumf %66, %67 : vector<16x64xf32>
    %c0_68 = arith.constant 0 : index
    %c0_69 = arith.constant 0 : index
    %69 = vector.load %arg7[%c0_68, %c0_69] : memref<32x1xf32, #tpu.memory_space<vmem>>, vector<32x1xf32>
    %c0_70 = arith.constant 0 : index
    %c0_71 = arith.constant 0 : index
    %c0_72 = arith.constant 0 : index
    %70 = vector.load %arg5[%c0_70, %c0_71, %c0_72] : memref<9x64x16xf32, #tpu.memory_space<vmem>>, vector<1x64x16xf32>
    %71 = vector.shape_cast %70 : vector<1x64x16xf32> to vector<64x16xf32>
    %cst_73 = arith.constant dense<0.000000e+00> : vector<16x16xf32>
    %72 = tpu.matmul %68, %71, %cst_73 {dimension_numbers = #tpu.dot_dimension_numbers<[1], [0], [0], [1], [0, 0, 1, 1], [], []>} : vector<16x64xf32>, vector<64x16xf32>, vector<16x16xf32> -> vector<16x16xf32>
    %c0_74 = arith.constant 0 : index
    %c0_75 = arith.constant 0 : index
    %c0_76 = arith.constant 0 : index
    %73 = vector.load %arg6[%c0_74, %c0_75, %c0_76] : memref<9x32x16xf32, #tpu.memory_space<vmem>>, vector<1x32x16xf32>
    %74 = vector.shape_cast %73 : vector<1x32x16xf32> to vector<32x16xf32>
    %cst_77 = arith.constant dense<0.000000e+00> : vector<32x16xf32>
    %75 = tpu.matmul %74, %72, %cst_77 {dimension_numbers = #tpu.dot_dimension_numbers<[1], [0], [0], [1], [0, 0, 1, 1], [], []>} : vector<32x16xf32>, vector<16x16xf32>, vector<32x16xf32> -> vector<32x16xf32>
    %76 = vector.broadcast %69 : vector<32x1xf32> to vector<32x16xf32>
    %77 = arith.addf %76, %75 : vector<32x16xf32>
    %c1_78 = arith.constant 1 : index
    %c0_79 = arith.constant 0 : index
    %c0_80 = arith.constant 0 : index
    %78 = vector.load %arg5[%c1_78, %c0_79, %c0_80] : memref<9x64x16xf32, #tpu.memory_space<vmem>>, vector<1x64x16xf32>
    %79 = vector.shape_cast %78 : vector<1x64x16xf32> to vector<64x16xf32>
    %cst_81 = arith.constant dense<0.000000e+00> : vector<16x16xf32>
    %80 = tpu.matmul %68, %79, %cst_81 {dimension_numbers = #tpu.dot_dimension_numbers<[1], [0], [0], [1], [0, 0, 1, 1], [], []>} : vector<16x64xf32>, vector<64x16xf32>, vector<16x16xf32> -> vector<16x16xf32>
    %c1_82 = arith.constant 1 : index
    %c0_83 = arith.constant 0 : index
    %c0_84 = arith.constant 0 : index
    %81 = vector.load %arg6[%c1_82, %c0_83, %c0_84] : memref<9x32x16xf32, #tpu.memory_space<vmem>>, vector<1x32x16xf32>
    %82 = vector.shape_cast %81 : vector<1x32x16xf32> to vector<32x16xf32>
    %cst_85 = arith.constant dense<0.000000e+00> : vector<32x16xf32>
    %83 = tpu.matmul %82, %80, %cst_85 {dimension_numbers = #tpu.dot_dimension_numbers<[1], [0], [0], [1], [0, 0, 1, 1], [], []>} : vector<32x16xf32>, vector<16x16xf32>, vector<32x16xf32> -> vector<32x16xf32>
    %84 = arith.addf %77, %83 : vector<32x16xf32>
    %c2_86 = arith.constant 2 : index
    %c0_87 = arith.constant 0 : index
    %c0_88 = arith.constant 0 : index
    %85 = vector.load %arg5[%c2_86, %c0_87, %c0_88] : memref<9x64x16xf32, #tpu.memory_space<vmem>>, vector<1x64x16xf32>
    %86 = vector.shape_cast %85 : vector<1x64x16xf32> to vector<64x16xf32>
    %cst_89 = arith.constant dense<0.000000e+00> : vector<16x16xf32>
    %87 = tpu.matmul %68, %86, %cst_89 {dimension_numbers = #tpu.dot_dimension_numbers<[1], [0], [0], [1], [0, 0, 1, 1], [], []>} : vector<16x64xf32>, vector<64x16xf32>, vector<16x16xf32> -> vector<16x16xf32>
    %c2_90 = arith.constant 2 : index
    %c0_91 = arith.constant 0 : index
    %c0_92 = arith.constant 0 : index
    %88 = vector.load %arg6[%c2_90, %c0_91, %c0_92] : memref<9x32x16xf32, #tpu.memory_space<vmem>>, vector<1x32x16xf32>
    %89 = vector.shape_cast %88 : vector<1x32x16xf32> to vector<32x16xf32>
    %cst_93 = arith.constant dense<0.000000e+00> : vector<32x16xf32>
    %90 = tpu.matmul %89, %87, %cst_93 {dimension_numbers = #tpu.dot_dimension_numbers<[1], [0], [0], [1], [0, 0, 1, 1], [], []>} : vector<32x16xf32>, vector<16x16xf32>, vector<32x16xf32> -> vector<32x16xf32>
    %91 = arith.addf %84, %90 : vector<32x16xf32>
    %c3_94 = arith.constant 3 : index
    %c0_95 = arith.constant 0 : index
    %c0_96 = arith.constant 0 : index
    %92 = vector.load %arg5[%c3_94, %c0_95, %c0_96] : memref<9x64x16xf32, #tpu.memory_space<vmem>>, vector<1x64x16xf32>
    %93 = vector.shape_cast %92 : vector<1x64x16xf32> to vector<64x16xf32>
    %cst_97 = arith.constant dense<0.000000e+00> : vector<16x16xf32>
    %94 = tpu.matmul %68, %93, %cst_97 {dimension_numbers = #tpu.dot_dimension_numbers<[1], [0], [0], [1], [0, 0, 1, 1], [], []>} : vector<16x64xf32>, vector<64x16xf32>, vector<16x16xf32> -> vector<16x16xf32>
    %c3_98 = arith.constant 3 : index
    %c0_99 = arith.constant 0 : index
    %c0_100 = arith.constant 0 : index
    %95 = vector.load %arg6[%c3_98, %c0_99, %c0_100] : memref<9x32x16xf32, #tpu.memory_space<vmem>>, vector<1x32x16xf32>
    %96 = vector.shape_cast %95 : vector<1x32x16xf32> to vector<32x16xf32>
    %cst_101 = arith.constant dense<0.000000e+00> : vector<32x16xf32>
    %97 = tpu.matmul %96, %94, %cst_101 {dimension_numbers = #tpu.dot_dimension_numbers<[1], [0], [0], [1], [0, 0, 1, 1], [], []>} : vector<32x16xf32>, vector<16x16xf32>, vector<32x16xf32> -> vector<32x16xf32>
    %98 = arith.addf %91, %97 : vector<32x16xf32>
    %c4_102 = arith.constant 4 : index
    %c0_103 = arith.constant 0 : index
    %c0_104 = arith.constant 0 : index
    %99 = vector.load %arg5[%c4_102, %c0_103, %c0_104] : memref<9x64x16xf32, #tpu.memory_space<vmem>>, vector<1x64x16xf32>
    %100 = vector.shape_cast %99 : vector<1x64x16xf32> to vector<64x16xf32>
    %cst_105 = arith.constant dense<0.000000e+00> : vector<16x16xf32>
    %101 = tpu.matmul %68, %100, %cst_105 {dimension_numbers = #tpu.dot_dimension_numbers<[1], [0], [0], [1], [0, 0, 1, 1], [], []>} : vector<16x64xf32>, vector<64x16xf32>, vector<16x16xf32> -> vector<16x16xf32>
    %c4_106 = arith.constant 4 : index
    %c0_107 = arith.constant 0 : index
    %c0_108 = arith.constant 0 : index
    %102 = vector.load %arg6[%c4_106, %c0_107, %c0_108] : memref<9x32x16xf32, #tpu.memory_space<vmem>>, vector<1x32x16xf32>
    %103 = vector.shape_cast %102 : vector<1x32x16xf32> to vector<32x16xf32>
    %cst_109 = arith.constant dense<0.000000e+00> : vector<32x16xf32>
    %104 = tpu.matmul %103, %101, %cst_109 {dimension_numbers = #tpu.dot_dimension_numbers<[1], [0], [0], [1], [0, 0, 1, 1], [], []>} : vector<32x16xf32>, vector<16x16xf32>, vector<32x16xf32> -> vector<32x16xf32>
    %105 = arith.addf %98, %104 : vector<32x16xf32>
    %c5_110 = arith.constant 5 : index
    %c0_111 = arith.constant 0 : index
    %c0_112 = arith.constant 0 : index
    %106 = vector.load %arg5[%c5_110, %c0_111, %c0_112] : memref<9x64x16xf32, #tpu.memory_space<vmem>>, vector<1x64x16xf32>
    %107 = vector.shape_cast %106 : vector<1x64x16xf32> to vector<64x16xf32>
    %cst_113 = arith.constant dense<0.000000e+00> : vector<16x16xf32>
    %108 = tpu.matmul %68, %107, %cst_113 {dimension_numbers = #tpu.dot_dimension_numbers<[1], [0], [0], [1], [0, 0, 1, 1], [], []>} : vector<16x64xf32>, vector<64x16xf32>, vector<16x16xf32> -> vector<16x16xf32>
    %c5_114 = arith.constant 5 : index
    %c0_115 = arith.constant 0 : index
    %c0_116 = arith.constant 0 : index
    %109 = vector.load %arg6[%c5_114, %c0_115, %c0_116] : memref<9x32x16xf32, #tpu.memory_space<vmem>>, vector<1x32x16xf32>
    %110 = vector.shape_cast %109 : vector<1x32x16xf32> to vector<32x16xf32>
    %cst_117 = arith.constant dense<0.000000e+00> : vector<32x16xf32>
    %111 = tpu.matmul %110, %108, %cst_117 {dimension_numbers = #tpu.dot_dimension_numbers<[1], [0], [0], [1], [0, 0, 1, 1], [], []>} : vector<32x16xf32>, vector<16x16xf32>, vector<32x16xf32> -> vector<32x16xf32>
    %112 = arith.addf %105, %111 : vector<32x16xf32>
    %c6_118 = arith.constant 6 : index
    %c0_119 = arith.constant 0 : index
    %c0_120 = arith.constant 0 : index
    %113 = vector.load %arg5[%c6_118, %c0_119, %c0_120] : memref<9x64x16xf32, #tpu.memory_space<vmem>>, vector<1x64x16xf32>
    %114 = vector.shape_cast %113 : vector<1x64x16xf32> to vector<64x16xf32>
    %cst_121 = arith.constant dense<0.000000e+00> : vector<16x16xf32>
    %115 = tpu.matmul %68, %114, %cst_121 {dimension_numbers = #tpu.dot_dimension_numbers<[1], [0], [0], [1], [0, 0, 1, 1], [], []>} : vector<16x64xf32>, vector<64x16xf32>, vector<16x16xf32> -> vector<16x16xf32>
    %c6_122 = arith.constant 6 : index
    %c0_123 = arith.constant 0 : index
    %c0_124 = arith.constant 0 : index
    %116 = vector.load %arg6[%c6_122, %c0_123, %c0_124] : memref<9x32x16xf32, #tpu.memory_space<vmem>>, vector<1x32x16xf32>
    %117 = vector.shape_cast %116 : vector<1x32x16xf32> to vector<32x16xf32>
    %cst_125 = arith.constant dense<0.000000e+00> : vector<32x16xf32>
    %118 = tpu.matmul %117, %115, %cst_125 {dimension_numbers = #tpu.dot_dimension_numbers<[1], [0], [0], [1], [0, 0, 1, 1], [], []>} : vector<32x16xf32>, vector<16x16xf32>, vector<32x16xf32> -> vector<32x16xf32>
    %119 = arith.addf %112, %118 : vector<32x16xf32>
    %c7_126 = arith.constant 7 : index
    %c0_127 = arith.constant 0 : index
    %c0_128 = arith.constant 0 : index
    %120 = vector.load %arg5[%c7_126, %c0_127, %c0_128] : memref<9x64x16xf32, #tpu.memory_space<vmem>>, vector<1x64x16xf32>
    %121 = vector.shape_cast %120 : vector<1x64x16xf32> to vector<64x16xf32>
    %cst_129 = arith.constant dense<0.000000e+00> : vector<16x16xf32>
    %122 = tpu.matmul %68, %121, %cst_129 {dimension_numbers = #tpu.dot_dimension_numbers<[1], [0], [0], [1], [0, 0, 1, 1], [], []>} : vector<16x64xf32>, vector<64x16xf32>, vector<16x16xf32> -> vector<16x16xf32>
    %c7_130 = arith.constant 7 : index
    %c0_131 = arith.constant 0 : index
    %c0_132 = arith.constant 0 : index
    %123 = vector.load %arg6[%c7_130, %c0_131, %c0_132] : memref<9x32x16xf32, #tpu.memory_space<vmem>>, vector<1x32x16xf32>
    %124 = vector.shape_cast %123 : vector<1x32x16xf32> to vector<32x16xf32>
    %cst_133 = arith.constant dense<0.000000e+00> : vector<32x16xf32>
    %125 = tpu.matmul %124, %122, %cst_133 {dimension_numbers = #tpu.dot_dimension_numbers<[1], [0], [0], [1], [0, 0, 1, 1], [], []>} : vector<32x16xf32>, vector<16x16xf32>, vector<32x16xf32> -> vector<32x16xf32>
    %126 = arith.addf %119, %125 : vector<32x16xf32>
    %c8_134 = arith.constant 8 : index
    %c0_135 = arith.constant 0 : index
    %c0_136 = arith.constant 0 : index
    %127 = vector.load %arg5[%c8_134, %c0_135, %c0_136] : memref<9x64x16xf32, #tpu.memory_space<vmem>>, vector<1x64x16xf32>
    %128 = vector.shape_cast %127 : vector<1x64x16xf32> to vector<64x16xf32>
    %cst_137 = arith.constant dense<0.000000e+00> : vector<16x16xf32>
    %129 = tpu.matmul %68, %128, %cst_137 {dimension_numbers = #tpu.dot_dimension_numbers<[1], [0], [0], [1], [0, 0, 1, 1], [], []>} : vector<16x64xf32>, vector<64x16xf32>, vector<16x16xf32> -> vector<16x16xf32>
    %c8_138 = arith.constant 8 : index
    %c0_139 = arith.constant 0 : index
    %c0_140 = arith.constant 0 : index
    %130 = vector.load %arg6[%c8_138, %c0_139, %c0_140] : memref<9x32x16xf32, #tpu.memory_space<vmem>>, vector<1x32x16xf32>
    %131 = vector.shape_cast %130 : vector<1x32x16xf32> to vector<32x16xf32>
    %cst_141 = arith.constant dense<0.000000e+00> : vector<32x16xf32>
    %132 = tpu.matmul %131, %129, %cst_141 {dimension_numbers = #tpu.dot_dimension_numbers<[1], [0], [0], [1], [0, 0, 1, 1], [], []>} : vector<32x16xf32>, vector<16x16xf32>, vector<32x16xf32> -> vector<32x16xf32>
    %133 = arith.addf %126, %132 : vector<32x16xf32>
    %cst_142 = arith.constant 0.000000e+00 : f32
    %134 = vector.broadcast %cst_142 : f32 to vector<32x16xf32>
    %135 = arith.maximumf %133, %134 : vector<32x16xf32>
    %c0_143 = arith.constant 0 : index
    %c0_144 = arith.constant 0 : index
    %136 = vector.load %arg8[%c0_143, %c0_144] : memref<16x32xf32, #tpu.memory_space<vmem>>, vector<16x32xf32>
    %cst_145 = arith.constant dense<0.000000e+00> : vector<16x16xf32>
    %137 = tpu.matmul %136, %135, %cst_145 {dimension_numbers = #tpu.dot_dimension_numbers<[1], [0], [0], [1], [0, 0, 1, 1], [], []>} : vector<16x32xf32>, vector<32x16xf32>, vector<16x16xf32> -> vector<16x16xf32>
    %c0_146 = arith.constant 0 : index
    %c0_147 = arith.constant 0 : index
    %138 = vector.load %arg9[%c0_146, %c0_147] : memref<16x1xf32, #tpu.memory_space<vmem>>, vector<16x1xf32>
    %139 = vector.broadcast %138 : vector<16x1xf32> to vector<16x16xf32>
    %140 = arith.addf %137, %139 : vector<16x16xf32>
    %cst_148 = arith.constant 0.000000e+00 : f32
    %141 = vector.broadcast %cst_148 : f32 to vector<16x16xf32>
    %142 = arith.maximumf %140, %141 : vector<16x16xf32>
    %c0_149 = arith.constant 0 : index
    %c0_150 = arith.constant 0 : index
    %143 = vector.load %arg12[%c0_149, %c0_150] : memref<1x1xf32, #tpu.memory_space<vmem>>, vector<1x1xf32>
    %c0_151 = arith.constant 0 : index
    %c0_152 = arith.constant 0 : index
    %c0_153 = arith.constant 0 : index
    %144 = vector.load %arg10[%c0_151, %c0_152, %c0_153] : memref<9x16x16xf32, #tpu.memory_space<vmem>>, vector<1x16x16xf32>
    %145 = vector.shape_cast %144 : vector<1x16x16xf32> to vector<16x16xf32>
    %cst_154 = arith.constant dense<0.000000e+00> : vector<16x16xf32>
    %146 = tpu.matmul %142, %145, %cst_154 {dimension_numbers = #tpu.dot_dimension_numbers<[1], [0], [0], [1], [0, 0, 1, 1], [], []>} : vector<16x16xf32>, vector<16x16xf32>, vector<16x16xf32> -> vector<16x16xf32>
    %c0_155 = arith.constant 0 : index
    %c0_156 = arith.constant 0 : index
    %c0_157 = arith.constant 0 : index
    %147 = vector.load %arg11[%c0_155, %c0_156, %c0_157] : memref<9x1x16xf32, #tpu.memory_space<vmem>>, vector<1x1x16xf32>
    %148 = vector.shape_cast %147 : vector<1x1x16xf32> to vector<1x16xf32>
    %cst_158 = arith.constant dense<0.000000e+00> : vector<1x16xf32>
    %149 = tpu.matmul %148, %146, %cst_158 {dimension_numbers = #tpu.dot_dimension_numbers<[1], [0], [0], [1], [0, 0, 1, 1], [], []>} : vector<1x16xf32>, vector<16x16xf32>, vector<1x16xf32> -> vector<1x16xf32>
    %150 = vector.broadcast %143 : vector<1x1xf32> to vector<1x16xf32>
    %151 = arith.addf %150, %149 : vector<1x16xf32>
    %c1_159 = arith.constant 1 : index
    %c0_160 = arith.constant 0 : index
    %c0_161 = arith.constant 0 : index
    %152 = vector.load %arg10[%c1_159, %c0_160, %c0_161] : memref<9x16x16xf32, #tpu.memory_space<vmem>>, vector<1x16x16xf32>
    %153 = vector.shape_cast %152 : vector<1x16x16xf32> to vector<16x16xf32>
    %cst_162 = arith.constant dense<0.000000e+00> : vector<16x16xf32>
    %154 = tpu.matmul %142, %153, %cst_162 {dimension_numbers = #tpu.dot_dimension_numbers<[1], [0], [0], [1], [0, 0, 1, 1], [], []>} : vector<16x16xf32>, vector<16x16xf32>, vector<16x16xf32> -> vector<16x16xf32>
    %c1_163 = arith.constant 1 : index
    %c0_164 = arith.constant 0 : index
    %c0_165 = arith.constant 0 : index
    %155 = vector.load %arg11[%c1_163, %c0_164, %c0_165] : memref<9x1x16xf32, #tpu.memory_space<vmem>>, vector<1x1x16xf32>
    %156 = vector.shape_cast %155 : vector<1x1x16xf32> to vector<1x16xf32>
    %cst_166 = arith.constant dense<0.000000e+00> : vector<1x16xf32>
    %157 = tpu.matmul %156, %154, %cst_166 {dimension_numbers = #tpu.dot_dimension_numbers<[1], [0], [0], [1], [0, 0, 1, 1], [], []>} : vector<1x16xf32>, vector<16x16xf32>, vector<1x16xf32> -> vector<1x16xf32>
    %158 = arith.addf %151, %157 : vector<1x16xf32>
    %c2_167 = arith.constant 2 : index
    %c0_168 = arith.constant 0 : index
    %c0_169 = arith.constant 0 : index
    %159 = vector.load %arg10[%c2_167, %c0_168, %c0_169] : memref<9x16x16xf32, #tpu.memory_space<vmem>>, vector<1x16x16xf32>
    %160 = vector.shape_cast %159 : vector<1x16x16xf32> to vector<16x16xf32>
    %cst_170 = arith.constant dense<0.000000e+00> : vector<16x16xf32>
    %161 = tpu.matmul %142, %160, %cst_170 {dimension_numbers = #tpu.dot_dimension_numbers<[1], [0], [0], [1], [0, 0, 1, 1], [], []>} : vector<16x16xf32>, vector<16x16xf32>, vector<16x16xf32> -> vector<16x16xf32>
    %c2_171 = arith.constant 2 : index
    %c0_172 = arith.constant 0 : index
    %c0_173 = arith.constant 0 : index
    %162 = vector.load %arg11[%c2_171, %c0_172, %c0_173] : memref<9x1x16xf32, #tpu.memory_space<vmem>>, vector<1x1x16xf32>
    %163 = vector.shape_cast %162 : vector<1x1x16xf32> to vector<1x16xf32>
    %cst_174 = arith.constant dense<0.000000e+00> : vector<1x16xf32>
    %164 = tpu.matmul %163, %161, %cst_174 {dimension_numbers = #tpu.dot_dimension_numbers<[1], [0], [0], [1], [0, 0, 1, 1], [], []>} : vector<1x16xf32>, vector<16x16xf32>, vector<1x16xf32> -> vector<1x16xf32>
    %165 = arith.addf %158, %164 : vector<1x16xf32>
    %c3_175 = arith.constant 3 : index
    %c0_176 = arith.constant 0 : index
    %c0_177 = arith.constant 0 : index
    %166 = vector.load %arg10[%c3_175, %c0_176, %c0_177] : memref<9x16x16xf32, #tpu.memory_space<vmem>>, vector<1x16x16xf32>
    %167 = vector.shape_cast %166 : vector<1x16x16xf32> to vector<16x16xf32>
    %cst_178 = arith.constant dense<0.000000e+00> : vector<16x16xf32>
    %168 = tpu.matmul %142, %167, %cst_178 {dimension_numbers = #tpu.dot_dimension_numbers<[1], [0], [0], [1], [0, 0, 1, 1], [], []>} : vector<16x16xf32>, vector<16x16xf32>, vector<16x16xf32> -> vector<16x16xf32>
    %c3_179 = arith.constant 3 : index
    %c0_180 = arith.constant 0 : index
    %c0_181 = arith.constant 0 : index
    %169 = vector.load %arg11[%c3_179, %c0_180, %c0_181] : memref<9x1x16xf32, #tpu.memory_space<vmem>>, vector<1x1x16xf32>
    %170 = vector.shape_cast %169 : vector<1x1x16xf32> to vector<1x16xf32>
    %cst_182 = arith.constant dense<0.000000e+00> : vector<1x16xf32>
    %171 = tpu.matmul %170, %168, %cst_182 {dimension_numbers = #tpu.dot_dimension_numbers<[1], [0], [0], [1], [0, 0, 1, 1], [], []>} : vector<1x16xf32>, vector<16x16xf32>, vector<1x16xf32> -> vector<1x16xf32>
    %172 = arith.addf %165, %171 : vector<1x16xf32>
    %c4_183 = arith.constant 4 : index
    %c0_184 = arith.constant 0 : index
    %c0_185 = arith.constant 0 : index
    %173 = vector.load %arg10[%c4_183, %c0_184, %c0_185] : memref<9x16x16xf32, #tpu.memory_space<vmem>>, vector<1x16x16xf32>
    %174 = vector.shape_cast %173 : vector<1x16x16xf32> to vector<16x16xf32>
    %cst_186 = arith.constant dense<0.000000e+00> : vector<16x16xf32>
    %175 = tpu.matmul %142, %174, %cst_186 {dimension_numbers = #tpu.dot_dimension_numbers<[1], [0], [0], [1], [0, 0, 1, 1], [], []>} : vector<16x16xf32>, vector<16x16xf32>, vector<16x16xf32> -> vector<16x16xf32>
    %c4_187 = arith.constant 4 : index
    %c0_188 = arith.constant 0 : index
    %c0_189 = arith.constant 0 : index
    %176 = vector.load %arg11[%c4_187, %c0_188, %c0_189] : memref<9x1x16xf32, #tpu.memory_space<vmem>>, vector<1x1x16xf32>
    %177 = vector.shape_cast %176 : vector<1x1x16xf32> to vector<1x16xf32>
    %cst_190 = arith.constant dense<0.000000e+00> : vector<1x16xf32>
    %178 = tpu.matmul %177, %175, %cst_190 {dimension_numbers = #tpu.dot_dimension_numbers<[1], [0], [0], [1], [0, 0, 1, 1], [], []>} : vector<1x16xf32>, vector<16x16xf32>, vector<1x16xf32> -> vector<1x16xf32>
    %179 = arith.addf %172, %178 : vector<1x16xf32>
    %c5_191 = arith.constant 5 : index
    %c0_192 = arith.constant 0 : index
    %c0_193 = arith.constant 0 : index
    %180 = vector.load %arg10[%c5_191, %c0_192, %c0_193] : memref<9x16x16xf32, #tpu.memory_space<vmem>>, vector<1x16x16xf32>
    %181 = vector.shape_cast %180 : vector<1x16x16xf32> to vector<16x16xf32>
    %cst_194 = arith.constant dense<0.000000e+00> : vector<16x16xf32>
    %182 = tpu.matmul %142, %181, %cst_194 {dimension_numbers = #tpu.dot_dimension_numbers<[1], [0], [0], [1], [0, 0, 1, 1], [], []>} : vector<16x16xf32>, vector<16x16xf32>, vector<16x16xf32> -> vector<16x16xf32>
    %c5_195 = arith.constant 5 : index
    %c0_196 = arith.constant 0 : index
    %c0_197 = arith.constant 0 : index
    %183 = vector.load %arg11[%c5_195, %c0_196, %c0_197] : memref<9x1x16xf32, #tpu.memory_space<vmem>>, vector<1x1x16xf32>
    %184 = vector.shape_cast %183 : vector<1x1x16xf32> to vector<1x16xf32>
    %cst_198 = arith.constant dense<0.000000e+00> : vector<1x16xf32>
    %185 = tpu.matmul %184, %182, %cst_198 {dimension_numbers = #tpu.dot_dimension_numbers<[1], [0], [0], [1], [0, 0, 1, 1], [], []>} : vector<1x16xf32>, vector<16x16xf32>, vector<1x16xf32> -> vector<1x16xf32>
    %186 = arith.addf %179, %185 : vector<1x16xf32>
    %c6_199 = arith.constant 6 : index
    %c0_200 = arith.constant 0 : index
    %c0_201 = arith.constant 0 : index
    %187 = vector.load %arg10[%c6_199, %c0_200, %c0_201] : memref<9x16x16xf32, #tpu.memory_space<vmem>>, vector<1x16x16xf32>
    %188 = vector.shape_cast %187 : vector<1x16x16xf32> to vector<16x16xf32>
    %cst_202 = arith.constant dense<0.000000e+00> : vector<16x16xf32>
    %189 = tpu.matmul %142, %188, %cst_202 {dimension_numbers = #tpu.dot_dimension_numbers<[1], [0], [0], [1], [0, 0, 1, 1], [], []>} : vector<16x16xf32>, vector<16x16xf32>, vector<16x16xf32> -> vector<16x16xf32>
    %c6_203 = arith.constant 6 : index
    %c0_204 = arith.constant 0 : index
    %c0_205 = arith.constant 0 : index
    %190 = vector.load %arg11[%c6_203, %c0_204, %c0_205] : memref<9x1x16xf32, #tpu.memory_space<vmem>>, vector<1x1x16xf32>
    %191 = vector.shape_cast %190 : vector<1x1x16xf32> to vector<1x16xf32>
    %cst_206 = arith.constant dense<0.000000e+00> : vector<1x16xf32>
    %192 = tpu.matmul %191, %189, %cst_206 {dimension_numbers = #tpu.dot_dimension_numbers<[1], [0], [0], [1], [0, 0, 1, 1], [], []>} : vector<1x16xf32>, vector<16x16xf32>, vector<1x16xf32> -> vector<1x16xf32>
    %193 = arith.addf %186, %192 : vector<1x16xf32>
    %c7_207 = arith.constant 7 : index
    %c0_208 = arith.constant 0 : index
    %c0_209 = arith.constant 0 : index
    %194 = vector.load %arg10[%c7_207, %c0_208, %c0_209] : memref<9x16x16xf32, #tpu.memory_space<vmem>>, vector<1x16x16xf32>
    %195 = vector.shape_cast %194 : vector<1x16x16xf32> to vector<16x16xf32>
    %cst_210 = arith.constant dense<0.000000e+00> : vector<16x16xf32>
    %196 = tpu.matmul %142, %195, %cst_210 {dimension_numbers = #tpu.dot_dimension_numbers<[1], [0], [0], [1], [0, 0, 1, 1], [], []>} : vector<16x16xf32>, vector<16x16xf32>, vector<16x16xf32> -> vector<16x16xf32>
    %c7_211 = arith.constant 7 : index
    %c0_212 = arith.constant 0 : index
    %c0_213 = arith.constant 0 : index
    %197 = vector.load %arg11[%c7_211, %c0_212, %c0_213] : memref<9x1x16xf32, #tpu.memory_space<vmem>>, vector<1x1x16xf32>
    %198 = vector.shape_cast %197 : vector<1x1x16xf32> to vector<1x16xf32>
    %cst_214 = arith.constant dense<0.000000e+00> : vector<1x16xf32>
    %199 = tpu.matmul %198, %196, %cst_214 {dimension_numbers = #tpu.dot_dimension_numbers<[1], [0], [0], [1], [0, 0, 1, 1], [], []>} : vector<1x16xf32>, vector<16x16xf32>, vector<1x16xf32> -> vector<1x16xf32>
    %200 = arith.addf %193, %199 : vector<1x16xf32>
    %c8_215 = arith.constant 8 : index
    %c0_216 = arith.constant 0 : index
    %c0_217 = arith.constant 0 : index
    %201 = vector.load %arg10[%c8_215, %c0_216, %c0_217] : memref<9x16x16xf32, #tpu.memory_space<vmem>>, vector<1x16x16xf32>
    %202 = vector.shape_cast %201 : vector<1x16x16xf32> to vector<16x16xf32>
    %cst_218 = arith.constant dense<0.000000e+00> : vector<16x16xf32>
    %203 = tpu.matmul %142, %202, %cst_218 {dimension_numbers = #tpu.dot_dimension_numbers<[1], [0], [0], [1], [0, 0, 1, 1], [], []>} : vector<16x16xf32>, vector<16x16xf32>, vector<16x16xf32> -> vector<16x16xf32>
    %c8_219 = arith.constant 8 : index
    %c0_220 = arith.constant 0 : index
    %c0_221 = arith.constant 0 : index
    %204 = vector.load %arg11[%c8_219, %c0_220, %c0_221] : memref<9x1x16xf32, #tpu.memory_space<vmem>>, vector<1x1x16xf32>
    %205 = vector.shape_cast %204 : vector<1x1x16xf32> to vector<1x16xf32>
    %cst_222 = arith.constant dense<0.000000e+00> : vector<1x16xf32>
    %206 = tpu.matmul %205, %203, %cst_222 {dimension_numbers = #tpu.dot_dimension_numbers<[1], [0], [0], [1], [0, 0, 1, 1], [], []>} : vector<1x16xf32>, vector<16x16xf32>, vector<1x16xf32> -> vector<1x16xf32>
    %207 = arith.addf %200, %206 : vector<1x16xf32>
    %c0_223 = arith.constant 0 : index
    %c0_224 = arith.constant 0 : index
    %208 = vector.load %arg13[%c0_223, %c0_224] : memref<16x256xf32, #tpu.memory_space<vmem>>, vector<16x256xf32>
    %cst_225 = arith.constant dense<0.000000e+00> : vector<1x256xf32>
    %209 = tpu.matmul %207, %208, %cst_225 {dimension_numbers = #tpu.dot_dimension_numbers<[1], [0], [0], [1], [0, 0, 1, 1], [], []>} : vector<1x16xf32>, vector<16x256xf32>, vector<1x256xf32> -> vector<1x256xf32>
    %c0_226 = arith.constant 0 : index
    %c0_227 = arith.constant 0 : index
    %c0_228 = arith.constant 0 : index
    %210 = vector.load %arg14[%c0_226, %c0_227, %c0_228] : memref<1x1x256xf32, #tpu.memory_space<vmem>>, vector<1x1x256xf32>
    %211 = vector.shape_cast %210 : vector<1x1x256xf32> to vector<1x256xf32>
    %212 = vector.shape_cast %209 : vector<1x256xf32> to vector<1x1x256xf32>
    tpu.vector_store %arg14[%c0_226, %c0_227, %c0_228], %212 {strides = array<i32>} : memref<1x1x256xf32, #tpu.memory_space<vmem>>, vector<1x1x256xf32>,
    return
  }
  func.func @transform_0(%arg0: i32) -> (i32, i32, i32) {
    %c0_i32 = arith.constant 0 : i32
    %c0_i32_0 = arith.constant 0 : i32
    %c0_i32_1 = arith.constant 0 : i32
    return %arg0, %c0_i32, %c0_i32_0 : i32, i32, i32
  }
  func.func @transform_1(%arg0: i32) -> (i32, i32, i32) {
    %c0_i32 = arith.constant 0 : i32
    %c0_i32_0 = arith.constant 0 : i32
    %c0_i32_1 = arith.constant 0 : i32
    %c0_i32_2 = arith.constant 0 : i32
    return %c0_i32, %c0_i32_0, %c0_i32_1 : i32, i32, i32
  }
  func.func @transform_2(%arg0: i32) -> (i32, i32, i32) {
    %c0_i32 = arith.constant 0 : i32
    %c0_i32_0 = arith.constant 0 : i32
    %c0_i32_1 = arith.constant 0 : i32
    %c0_i32_2 = arith.constant 0 : i32
    return %c0_i32, %c0_i32_0, %c0_i32_1 : i32, i32, i32
  }
  func.func @transform_3(%arg0: i32) -> (i32, i32) {
    %c0_i32 = arith.constant 0 : i32
    %c0_i32_0 = arith.constant 0 : i32
    %c0_i32_1 = arith.constant 0 : i32
    return %c0_i32, %c0_i32_0 : i32, i32
  }
  func.func @transform_4(%arg0: i32) -> (i32, i32, i32) {
    %c0_i32 = arith.constant 0 : i32
    %c0_i32_0 = arith.constant 0 : i32
    %c0_i32_1 = arith.constant 0 : i32
    %c0_i32_2 = arith.constant 0 : i32
    return %c0_i32, %c0_i32_0, %c0_i32_1 : i32, i32, i32
  }
  func.func @transform_5(%arg0: i32) -> (i32, i32, i32) {
    %c0_i32 = arith.constant 0 : i32
    %c0_i32_0 = arith.constant 0 : i32
    %c0_i32_1 = arith.constant 0 : i32
    %c0_i32_2 = arith.constant 0 : i32
    return %c0_i32, %c0_i32_0, %c0_i32_1 : i32, i32, i32
  }
  func.func @transform_6(%arg0: i32) -> (i32, i32) {
    %c0_i32 = arith.constant 0 : i32
    %c0_i32_0 = arith.constant 0 : i32
    %c0_i32_1 = arith.constant 0 : i32
    return %c0_i32, %c0_i32_0 : i32, i32
  }
  func.func @transform_7(%arg0: i32) -> (i32, i32) {
    %c0_i32 = arith.constant 0 : i32
    %c0_i32_0 = arith.constant 0 : i32
    %c0_i32_1 = arith.constant 0 : i32
    return %c0_i32, %c0_i32_0 : i32, i32
  }
  func.func @transform_8(%arg0: i32) -> (i32, i32) {
    %c0_i32 = arith.constant 0 : i32
    %c0_i32_0 = arith.constant 0 : i32
    %c0_i32_1 = arith.constant 0 : i32
    return %c0_i32, %c0_i32_0 : i32, i32
  }
  func.func @transform_9(%arg0: i32) -> (i32, i32, i32) {
    %c0_i32 = arith.constant 0 : i32
    %c0_i32_0 = arith.constant 0 : i32
    %c0_i32_1 = arith.constant 0 : i32
    %c0_i32_2 = arith.constant 0 : i32
    return %c0_i32, %c0_i32_0, %c0_i32_1 : i32, i32, i32
  }
  func.func @transform_10(%arg0: i32) -> (i32, i32, i32) {
    %c0_i32 = arith.constant 0 : i32
    %c0_i32_0 = arith.constant 0 : i32
    %c0_i32_1 = arith.constant 0 : i32
    %c0_i32_2 = arith.constant 0 : i32
    return %c0_i32, %c0_i32_0, %c0_i32_1 : i32, i32, i32
  }
  func.func @transform_11(%arg0: i32) -> (i32, i32) {
    %c0_i32 = arith.constant 0 : i32
    %c0_i32_0 = arith.constant 0 : i32
    %c0_i32_1 = arith.constant 0 : i32
    return %c0_i32, %c0_i32_0 : i32, i32
  }
  func.func @transform_12(%arg0: i32) -> (i32, i32) {
    %c0_i32 = arith.constant 0 : i32
    %c0_i32_0 = arith.constant 0 : i32
    %c0_i32_1 = arith.constant 0 : i32
    return %c0_i32, %c0_i32_0 : i32, i32
  }
  func.func @transform_13(%arg0: i32) -> (i32, i32, i32) {
    %c0_i32 = arith.constant 0 : i32
    %c0_i32_0 = arith.constant 0 : i32
    %c0_i32_1 = arith.constant 0 : i32
    return %arg0, %c0_i32, %c0_i32_0 : i32, i32, i32
  }
}

</mosaic_0001>

<llo_original>
// kernel: _dke_apply.1
$region0: #{_dke_apply.1}
  #allocation0 [shape = 'u32[]', space=smem, size = 0x4, offset = 0x4, fixed_abs, tag = 'smem constant byte address 0x4 - core index']
  #allocation1 [shape = 'u32[144,128]{1,0:T(1,128)}', space=vmem, size = 0x12000, scoped, tag = 'internal scratch']
  #allocation2 [shape = 'f32[1,1]{1,0:T(1,128)S(1)}', space=vmem, size = 0x200, scoped, tag = 'scoped memory for _dke_apply.1']
  %s0 = inlined_call_operand.vmem [shape: f32[2,4,256], index: 0, kind: input, shape index: {}]
  %s1 = inlined_call_operand.vmem [shape: f32[9,256,64], index: 1, kind: input, shape index: {}]
  %s2 = inlined_call_operand.vmem [shape: f32[9,16,4], index: 2, kind: input, shape index: {}]
  %s3 = inlined_call_operand.vmem [shape: f32[16,1], index: 3, kind: input, shape index: {}]
  %s4 = inlined_call_operand.vmem [shape: f32[9,64,16], index: 4, kind: input, shape index: {}]
  %s5 = inlined_call_operand.vmem [shape: f32[9,32,16], index: 5, kind: input, shape index: {}]
  %s6 = inlined_call_operand.vmem [shape: f32[32,1], index: 6, kind: input, shape index: {}]
  %s7 = inlined_call_operand.vmem [shape: f32[16,32], index: 7, kind: input, shape index: {}]
  %s8 = inlined_call_operand.vmem [shape: f32[16,1], index: 8, kind: input, shape index: {}]
  %s9 = inlined_call_operand.vmem [shape: f32[9,16,16], index: 9, kind: input, shape index: {}]
  %s10 = inlined_call_operand.vmem [shape: f32[9,1,16], index: 10, kind: input, shape index: {}]
  %s11 = inlined_call_operand.<no memory space> [shape: f32[1,1], index: 11, kind: input, shape index: {}]
  %s12 = inlined_call_operand.vmem [shape: f32[16,256], index: 12, kind: input, shape index: {}]
  %s13 = inlined_call_operand.vmem [shape: f32[2,1,256], index: 13, kind: output, shape index: {}]
  %s14 = sld [smem:[#allocation0]]
  $region85: #{_dke_apply.1} parent=0
    _
  %s16 = ssub.s32 1, %s14
  %s17 = scalar_select 0, %s16, %s14
  %v18 = vstv %s11
  %19 = vst [vmem:[#allocation2] sm:$0x1] %v18
  loop: start=0, step=1, limit=4
  $region2: #{_dke_apply.1} parent=0 // loop_pre_header
    _
  $region3: #{_dke_apply.1} parent=0 // loop_header
    %s21 = sphi 0, %s25
    %p22 = scmp.ge.s32.totalorder %s21, 4
    %s31 = sphi 0, %s33
    %s34 = sphi 0, %s31
    %s35 = sphi 0, %s34
    %s51 = sphi 0, %s35
    %s55 = sphi 0, %s55
    %s57 = sphi 0, %s55
    %s58 = sphi 0, %s57
    %s72 = sphi 0, %s58
    %s76 = sphi 0, %s76
    %s78 = sphi 0, %s76
    %s79 = sphi 0, %s78
    %s93 = sphi 0, %s79
    %s97 = sphi 0, %s97
    %s99 = sphi 0, %s97
    %s100 = sphi 0, %s99
    %s114 = sphi 0, %s100
    %s118 = sphi 0, %s118
    %s120 = sphi 0, %s118
    %s121 = sphi 0, %s120
    %s135 = sphi 0, %s121
    %s139 = sphi 0, %s139
    %s141 = sphi 0, %s139
    %s142 = sphi 0, %s141
    %s156 = sphi 0, %s142
    %s160 = sphi 0, %s160
    %s162 = sphi 0, %s160
    %s163 = sphi 0, %s162
    %s177 = sphi 0, %s163
    %s181 = sphi 0, %s181
    %s183 = sphi 0, %s181
    %s184 = sphi 0, %s183
    %s198 = sphi 0, %s184
    %s202 = sphi 0, %s202
    %s204 = sphi 0, %s202
    %s205 = sphi 0, %s204
    %s219 = sphi 0, %s205
    %s223 = sphi 0, %s223
    %s225 = sphi 0, %s223
    %s226 = sphi 0, %s225
    %s240 = sphi 0, %s226
    %s244 = sphi 0, %s244
    %s246 = sphi 0, %s244
    %s247 = sphi 0, %s246
    %s261 = sphi 0, %s247
    %s265 = sphi 0, %s265
    %s267 = sphi 0, %s265
    %s268 = sphi 0, %s267
    %s282 = sphi 0, %s268
    %s286 = sphi 0, %s286
    %s288 = sphi 0, %s286
    %s289 = sphi 0, %s288
    %s303 = sphi 0, %s289
    %s309 = sphi 0, %s311
    %s312 = sphi 0, %s309
    %s313 = sphi 0, %s312
    %s329 = sphi 0, %s313
  $region4: #{_dke_apply.1} parent=0 // loop_header_branch
    %24 = sbr.rel (%p22) target = $region8
  $region5: #{_dke_apply.1} parent=0 // loop_body
    %s26 = ssub.s32 %s21, 1
    %s27 = ssub.s32 %s21, 2
    %s28 = sadd.s32 %s21, 1
    %s29 = ssub.s32 %s21, %s28
    %p30 = scmp.eq.s32.totalorder %s29, 0
    %s32 = sadd.s32 %s31, 1
    %s33 = scalar_select %p30, %s31, %s32
    %p36 = pneg %p30
    %p37 = scmp.eq.s32.totalorder %s21, 1
    %p38 = por %p36, %p37
    %p39 = scmp.ne.s32.totalorder %s31, %s34
    %p40 = scmp.eq.s32.totalorder %s21, 0
    %p41 = por %p39, %p40
    %p42 = scmp.ne.s32.totalorder %s31, %s34
    %p43 = scmp.eq.s32.totalorder %s26, 1
    %p44 = por %p42, %p43
    %p45 = scmp.ne.s32.totalorder %s34, %s35
    %p46 = scmp.eq.s32.totalorder %s26, 0
    %p47 = por %p45, %p46
    %p48 = scmp.ne.s32.totalorder %s34, %s35
    %p49 = scmp.eq.s32.totalorder %s27, 1
    %p50 = por %p48, %p49
    %p52 = scmp.ne.s32.totalorder %s35, %s51
    %p53 = scmp.eq.s32.totalorder %s27, 0
    %p54 = por %p52, %p53
    %s56 = sadd.s32 %s55, 1
    %p59 = scmp.eq.s32.totalorder %s21, 1
    %p60 = scmp.ne.s32.totalorder %s55, %s57
    %p61 = scmp.eq.s32.totalorder %s21, 0
    %p62 = por %p60, %p61
    %p63 = scmp.ne.s32.totalorder %s55, %s57
    %p64 = scmp.eq.s32.totalorder %s26, 1
    %p65 = por %p63, %p64
    %p66 = scmp.ne.s32.totalorder %s57, %s58
    %p67 = scmp.eq.s32.totalorder %s26, 0
    %p68 = por %p66, %p67
    %p69 = scmp.ne.s32.totalorder %s57, %s58
    %p70 = scmp.eq.s32.totalorder %s27, 1
    %p71 = por %p69, %p70
    %p73 = scmp.ne.s32.totalorder %s58, %s72
    %p74 = scmp.eq.s32.totalorder %s27, 0
    %p75 = por %p73, %p74
    %s77 = sadd.s32 %s76, 1
    %p80 = scmp.eq.s32.totalorder %s21, 1
    %p81 = scmp.ne.s32.totalorder %s76, %s78
    %p82 = scmp.eq.s32.totalorder %s21, 0
    %p83 = por %p81, %p82
    %p84 = scmp.ne.s32.totalorder %s76, %s78
    %p85 = scmp.eq.s32.totalorder %s26, 1
    %p86 = por %p84, %p85
    %p87 = scmp.ne.s32.totalorder %s78, %s79
    %p88 = scmp.eq.s32.totalorder %s26, 0
    %p89 = por %p87, %p88
    %p90 = scmp.ne.s32.totalorder %s78, %s79
    %p91 = scmp.eq.s32.totalorder %s27, 1
    %p92 = por %p90, %p91
    %p94 = scmp.ne.s32.totalorder %s79, %s93
    %p95 = scmp.eq.s32.totalorder %s27, 0
    %p96 = por %p94, %p95
    %s98 = sadd.s32 %s97, 1
    %p101 = scmp.eq.s32.totalorder %s21, 1
    %p102 = scmp.ne.s32.totalorder %s97, %s99
    %p103 = scmp.eq.s32.totalorder %s21, 0
    %p104 = por %p102, %p103
    %p105 = scmp.ne.s32.totalorder %s97, %s99
    %p106 = scmp.eq.s32.totalorder %s26, 1
    %p107 = por %p105, %p106
    %p108 = scmp.ne.s32.totalorder %s99, %s100
    %p109 = scmp.eq.s32.totalorder %s26, 0
    %p110 = por %p108, %p109
    %p111 = scmp.ne.s32.totalorder %s99, %s100
    %p112 = scmp.eq.s32.totalorder %s27, 1
    %p113 = por %p111, %p112
    %p115 = scmp.ne.s32.totalorder %s100, %s114
    %p116 = scmp.eq.s32.totalorder %s27, 0
    %p117 = por %p115, %p116
    %s119 = sadd.s32 %s118, 1
    %p122 = scmp.eq.s32.totalorder %s21, 1
    %p123 = scmp.ne.s32.totalorder %s118, %s120
    %p124 = scmp.eq.s32.totalorder %s21, 0
    %p125 = por %p123, %p124
    %p126 = scmp.ne.s32.totalorder %s118, %s120
    %p127 = scmp.eq.s32.totalorder %s26, 1
    %p128 = por %p126, %p127
    %p129 = scmp.ne.s32.totalorder %s120, %s121
    %p130 = scmp.eq.s32.totalorder %s26, 0
    %p131 = por %p129, %p130
    %p132 = scmp.ne.s32.totalorder %s120, %s121
    %p133 = scmp.eq.s32.totalorder %s27, 1
    %p134 = por %p132, %p133
    %p136 = scmp.ne.s32.totalorder %s121, %s135
    %p137 = scmp.eq.s32.totalorder %s27, 0
    %p138 = por %p136, %p137
    %s140 = sadd.s32 %s139, 1
    %p143 = scmp.eq.s32.totalorder %s21, 1
    %p144 = scmp.ne.s32.totalorder %s139, %s141
    %p145 = scmp.eq.s32.totalorder %s21, 0
    %p146 = por %p144, %p145
    %p147 = scmp.ne.s32.totalorder %s139, %s141
    %p148 = scmp.eq.s32.totalorder %s26, 1
    %p149 = por %p147, %p148
    %p150 = scmp.ne.s32.totalorder %s141, %s142
    %p151 = scmp.eq.s32.totalorder %s26, 0
    %p152 = por %p150, %p151
    %p153 = scmp.ne.s32.totalorder %s141, %s142
    %p154 = scmp.eq.s32.totalorder %s27, 1
    %p155 = por %p153, %p154
    %p157 = scmp.ne.s32.totalorder %s142, %s156
    %p158 = scmp.eq.s32.totalorder %s27, 0
    %p159 = por %p157, %p158
    %s161 = sadd.s32 %s160, 1
    %p164 = scmp.eq.s32.totalorder %s21, 1
    %p165 = scmp.ne.s32.totalorder %s160, %s162
    %p166 = scmp.eq.s32.totalorder %s21, 0
    %p167 = por %p165, %p166
    %p168 = scmp.ne.s32.totalorder %s160, %s162
    %p169 = scmp.eq.s32.totalorder %s26, 1
    %p170 = por %p168, %p169
    %p171 = scmp.ne.s32.totalorder %s162, %s163
    %p172 = scmp.eq.s32.totalorder %s26, 0
    %p173 = por %p171, %p172
    %p174 = scmp.ne.s32.totalorder %s162, %s163
    %p175 = scmp.eq.s32.totalorder %s27, 1
    %p176 = por %p174, %p175
    %p178 = scmp.ne.s32.totalorder %s163, %s177
    %p179 = scmp.eq.s32.totalorder %s27, 0
    %p180 = por %p178, %p179
    %s182 = sadd.s32 %s181, 1
    %p185 = scmp.eq.s32.totalorder %s21, 1
    %p186 = scmp.ne.s32.totalorder %s181, %s183
    %p187 = scmp.eq.s32.totalorder %s21, 0
    %p188 = por %p186, %p187
    %p189 = scmp.ne.s32.totalorder %s181, %s183
    %p190 = scmp.eq.s32.totalorder %s26, 1
    %p191 = por %p189, %p190
    %p192 = scmp.ne.s32.totalorder %s183, %s184
    %p193 = scmp.eq.s32.totalorder %s26, 0
    %p194 = por %p192, %p193
    %p195 = scmp.ne.s32.totalorder %s183, %s184
    %p196 = scmp.eq.s32.totalorder %s27, 1
    %p197 = por %p195, %p196
    %p199 = scmp.ne.s32.totalorder %s184, %s198
    %p200 = scmp.eq.s32.totalorder %s27, 0
    %p201 = por %p199, %p200
    %s203 = sadd.s32 %s202, 1
    %p206 = scmp.eq.s32.totalorder %s21, 1
    %p207 = scmp.ne.s32.totalorder %s202, %s204
    %p208 = scmp.eq.s32.totalorder %s21, 0
    %p209 = por %p207, %p208
    %p210 = scmp.ne.s32.totalorder %s202, %s204
    %p211 = scmp.eq.s32.totalorder %s26, 1
    %p212 = por %p210, %p211
    %p213 = scmp.ne.s32.totalorder %s204, %s205
    %p214 = scmp.eq.s32.totalorder %s26, 0
    %p215 = por %p213, %p214
    %p216 = scmp.ne.s32.totalorder %s204, %s205
    %p217 = scmp.eq.s32.totalorder %s27, 1
    %p218 = por %p216, %p217
    %p220 = scmp.ne.s32.totalorder %s205, %s219
    %p221 = scmp.eq.s32.totalorder %s27, 0
    %p222 = por %p220, %p221
    %s224 = sadd.s32 %s223, 1
    %p227 = scmp.eq.s32.totalorder %s21, 1
    %p228 = scmp.ne.s32.totalorder %s223, %s225
    %p229 = scmp.eq.s32.totalorder %s21, 0
    %p230 = por %p228, %p229
    %p231 = scmp.ne.s32.totalorder %s223, %s225
    %p232 = scmp.eq.s32.totalorder %s26, 1
    %p233 = por %p231, %p232
    %p234 = scmp.ne.s32.totalorder %s225, %s226
    %p235 = scmp.eq.s32.totalorder %s26, 0
    %p236 = por %p234, %p235
    %p237 = scmp.ne.s32.totalorder %s225, %s226
    %p238 = scmp.eq.s32.totalorder %s27, 1
    %p239 = por %p237, %p238
    %p241 = scmp.ne.s32.totalorder %s226, %s240
    %p242 = scmp.eq.s32.totalorder %s27, 0
    %p243 = por %p241, %p242
    %s245 = sadd.s32 %s244, 1
    %p248 = scmp.eq.s32.totalorder %s21, 1
    %p249 = scmp.ne.s32.totalorder %s244, %s246
    %p250 = scmp.eq.s32.totalorder %s21, 0
    %p251 = por %p249, %p250
    %p252 = scmp.ne.s32.totalorder %s244, %s246
    %p253 = scmp.eq.s32.totalorder %s26, 1
    %p254 = por %p252, %p253
    %p255 = scmp.ne.s32.totalorder %s246, %s247
    %p256 = scmp.eq.s32.totalorder %s26, 0
    %p257 = por %p255, %p256
    %p258 = scmp.ne.s32.totalorder %s246, %s247
    %p259 = scmp.eq.s32.totalorder %s27, 1
    %p260 = por %p258, %p259
    %p262 = scmp.ne.s32.totalorder %s247, %s261
    %p263 = scmp.eq.s32.totalorder %s27, 0
    %p264 = por %p262, %p263
    %s266 = sadd.s32 %s265, 1
    %p269 = scmp.eq.s32.totalorder %s21, 1
    %p270 = scmp.ne.s32.totalorder %s265, %s267
    %p271 = scmp.eq.s32.totalorder %s21, 0
    %p272 = por %p270, %p271
    %p273 = scmp.ne.s32.totalorder %s265, %s267
    %p274 = scmp.eq.s32.totalorder %s26, 1
    %p275 = por %p273, %p274
    %p276 = scmp.ne.s32.totalorder %s267, %s268
    %p277 = scmp.eq.s32.totalorder %s26, 0
    %p278 = por %p276, %p277
    %p279 = scmp.ne.s32.totalorder %s267, %s268
    %p280 = scmp.eq.s32.totalorder %s27, 1
    %p281 = por %p279, %p280
    %p283 = scmp.ne.s32.totalorder %s268, %s282
    %p284 = scmp.eq.s32.totalorder %s27, 0
    %p285 = por %p283, %p284
    %s287 = sadd.s32 %s286, 1
    %p290 = scmp.eq.s32.totalorder %s21, 1
    %p291 = scmp.ne.s32.totalorder %s286, %s288
    %p292 = scmp.eq.s32.totalorder %s21, 0
    %p293 = por %p291, %p292
    %p294 = scmp.ne.s32.totalorder %s286, %s288
    %p295 = scmp.eq.s32.totalorder %s26, 1
    %p296 = por %p294, %p295
    %p297 = scmp.ne.s32.totalorder %s288, %s289
    %p298 = scmp.eq.s32.totalorder %s26, 0
    %p299 = por %p297, %p298
    %p300 = scmp.ne.s32.totalorder %s288, %s289
    %p301 = scmp.eq.s32.totalorder %s27, 1
    %p302 = por %p300, %p301
    %p304 = scmp.ne.s32.totalorder %s289, %s303
    %p305 = scmp.eq.s32.totalorder %s27, 0
    %p306 = por %p304, %p305
    %s307 = ssub.s32 %s21, %s28
    %p308 = scmp.eq.s32.totalorder %s307, 0
    %s310 = sadd.s32 %s309, 1
    %s311 = scalar_select %p308, %s309, %s310
    %p314 = pneg %p308
    %p315 = scmp.eq.s32.totalorder %s21, 1
    %p316 = por %p314, %p315
    %p317 = scmp.ne.s32.totalorder %s309, %s312
    %p318 = scmp.eq.s32.totalorder %s21, 0
    %p319 = por %p317, %p318
    %p320 = scmp.ne.s32.totalorder %s309, %s312
    %p321 = scmp.eq.s32.totalorder %s26, 1
    %p322 = por %p320, %p321
    %p323 = scmp.ne.s32.totalorder %s312, %s313
    %p324 = scmp.eq.s32.totalorder %s26, 0
    %p325 = por %p323, %p324
    %p326 = scmp.ne.s32.totalorder %s312, %s313
    %p327 = scmp.eq.s32.totalorder %s27, 1
    %p328 = por %p326, %p327
    %p330 = scmp.ne.s32.totalorder %s313, %s329
    %p331 = scmp.eq.s32.totalorder %s27, 0
    %p332 = por %p330, %p331
    %p333 = scmp.le.s32.totalorder 1, %s21
    %p334 = scmp.lt.s32.totalorder %s21, 3
    %p335 = pnand %p333, %p334
    %p336 = pneg %p335
    // Predicated region
    $region9: #{_dke_apply.1} parent=5 // pred_check
      _
    $region10: #{_dke_apply.1} parent=5 // pred_check_branch
      %338 = sbr.rel (%p335) target = $region12
    $region11: #{_dke_apply.1} parent=5 // pred_region
      %s339 = ssub.s32 %s21, 1
      // Predicated region
      $region13: #{_dke_apply.1} parent=11 // pred_check
        %p340 = pneg %p68
      $region14: #{_dke_apply.1} parent=11 // pred_check_branch
        %342 = sbr.rel (%p340) target = $region16
      $region15: #{_dke_apply.1} parent=11 // pred_region
        _
      $region16: #{_dke_apply.1} parent=11 // pred_fallthru
        _
      // Predicated region
      $region17: #{_dke_apply.1} parent=11 // pred_check
        %p343 = pneg %p89
      $region18: #{_dke_apply.1} parent=11 // pred_check_branch
        %345 = sbr.rel (%p343) target = $region20
      $region19: #{_dke_apply.1} parent=11 // pred_region
        _
      $region20: #{_dke_apply.1} parent=11 // pred_fallthru
        _
      // Predicated region
      $region21: #{_dke_apply.1} parent=11 // pred_check
        %p346 = pneg %p110
      $region22: #{_dke_apply.1} parent=11 // pred_check_branch
        %348 = sbr.rel (%p346) target = $region24
      $region23: #{_dke_apply.1} parent=11 // pred_region
        _
      $region24: #{_dke_apply.1} parent=11 // pred_fallthru
        _
      // Predicated region
      $region25: #{_dke_apply.1} parent=11 // pred_check
        %p349 = pneg %p131
      $region26: #{_dke_apply.1} parent=11 // pred_check_branch
        %351 = sbr.rel (%p349) target = $region28
      $region27: #{_dke_apply.1} parent=11 // pred_region
        _
      $region28: #{_dke_apply.1} parent=11 // pred_fallthru
        _
      // Predicated region
      $region29: #{_dke_apply.1} parent=11 // pred_check
        %p352 = pneg %p152
      $region30: #{_dke_apply.1} parent=11 // pred_check_branch
        %354 = sbr.rel (%p352) target = $region32
      $region31: #{_dke_apply.1} parent=11 // pred_region
        _
      $region32: #{_dke_apply.1} parent=11 // pred_fallthru
        _
      // Predicated region
      $region33: #{_dke_apply.1} parent=11 // pred_check
        %p355 = pneg %p173
      $region34: #{_dke_apply.1} parent=11 // pred_check_branch
        %357 = sbr.rel (%p355) target = $region36
      $region35: #{_dke_apply.1} parent=11 // pred_region
        _
      $region36: #{_dke_apply.1} parent=11 // pred_fallthru
        _
      // Predicated region
      $region37: #{_dke_apply.1} parent=11 // pred_check
        %p358 = pneg %p194
      $region38: #{_dke_apply.1} parent=11 // pred_check_branch
        %360 = sbr.rel (%p358) target = $region40
      $region39: #{_dke_apply.1} parent=11 // pred_region
        _
      $region40: #{_dke_apply.1} parent=11 // pred_fallthru
        _
      // Predicated region
      $region41: #{_dke_apply.1} parent=11 // pred_check
        %p361 = pneg %p215
      $region42: #{_dke_apply.1} parent=11 // pred_check_branch
        %363 = sbr.rel (%p361) target = $region44
      $region43: #{_dke_apply.1} parent=11 // pred_region
        _
      $region44: #{_dke_apply.1} parent=11 // pred_fallthru
        _
      // Predicated region
      $region45: #{_dke_apply.1} parent=11 // pred_check
        %p364 = pneg %p236
      $region46: #{_dke_apply.1} parent=11 // pred_check_branch
        %366 = sbr.rel (%p364) target = $region48
      $region47: #{_dke_apply.1} parent=11 // pred_region
        _
      $region48: #{_dke_apply.1} parent=11 // pred_fallthru
        _
      // Predicated region
      $region49: #{_dke_apply.1} parent=11 // pred_check
        %p367 = pneg %p257
      $region50: #{_dke_apply.1} parent=11 // pred_check_branch
        %369 = sbr.rel (%p367) target = $region52
      $region51: #{_dke_apply.1} parent=11 // pred_region
        _
      $region52: #{_dke_apply.1} parent=11 // pred_fallthru
        _
      // Predicated region
      $region53: #{_dke_apply.1} parent=11 // pred_check
        %p370 = pneg %p278
      $region54: #{_dke_apply.1} parent=11 // pred_check_branch
        %372 = sbr.rel (%p370) target = $region56
      $region55: #{_dke_apply.1} parent=11 // pred_region
        _
      $region56: #{_dke_apply.1} parent=11 // pred_fallthru
        _
      // Predicated region
      $region57: #{_dke_apply.1} parent=11 // pred_check
        %p373 = pneg %p299
      $region58: #{_dke_apply.1} parent=11 // pred_check_branch
        %375 = sbr.rel (%p373) target = $region60
      $region59: #{_dke_apply.1} parent=11 // pred_region
        _
      $region60: #{_dke_apply.1} parent=11 // pred_fallthru
        _
    $region12: #{_dke_apply.1} parent=5 // pred_fallthru
      _
    %p376 = scmp.lt.s32.totalorder %s21, 2
    // Predicated region
    $region61: #{_dke_apply.1} parent=5 // pred_check
      %p377 = pneg %p376
    $region62: #{_dke_apply.1} parent=5 // pred_check_branch
      %379 = sbr.rel (%p377) target = $region64
    $region63: #{_dke_apply.1} parent=5 // pred_region
      // Predicated region
      $region65: #{_dke_apply.1} parent=63 // pred_check
        %p380 = pneg %p41
      $region66: #{_dke_apply.1} parent=63 // pred_check_branch
        %382 = sbr.rel (%p380) target = $region68
      $region67: #{_dke_apply.1} parent=63 // pred_region
        %p383 = scmp.lt.s32.totalorder %s21, 1
        %s384 = scalar_select %p383, %s21, 1
        %s385 = smul.addr %s384, 2
        %s386 = smul.addr %s385, 4
        %s387 = scalar_lea.vmem %s0, %s386
      $region68: #{_dke_apply.1} parent=63 // pred_fallthru
        _
    $region64: #{_dke_apply.1} parent=5 // pred_fallthru
      _
    %p388 = scmp.le.s32.totalorder 1, %s21
    %p389 = scmp.lt.s32.totalorder %s21, 3
    %p390 = pnand %p388, %p389
    %p391 = pneg %p390
    // Predicated region
    $region69: #{_dke_apply.1} parent=5 // pred_check
      _
    $region70: #{_dke_apply.1} parent=5 // pred_check_branch
      %393 = sbr.rel (%p390) target = $region72
    $region71: #{_dke_apply.1} parent=5 // pred_region
      %s394 = ssub.s32 %s21, 1
      %p395 = scmp.lt.s32.totalorder %s26, 1
      %s396 = scalar_select %p395, %s26, 1
      %s397 = smul.addr %s396, 2
      %s398 = smul.addr %s397, 4
      %s399 = scalar_lea.vmem %s0, %s398
      %p400 = pneg %p47
      %p401 = pneg %p44
      %p402 = pneg %p68
      %p403 = pneg %p65
      %p404 = pneg %p89
      %p405 = pneg %p86
      %p406 = pneg %p110
      %p407 = pneg %p107
      %p408 = pneg %p131
      %p409 = pneg %p128
      %p410 = pneg %p152
      %p411 = pneg %p149
      %p412 = pneg %p173
      %p413 = pneg %p170
      %p414 = pneg %p194
      %p415 = pneg %p191
      %p416 = pneg %p215
      %p417 = pneg %p212
      %p418 = pneg %p236
      %p419 = pneg %p233
      %p420 = pneg %p257
      %p421 = pneg %p254
      %p422 = pneg %p278
      %p423 = pneg %p275
      %p424 = pneg %p299
      %p425 = pneg %p296
      %p426 = pneg %p325
      %p427 = pneg %p322
      %p428 = scmp.lt.s32.totalorder %s26, 1
      %s429 = scalar_select %p428, %s26, 1
      %s430 = smul.addr %s429, 2
      %s431 = scalar_lea.vmem %s13, %s430
      %p432 = scmp.lt.s32.totalorder %s26, 1
      %s433 = scalar_select %p432, %s26, 1
      %s434 = smul.addr %s433, 2
      %s435 = smul.addr %s434, 4
      %s436 = scalar_lea.vmem %s0, %s435
      %p437 = scmp.lt.s32.totalorder %s26, 1
      %s438 = scalar_select %p437, %s26, 1
      %s439 = smul.addr %s438, 2
      %s440 = scalar_lea.vmem %s13, %s439
      %v441 = vld [vmem:[%s436] sm:$0xff]
      %v442 = vld [vmem:[%s3] sm:$0xff]
      %v443 = vld [vmem:[%s3 + $0x8] sm:$0xff]
      %v444 = vld [vmem:[%s1] sm:$0xff]
      %v445 = vld [vmem:[%s1 + $0x8] sm:$0xff]
      %v446 = vld [vmem:[%s1 + $0x10] sm:$0xff]
      %v447 = vld [vmem:[%s1 + $0x18] sm:$0xff]
      %v448 = vld [vmem:[%s1 + $0x20] sm:$0xff]
      %v449 = vld [vmem:[%s1 + $0x28] sm:$0xff]
      %v450 = vld [vmem:[%s1 + $0x30] sm:$0xff]
      %v451 = vld [vmem:[%s1 + $0x38] sm:$0xff]
      %v452 = vld [vmem:[%s1 + $0x40] sm:$0xff]
      %v453 = vld [vmem:[%s1 + $0x48] sm:$0xff]
      %v454 = vld [vmem:[%s1 + $0x50] sm:$0xff]
      %v455 = vld [vmem:[%s1 + $0x58] sm:$0xff]
      %v456 = vld [vmem:[%s1 + $0x60] sm:$0xff]
      %v457 = vld [vmem:[%s1 + $0x68] sm:$0xff]
      %v458 = vld [vmem:[%s1 + $0x70] sm:$0xff]
      %v459 = vld [vmem:[%s1 + $0x78] sm:$0xff]
      %v460 = vld [vmem:[%s1 + $0x80] sm:$0xff]
      %v461 = vld [vmem:[%s1 + $0x88] sm:$0xff]
      %v462 = vld [vmem:[%s1 + $0x90] sm:$0xff]
      %v463 = vld [vmem:[%s1 + $0x98] sm:$0xff]
      %v464 = vld [vmem:[%s1 + $0xa0] sm:$0xff]
      %v465 = vld [vmem:[%s1 + $0xa8] sm:$0xff]
      %v466 = vld [vmem:[%s1 + $0xb0] sm:$0xff]
      %v467 = vld [vmem:[%s1 + $0xb8] sm:$0xff]
      %v468 = vld [vmem:[%s1 + $0xc0] sm:$0xff]
      %v469 = vld [vmem:[%s1 + $0xc8] sm:$0xff]
      %v470 = vld [vmem:[%s1 + $0xd0] sm:$0xff]
      %v471 = vld [vmem:[%s1 + $0xd8] sm:$0xff]
      %v472 = vld [vmem:[%s1 + $0xe0] sm:$0xff]
      %v473 = vld [vmem:[%s1 + $0xe8] sm:$0xff]
      %v474 = vld [vmem:[%s1 + $0xf0] sm:$0xff]
      %v475 = vld [vmem:[%s1 + $0xf8] sm:$0xff]
      %v477 = vcombine.high %v441, %v441
      %479 = vmatprep.subr.mxu0 0.0
      %480 = vmatpush1.msra.mxu0 %v459
      %481 = vmatprep.subr.mxu0 0.0
      %482 = vmatpush1.msra.mxu0 %v458
      %483 = vmatprep.subr.mxu0 0.0
      %484 = vmatpush1.msra.mxu0 %v457
      %485 = vmatprep.subr.mxu0 0.0
      %486 = vmatpush1.msra.mxu0 %v456
      %487 = vmatprep.subr.mxu0 0.0
      %488 = vmatpush1.msra.mxu0 %v455
      %489 = vmatprep.subr.mxu0 0.0
      %490 = vmatpush1.msra.mxu0 %v454
      %491 = vmatprep.subr.mxu0 0.0
      %492 = vmatpush1.msra.mxu0 %v453
      %493 = vmatprep.subr.mxu0 0.0
      %494 = vmatpush1.msra.mxu0 %v452
      %495 = vmatprep.subr.mxu0 0.0
      %496 = vmatpush1.msra.mxu0 %v451
      %497 = vmatprep.subr.mxu0 0.0
      %498 = vmatpush1.msra.mxu0 %v450
      %499 = vmatprep.subr.mxu0 0.0
      %500 = vmatpush1.msra.mxu0 %v449
      %501 = vmatprep.subr.mxu0 0.0
      %502 = vmatpush1.msra.mxu0 %v448
      %503 = vmatprep.subr.mxu0 0.0
      %504 = vmatpush1.msra.mxu0 %v447
      %505 = vmatprep.subr.mxu0 0.0
      %506 = vmatpush1.msra.mxu0 %v446
      %507 = vmatprep.subr.mxu0 0.0
      %508 = vmatpush1.msra.mxu0 %v445
      %509 = vmatprep.subr.mxu0 0.0
      %510 = vmatpush1.msra.mxu0 %v444
      %511 = vmatprep.subr.mxu0 0.0
      %512 = vmatpush2.msra.mxu0 %v475
      %513 = vmatprep.subr.mxu0 0.0
      %514 = vmatpush2.msra.mxu0 %v474
      %515 = vmatprep.subr.mxu0 0.0
      %516 = vmatpush2.msra.mxu0 %v473
      %517 = vmatprep.subr.mxu0 0.0
      %518 = vmatpush2.msra.mxu0 %v472
      %519 = vmatprep.subr.mxu0 0.0
      %520 = vmatpush2.msra.mxu0 %v471
      %521 = vmatprep.subr.mxu0 0.0
      %522 = vmatpush2.msra.mxu0 %v470
      %523 = vmatprep.subr.mxu0 0.0
      %524 = vmatpush2.msra.mxu0 %v469
      %525 = vmatprep.subr.mxu0 0.0
      %526 = vmatpush2.msra.mxu0 %v468
      %527 = vmatprep.subr.mxu0 0.0
      %528 = vmatpush2.msra.mxu0 %v467
      %529 = vmatprep.subr.mxu0 0.0
      %530 = vmatpush2.msra.mxu0 %v466
      %531 = vmatprep.subr.mxu0 0.0
      %532 = vmatpush2.msra.mxu0 %v465
      %533 = vmatprep.subr.mxu0 0.0
      %534 = vmatpush2.msra.mxu0 %v464
      %535 = vmatprep.subr.mxu0 0.0
      %536 = vmatpush2.msra.mxu0 %v463
      %537 = vmatprep.subr.mxu0 0.0
      %538 = vmatpush2.msra.mxu0 %v462
      %539 = vmatprep.subr.mxu0 0.0
      %540 = vmatpush2.msra.mxu0 %v461
      %541 = vmatprep.subr.mxu0 0.0
      %542 = vmatpush2.msra.mxu0 %v460
      %543 = vmatprep.mubr.f32.mxu0 %v477
      %544 = vmatmul.mubr.f32.gmra.mxu0 %v441
      %v545 = vpop.f32.mrf.mxu0
      %v546 = vadd.f32 0.0, %v545
      %v547 = vpop.f32.mrf.mxu0
      %548 = vdwg.mxu0
      %v549 = vld [vmem:[%s2] sm:$0xff]
      %v550 = vld [vmem:[%s2 + $0x8] sm:$0xff]
      %vm551 = vcmask 31744
      %v553 = vsel %vm551, %v549, 0
      %v556 = vsel %vm551, %v550, 0
      %vm558 = vcmask 1043456
      %v560 = vsel %vm558, %v546, 0
      %562 = vmatprep.subr.mxu0 0.0
      %563 = vmatpush1.msra.mxu0 0.0
      %564 = vmatprep.subr.mxu0 0.0
      %565 = vmatpush1.msra.mxu0 0.0
      %566 = vmatprep.subr.mxu0 0.0
      %567 = vmatpush1.msra.mxu0 0.0
      %568 = vmatprep.subr.mxu0 0.0
      %569 = vmatpush1.msra.mxu0 0.0
      %570 = vmatprep.subr.mxu0 0.0
      %571 = vmatpush1.msra.mxu0 0.0
      %572 = vmatprep.subr.mxu0 0.0
      %573 = vmatpush1.msra.mxu0 0.0
      %574 = vmatprep.subr.mxu0 0.0
      %575 = vmatpush1.msra.mxu0 0.0
      %576 = vmatprep.subr.mxu0 0.0
      %577 = vmatpush1.msra.mxu0 0.0
      %578 = vmatprep.subr.mxu0 0.0
      %579 = vmatpush1.msra.mxu0 0.0
      %580 = vmatprep.subr.mxu0 0.0
      %581 = vmatpush1.msra.mxu0 0.0
      %582 = vmatprep.subr.mxu0 0.0
      %583 = vmatpush1.msra.mxu0 0.0
      %584 = vmatprep.subr.mxu0 0.0
      %585 = vmatpush1.msra.mxu0 0.0
      %586 = vmatprep.subr.mxu0 0.0
      %587 = vmatpush1.msra.mxu0 0.0
      %588 = vmatprep.subr.mxu0 0.0
      %589 = vmatpush1.msra.mxu0 0.0
      %590 = vmatprep.subr.mxu0 0.0
      %591 = vmatpush1.msra.mxu0 0.0
      %592 = vmatprep.subr.mxu0 0.0
      %593 = vmatpush1.msra.mxu0 %v560
      %594 = vmatprep.subr.mxu0 0.0
      %595 = vmatpush2.msra.mxu0 0.0
      %596 = vmatprep.subr.mxu0 0.0
      %597 = vmatpush2.msra.mxu0 0.0
      %598 = vmatprep.subr.mxu0 0.0
      %599 = vmatpush2.msra.mxu0 0.0
      %600 = vmatprep.subr.mxu0 0.0
      %601 = vmatpush2.msra.mxu0 0.0
      %602 = vmatprep.subr.mxu0 0.0
      %603 = vmatpush2.msra.mxu0 0.0
      %604 = vmatprep.subr.mxu0 0.0
      %605 = vmatpush2.msra.mxu0 0.0
      %606 = vmatprep.subr.mxu0 0.0
      %607 = vmatpush2.msra.mxu0 0.0
      %608 = vmatprep.subr.mxu0 0.0
      %609 = vmatpush2.msra.mxu0 0.0
      %610 = vmatprep.subr.mxu0 0.0
      %611 = vmatpush2.msra.mxu0 0.0
      %612 = vmatprep.subr.mxu0 0.0
      %613 = vmatpush2.msra.mxu0 0.0
      %614 = vmatprep.subr.mxu0 0.0
      %615 = vmatpush2.msra.mxu0 0.0
      %616 = vmatprep.subr.mxu0 0.0
      %617 = vmatpush2.msra.mxu0 0.0
      %618 = vmatprep.subr.mxu0 0.0
      %619 = vmatpush2.msra.mxu0 0.0
      %620 = vmatprep.subr.mxu0 0.0
      %621 = vmatpush2.msra.mxu0 0.0
      %622 = vmatprep.subr.mxu0 0.0
      %623 = vmatpush2.msra.mxu0 0.0
      %624 = vmatprep.subr.mxu0 0.0
      %625 = vmatpush2.msra.mxu0 0.0
      %626 = vmatprep.mubr.f32.mxu0 0.0
      %627 = vmatmul.mubr.f32.gmra.mxu0 %v553
      %v628 = vpop.f32.mrf.mxu0
      %v629 = vadd.f32 0.0, %v628
      %v630 = vpop.f32.mrf.mxu0
      %631 = vmatprep.mubr.f32.mxu0 0.0
      %632 = vmatmul.mubr.f32.gmra.mxu0 %v556
      %v633 = vpop.f32.mrf.mxu0
      %v634 = vadd.f32 0.0, %v633
      %v635 = vpop.f32.mrf.mxu0
      %636 = vdwg.mxu0
      %638 = vset.pattern.permute.xlu0 0
      %639 = vperm.xlu0 %638, %v442
      %v640 = vpop.permute.xlu0 %639
      %643 = vset.pattern.permute.xlu0 0
      %644 = vperm.xlu0 %643, %v443
      %v645 = vpop.permute.xlu0 %644
      %v647 = vadd.f32 %v640, %v629
      %v648 = vadd.f32 %v645, %v634
      %s649 = scalar_lea.vmem %s1, 256
      %v650 = vld [vmem:[%s649] sm:$0xff]
      %v651 = vld [vmem:[%s649 + $0x8] sm:$0xff]
      %v652 = vld [vmem:[%s649 + $0x10] sm:$0xff]
      %v653 = vld [vmem:[%s649 + $0x18] sm:$0xff]
      %v654 = vld [vmem:[%s649 + $0x20] sm:$0xff]
      %v655 = vld [vmem:[%s649 + $0x28] sm:$0xff]
      %v656 = vld [vmem:[%s649 + $0x30] sm:$0xff]
      %v657 = vld [vmem:[%s649 + $0x38] sm:$0xff]
      %v658 = vld [vmem:[%s649 + $0x40] sm:$0xff]
      %v659 = vld [vmem:[%s649 + $0x48] sm:$0xff]
      %v660 = vld [vmem:[%s649 + $0x50] sm:$0xff]
      %v661 = vld [vmem:[%s649 + $0x58] sm:$0xff]
      %v662 = vld [vmem:[%s649 + $0x60] sm:$0xff]
      %v663 = vld [vmem:[%s649 + $0x68] sm:$0xff]
      %v664 = vld [vmem:[%s649 + $0x70] sm:$0xff]
      %v665 = vld [vmem:[%s649 + $0x78] sm:$0xff]
      %v666 = vld [vmem:[%s649 + $0x80] sm:$0xff]
      %v667 = vld [vmem:[%s649 + $0x88] sm:$0xff]
      %v668 = vld [vmem:[%s649 + $0x90] sm:$0xff]
      %v669 = vld [vmem:[%s649 + $0x98] sm:$0xff]
      %v670 = vld [vmem:[%s649 + $0xa0] sm:$0xff]
      %v671 = vld [vmem:[%s649 + $0xa8] sm:$0xff]
      %v672 = vld [vmem:[%s649 + $0xb0] sm:$0xff]
      %v673 = vld [vmem:[%s649 + $0xb8] sm:$0xff]
      %v674 = vld [vmem:[%s649 + $0xc0] sm:$0xff]
      %v675 = vld [vmem:[%s649 + $0xc8] sm:$0xff]
      %v676 = vld [vmem:[%s649 + $0xd0] sm:$0xff]
      %v677 = vld [vmem:[%s649 + $0xd8] sm:$0xff]
      %v678 = vld [vmem:[%s649 + $0xe0] sm:$0xff]
      %v679 = vld [vmem:[%s649 + $0xe8] sm:$0xff]
      %v680 = vld [vmem:[%s649 + $0xf0] sm:$0xff]
      %v681 = vld [vmem:[%s649 + $0xf8] sm:$0xff]
      %682 = vmatprep.subr.mxu0 0.0
      %683 = vmatpush1.msra.mxu0 %v665
      %684 = vmatprep.subr.mxu0 0.0
      %685 = vmatpush1.msra.mxu0 %v664
      %686 = vmatprep.subr.mxu0 0.0
      %687 = vmatpush1.msra.mxu0 %v663
      %688 = vmatprep.subr.mxu0 0.0
      %689 = vmatpush1.msra.mxu0 %v662
      %690 = vmatprep.subr.mxu0 0.0
      %691 = vmatpush1.msra.mxu0 %v661
      %692 = vmatprep.subr.mxu0 0.0
      %693 = vmatpush1.msra.mxu0 %v660
      %694 = vmatprep.subr.mxu0 0.0
      %695 = vmatpush1.msra.mxu0 %v659
      %696 = vmatprep.subr.mxu0 0.0
      %697 = vmatpush1.msra.mxu0 %v658
      %698 = vmatprep.subr.mxu0 0.0
      %699 = vmatpush1.msra.mxu0 %v657
      %700 = vmatprep.subr.mxu0 0.0
      %701 = vmatpush1.msra.mxu0 %v656
      %702 = vmatprep.subr.mxu0 0.0
      %703 = vmatpush1.msra.mxu0 %v655
      %704 = vmatprep.subr.mxu0 0.0
      %705 = vmatpush1.msra.mxu0 %v654
      %706 = vmatprep.subr.mxu0 0.0
      %707 = vmatpush1.msra.mxu0 %v653
      %708 = vmatprep.subr.mxu0 0.0
      %709 = vmatpush1.msra.mxu0 %v652
      %710 = vmatprep.subr.mxu0 0.0
      %711 = vmatpush1.msra.mxu0 %v651
      %712 = vmatprep.subr.mxu0 0.0
      %713 = vmatpush1.msra.mxu0 %v650
      %714 = vmatprep.subr.mxu0 0.0
      %715 = vmatpush2.msra.mxu0 %v681
      %716 = vmatprep.subr.mxu0 0.0
      %717 = vmatpush2.msra.mxu0 %v680
      %718 = vmatprep.subr.mxu0 0.0
      %719 = vmatpush2.msra.mxu0 %v679
      %720 = vmatprep.subr.mxu0 0.0
      %721 = vmatpush2.msra.mxu0 %v678
      %722 = vmatprep.subr.mxu0 0.0
      %723 = vmatpush2.msra.mxu0 %v677
      %724 = vmatprep.subr.mxu0 0.0
      %725 = vmatpush2.msra.mxu0 %v676
      %726 = vmatprep.subr.mxu0 0.0
      %727 = vmatpush2.msra.mxu0 %v675
      %728 = vmatprep.subr.mxu0 0.0
      %729 = vmatpush2.msra.mxu0 %v674
      %730 = vmatprep.subr.mxu0 0.0
      %731 = vmatpush2.msra.mxu0 %v673
      %732 = vmatprep.subr.mxu0 0.0
      %733 = vmatpush2.msra.mxu0 %v672
      %734 = vmatprep.subr.mxu0 0.0
      %735 = vmatpush2.msra.mxu0 %v671
      %736 = vmatprep.subr.mxu0 0.0
      %737 = vmatpush2.msra.mxu0 %v670
      %738 = vmatprep.subr.mxu0 0.0
      %739 = vmatpush2.msra.mxu0 %v669
      %740 = vmatprep.subr.mxu0 0.0
      %741 = vmatpush2.msra.mxu0 %v668
      %742 = vmatprep.subr.mxu0 0.0
      %743 = vmatpush2.msra.mxu0 %v667
      %744 = vmatprep.subr.mxu0 0.0
      %745 = vmatpush2.msra.mxu0 %v666
      %746 = vmatprep.mubr.f32.mxu0 %v477
      %747 = vmatmul.mubr.f32.gmra.mxu0 %v441
      %v748 = vpop.f32.mrf.mxu0
      %v749 = vadd.f32 0.0, %v748
      %v750 = vpop.f32.mrf.mxu0
      %751 = vdwg.mxu0
      %s752 = scalar_lea.vmem %s2, 16
      %v753 = vld [vmem:[%s752] sm:$0xff]
      %v754 = vld [vmem:[%s752 + $0x8] sm:$0xff]
      %v756 = vsel %vm551, %v753, 0
      %v759 = vsel %vm551, %v754, 0
      %v762 = vsel %vm558, %v749, 0
      %764 = vmatprep.subr.mxu0 0.0
      %765 = vmatpush1.msra.mxu0 0.0
      %766 = vmatprep.subr.mxu0 0.0
      %767 = vmatpush1.msra.mxu0 0.0
      %768 = vmatprep.subr.mxu0 0.0
      %769 = vmatpush1.msra.mxu0 0.0
      %770 = vmatprep.subr.mxu0 0.0
      %771 = vmatpush1.msra.mxu0 0.0
      %772 = vmatprep.subr.mxu0 0.0
      %773 = vmatpush1.msra.mxu0 0.0
      %774 = vmatprep.subr.mxu0 0.0
      %775 = vmatpush1.msra.mxu0 0.0
      %776 = vmatprep.subr.mxu0 0.0
      %777 = vmatpush1.msra.mxu0 0.0
      %778 = vmatprep.subr.mxu0 0.0
      %779 = vmatpush1.msra.mxu0 0.0
      %780 = vmatprep.subr.mxu0 0.0
      %781 = vmatpush1.msra.mxu0 0.0
      %782 = vmatprep.subr.mxu0 0.0
      %783 = vmatpush1.msra.mxu0 0.0
      %784 = vmatprep.subr.mxu0 0.0
      %785 = vmatpush1.msra.mxu0 0.0
      %786 = vmatprep.subr.mxu0 0.0
      %787 = vmatpush1.msra.mxu0 0.0
      %788 = vmatprep.subr.mxu0 0.0
      %789 = vmatpush1.msra.mxu0 0.0
      %790 = vmatprep.subr.mxu0 0.0
      %791 = vmatpush1.msra.mxu0 0.0
      %792 = vmatprep.subr.mxu0 0.0
      %793 = vmatpush1.msra.mxu0 0.0
      %794 = vmatprep.subr.mxu0 0.0
      %795 = vmatpush1.msra.mxu0 %v762
      %796 = vmatprep.subr.mxu0 0.0
      %797 = vmatpush2.msra.mxu0 0.0
      %798 = vmatprep.subr.mxu0 0.0
      %799 = vmatpush2.msra.mxu0 0.0
      %800 = vmatprep.subr.mxu0 0.0
      %801 = vmatpush2.msra.mxu0 0.0
      %802 = vmatprep.subr.mxu0 0.0
      %803 = vmatpush2.msra.mxu0 0.0
      %804 = vmatprep.subr.mxu0 0.0
      %805 = vmatpush2.msra.mxu0 0.0
      %806 = vmatprep.subr.mxu0 0.0
      %807 = vmatpush2.msra.mxu0 0.0
      %808 = vmatprep.subr.mxu0 0.0
      %809 = vmatpush2.msra.mxu0 0.0
      %810 = vmatprep.subr.mxu0 0.0
      %811 = vmatpush2.msra.mxu0 0.0
      %812 = vmatprep.subr.mxu0 0.0
      %813 = vmatpush2.msra.mxu0 0.0
      %814 = vmatprep.subr.mxu0 0.0
      %815 = vmatpush2.msra.mxu0 0.0
      %816 = vmatprep.subr.mxu0 0.0
      %817 = vmatpush2.msra.mxu0 0.0
      %818 = vmatprep.subr.mxu0 0.0
      %819 = vmatpush2.msra.mxu0 0.0
      %820 = vmatprep.subr.mxu0 0.0
      %821 = vmatpush2.msra.mxu0 0.0
      %822 = vmatprep.subr.mxu0 0.0
      %823 = vmatpush2.msra.mxu0 0.0
      %824 = vmatprep.subr.mxu0 0.0
      %825 = vmatpush2.msra.mxu0 0.0
      %826 = vmatprep.subr.mxu0 0.0
      %827 = vmatpush2.msra.mxu0 0.0
      %828 = vmatprep.mubr.f32.mxu0 0.0
      %829 = vmatmul.mubr.f32.gmra.mxu0 %v756
      %v830 = vpop.f32.mrf.mxu0
      %v831 = vadd.f32 0.0, %v830
      %v832 = vpop.f32.mrf.mxu0
      %833 = vmatprep.mubr.f32.mxu0 0.0
      %834 = vmatmul.mubr.f32.gmra.mxu0 %v759
      %v835 = vpop.f32.mrf.mxu0
      %v836 = vadd.f32 0.0, %v835
      %v837 = vpop.f32.mrf.mxu0
      %838 = vdwg.mxu0
      %v839 = vadd.f32 %v647, %v831
      %v840 = vadd.f32 %v648, %v836
      %s841 = scalar_lea.vmem %s1, 512
      %v842 = vld [vmem:[%s841] sm:$0xff]
      %v843 = vld [vmem:[%s841 + $0x8] sm:$0xff]
      %v844 = vld [vmem:[%s841 + $0x10] sm:$0xff]
      %v845 = vld [vmem:[%s841 + $0x18] sm:$0xff]
      %v846 = vld [vmem:[%s841 + $0x20] sm:$0xff]
      %v847 = vld [vmem:[%s841 + $0x28] sm:$0xff]
      %v848 = vld [vmem:[%s841 + $0x30] sm:$0xff]
      %v849 = vld [vmem:[%s841 + $0x38] sm:$0xff]
      %v850 = vld [vmem:[%s841 + $0x40] sm:$0xff]
      %v851 = vld [vmem:[%s841 + $0x48] sm:$0xff]
      %v852 = vld [vmem:[%s841 + $0x50] sm:$0xff]
      %v853 = vld [vmem:[%s841 + $0x58] sm:$0xff]
      %v854 = vld [vmem:[%s841 + $0x60] sm:$0xff]
      %v855 = vld [vmem:[%s841 + $0x68] sm:$0xff]
      %v856 = vld [vmem:[%s841 + $0x70] sm:$0xff]
      %v857 = vld [vmem:[%s841 + $0x78] sm:$0xff]
      %v858 = vld [vmem:[%s841 + $0x80] sm:$0xff]
      %v859 = vld [vmem:[%s841 + $0x88] sm:$0xff]
      %v860 = vld [vmem:[%s841 + $0x90] sm:$0xff]
      %v861 = vld [vmem:[%s841 + $0x98] sm:$0xff]
      %v862 = vld [vmem:[%s841 + $0xa0] sm:$0xff]
      %v863 = vld [vmem:[%s841 + $0xa8] sm:$0xff]
      %v864 = vld [vmem:[%s841 + $0xb0] sm:$0xff]
      %v865 = vld [vmem:[%s841 + $0xb8] sm:$0xff]
      %v866 = vld [vmem:[%s841 + $0xc0] sm:$0xff]
      %v867 = vld [vmem:[%s841 + $0xc8] sm:$0xff]
      %v868 = vld [vmem:[%s841 + $0xd0] sm:$0xff]
      %v869 = vld [vmem:[%s841 + $0xd8] sm:$0xff]
      %v870 = vld [vmem:[%s841 + $0xe0] sm:$0xff]
      %v871 = vld [vmem:[%s841 + $0xe8] sm:$0xff]
      %v872 = vld [vmem:[%s841 + $0xf0] sm:$0xff]
      %v873 = vld [vmem:[%s841 + $0xf8] sm:$0xff]
      %874 = vmatprep.subr.mxu0 0.0
      %875 = vmatpush1.msra.mxu0 %v857
      %876 = vmatprep.subr.mxu0 0.0
      %877 = vmatpush1.msra.mxu0 %v856
      %878 = vmatprep.subr.mxu0 0.0
      %879 = vmatpush1.msra.mxu0 %v855
      %880 = vmatprep.subr.mxu0 0.0
      %881 = vmatpush1.msra.mxu0 %v854
      %882 = vmatprep.subr.mxu0 0.0
      %883 = vmatpush1.msra.mxu0 %v853
      %884 = vmatprep.subr.mxu0 0.0
      %885 = vmatpush1.msra.mxu0 %v852
      %886 = vmatprep.subr.mxu0 0.0
      %887 = vmatpush1.msra.mxu0 %v851
      %888 = vmatprep.subr.mxu0 0.0
      %889 = vmatpush1.msra.mxu0 %v850
      %890 = vmatprep.subr.mxu0 0.0
      %891 = vmatpush1.msra.mxu0 %v849
      %892 = vmatprep.subr.mxu0 0.0
      %893 = vmatpush1.msra.mxu0 %v848
      %894 = vmatprep.subr.mxu0 0.0
      %895 = vmatpush1.msra.mxu0 %v847
      %896 = vmatprep.subr.mxu0 0.0
      %897 = vmatpush1.msra.mxu0 %v846
      %898 = vmatprep.subr.mxu0 0.0
      %899 = vmatpush1.msra.mxu0 %v845
      %900 = vmatprep.subr.mxu0 0.0
      %901 = vmatpush1.msra.mxu0 %v844
      %902 = vmatprep.subr.mxu0 0.0
      %903 = vmatpush1.msra.mxu0 %v843
      %904 = vmatprep.subr.mxu0 0.0
      %905 = vmatpush1.msra.mxu0 %v842
      %906 = vmatprep.subr.mxu0 0.0
      %907 = vmatpush2.msra.mxu0 %v873
      %908 = vmatprep.subr.mxu0 0.0
      %909 = vmatpush2.msra.mxu0 %v872
      %910 = vmatprep.subr.mxu0 0.0
      %911 = vmatpush2.msra.mxu0 %v871
      %912 = vmatprep.subr.mxu0 0.0
      %913 = vmatpush2.msra.mxu0 %v870
      %914 = vmatprep.subr.mxu0 0.0
      %915 = vmatpush2.msra.mxu0 %v869
      %916 = vmatprep.subr.mxu0 0.0
      %917 = vmatpush2.msra.mxu0 %v868
      %918 = vmatprep.subr.mxu0 0.0
      %919 = vmatpush2.msra.mxu0 %v867
      %920 = vmatprep.subr.mxu0 0.0
      %921 = vmatpush2.msra.mxu0 %v866
      %922 = vmatprep.subr.mxu0 0.0
      %923 = vmatpush2.msra.mxu0 %v865
      %924 = vmatprep.subr.mxu0 0.0
      %925 = vmatpush2.msra.mxu0 %v864
      %926 = vmatprep.subr.mxu0 0.0
      %927 = vmatpush2.msra.mxu0 %v863
      %928 = vmatprep.subr.mxu0 0.0
      %929 = vmatpush2.msra.mxu0 %v862
      %930 = vmatprep.subr.mxu0 0.0
      %931 = vmatpush2.msra.mxu0 %v861
      %932 = vmatprep.subr.mxu0 0.0
      %933 = vmatpush2.msra.mxu0 %v860
      %934 = vmatprep.subr.mxu0 0.0
      %935 = vmatpush2.msra.mxu0 %v859
      %936 = vmatprep.subr.mxu0 0.0
      %937 = vmatpush2.msra.mxu0 %v858
      %938 = vmatprep.mubr.f32.mxu0 %v477
      %939 = vmatmul.mubr.f32.gmra.mxu0 %v441
      %v940 = vpop.f32.mrf.mxu0
      %v941 = vadd.f32 0.0, %v940
      %v942 = vpop.f32.mrf.mxu0
      %943 = vdwg.mxu0
      %s944 = scalar_lea.vmem %s2, 32
      %v945 = vld [vmem:[%s944] sm:$0xff]
      %v946 = vld [vmem:[%s944 + $0x8] sm:$0xff]
      %v948 = vsel %vm551, %v945, 0
      %v951 = vsel %vm551, %v946, 0
      %v954 = vsel %vm558, %v941, 0
      %956 = vmatprep.subr.mxu0 0.0
      %957 = vmatpush1.msra.mxu0 0.0
      %958 = vmatprep.subr.mxu0 0.0
      %959 = vmatpush1.msra.mxu0 0.0
      %960 = vmatprep.subr.mxu0 0.0
      %961 = vmatpush1.msra.mxu0 0.0
      %962 = vmatprep.subr.mxu0 0.0
      %963 = vmatpush1.msra.mxu0 0.0
      %964 = vmatprep.subr.mxu0 0.0
      %965 = vmatpush1.msra.mxu0 0.0
      %966 = vmatprep.subr.mxu0 0.0
      %967 = vmatpush1.msra.mxu0 0.0
      %968 = vmatprep.subr.mxu0 0.0
      %969 = vmatpush1.msra.mxu0 0.0
      %970 = vmatprep.subr.mxu0 0.0
      %971 = vmatpush1.msra.mxu0 0.0
      %972 = vmatprep.subr.mxu0 0.0
      %973 = vmatpush1.msra.mxu0 0.0
      %974 = vmatprep.subr.mxu0 0.0
      %975 = vmatpush1.msra.mxu0 0.0
      %976 = vmatprep.subr.mxu0 0.0
      %977 = vmatpush1.msra.mxu0 0.0
      %978 = vmatprep.subr.mxu0 0.0
      %979 = vmatpush1.msra.mxu0 0.0
      %980 = vmatprep.subr.mxu0 0.0
      %981 = vmatpush1.msra.mxu0 0.0
      %982 = vmatprep.subr.mxu0 0.0
      %983 = vmatpush1.msra.mxu0 0.0
      %984 = vmatprep.subr.mxu0 0.0
      %985 = vmatpush1.msra.mxu0 0.0
      %986 = vmatprep.subr.mxu0 0.0
      %987 = vmatpush1.msra.mxu0 %v954
      %988 = vmatprep.subr.mxu0 0.0
      %989 = vmatpush2.msra.mxu0 0.0
      %990 = vmatprep.subr.mxu0 0.0
      %991 = vmatpush2.msra.mxu0 0.0
      %992 = vmatprep.subr.mxu0 0.0
      %993 = vmatpush2.msra.mxu0 0.0
      %994 = vmatprep.subr.mxu0 0.0
      %995 = vmatpush2.msra.mxu0 0.0
      %996 = vmatprep.subr.mxu0 0.0
      %997 = vmatpush2.msra.mxu0 0.0
      %998 = vmatprep.subr.mxu0 0.0
      %999 = vmatpush2.msra.mxu0 0.0
      %1000 = vmatprep.subr.mxu0 0.0
      %1001 = vmatpush2.msra.mxu0 0.0
      %1002 = vmatprep.subr.mxu0 0.0
      %1003 = vmatpush2.msra.mxu0 0.0
      %1004 = vmatprep.subr.mxu0 0.0
      %1005 = vmatpush2.msra.mxu0 0.0
      %1006 = vmatprep.subr.mxu0 0.0
      %1007 = vmatpush2.msra.mxu0 0.0
      %1008 = vmatprep.subr.mxu0 0.0
      %1009 = vmatpush2.msra.mxu0 0.0
      %1010 = vmatprep.subr.mxu0 0.0
      %1011 = vmatpush2.msra.mxu0 0.0
      %1012 = vmatprep.subr.mxu0 0.0
      %1013 = vmatpush2.msra.mxu0 0.0
      %1014 = vmatprep.subr.mxu0 0.0
      %1015 = vmatpush2.msra.mxu0 0.0
      %1016 = vmatprep.subr.mxu0 0.0
      %1017 = vmatpush2.msra.mxu0 0.0
      %1018 = vmatprep.subr.mxu0 0.0
      %1019 = vmatpush2.msra.mxu0 0.0
      %1020 = vmatprep.mubr.f32.mxu0 0.0
      %1021 = vmatmul.mubr.f32.gmra.mxu0 %v948
      %v1022 = vpop.f32.mrf.mxu0
      %v1023 = vadd.f32 0.0, %v1022
      %v1024 = vpop.f32.mrf.mxu0
      %1025 = vmatprep.mubr.f32.mxu0 0.0
      %1026 = vmatmul.mubr.f32.gmra.mxu0 %v951
      %v1027 = vpop.f32.mrf.mxu0
      %v1028 = vadd.f32 0.0, %v1027
      %v1029 = vpop.f32.mrf.mxu0
      %1030 = vdwg.mxu0
      %v1031 = vadd.f32 %v839, %v1023
      %v1032 = vadd.f32 %v840, %v1028
      %s1033 = scalar_lea.vmem %s1, 768
      %v1034 = vld [vmem:[%s1033] sm:$0xff]
      %v1035 = vld [vmem:[%s1033 + $0x8] sm:$0xff]
      %v1036 = vld [vmem:[%s1033 + $0x10] sm:$0xff]
      %v1037 = vld [vmem:[%s1033 + $0x18] sm:$0xff]
      %v1038 = vld [vmem:[%s1033 + $0x20] sm:$0xff]
      %v1039 = vld [vmem:[%s1033 + $0x28] sm:$0xff]
      %v1040 = vld [vmem:[%s1033 + $0x30] sm:$0xff]
      %v1041 = vld [vmem:[%s1033 + $0x38] sm:$0xff]
      %v1042 = vld [vmem:[%s1033 + $0x40] sm:$0xff]
      %v1043 = vld [vmem:[%s1033 + $0x48] sm:$0xff]
      %v1044 = vld [vmem:[%s1033 + $0x50] sm:$0xff]
      %v1045 = vld [vmem:[%s1033 + $0x58] sm:$0xff]
      %v1046 = vld [vmem:[%s1033 + $0x60] sm:$0xff]
      %v1047 = vld [vmem:[%s1033 + $0x68] sm:$0xff]
      %v1048 = vld [vmem:[%s1033 + $0x70] sm:$0xff]
      %v1049 = vld [vmem:[%s1033 + $0x78] sm:$0xff]
      %v1050 = vld [vmem:[%s1033 + $0x80] sm:$0xff]
      %v1051 = vld [vmem:[%s1033 + $0x88] sm:$0xff]
      %v1052 = vld [vmem:[%s1033 + $0x90] sm:$0xff]
      %v1053 = vld [vmem:[%s1033 + $0x98] sm:$0xff]
      %v1054 = vld [vmem:[%s1033 + $0xa0] sm:$0xff]
      %v1055 = vld [vmem:[%s1033 + $0xa8] sm:$0xff]
      %v1056 = vld [vmem:[%s1033 + $0xb0] sm:$0xff]
      %v1057 = vld [vmem:[%s1033 + $0xb8] sm:$0xff]
      %v1058 = vld [vmem:[%s1033 + $0xc0] sm:$0xff]
      %v1059 = vld [vmem:[%s1033 + $0xc8] sm:$0xff]
      %v1060 = vld [vmem:[%s1033 + $0xd0] sm:$0xff]
      %v1061 = vld [vmem:[%s1033 + $0xd8] sm:$0xff]
      %v1062 = vld [vmem:[%s1033 + $0xe0] sm:$0xff]
      %v1063 = vld [vmem:[%s1033 + $0xe8] sm:$0xff]
      %v1064 = vld [vmem:[%s1033 + $0xf0] sm:$0xff]
      %v1065 = vld [vmem:[%s1033 + $0xf8] sm:$0xff]
      %1066 = vmatprep.subr.mxu0 0.0
      %1067 = vmatpush1.msra.mxu0 %v1049
      %1068 = vmatprep.subr.mxu0 0.0
      %1069 = vmatpush1.msra.mxu0 %v1048
      %1070 = vmatprep.subr.mxu0 0.0
      %1071 = vmatpush1.msra.mxu0 %v1047
      %1072 = vmatprep.subr.mxu0 0.0
      %1073 = vmatpush1.msra.mxu0 %v1046
      %1074 = vmatprep.subr.mxu0 0.0
      %1075 = vmatpush1.msra.mxu0 %v1045
      %1076 = vmatprep.subr.mxu0 0.0
      %1077 = vmatpush1.msra.mxu0 %v1044
      %1078 = vmatprep.subr.mxu0 0.0
      %1079 = vmatpush1.msra.mxu0 %v1043
      %1080 = vmatprep.subr.mxu0 0.0
      %1081 = vmatpush1.msra.mxu0 %v1042
      %1082 = vmatprep.subr.mxu0 0.0
      %1083 = vmatpush1.msra.mxu0 %v1041
      %1084 = vmatprep.subr.mxu0 0.0
      %1085 = vmatpush1.msra.mxu0 %v1040
      %1086 = vmatprep.subr.mxu0 0.0
      %1087 = vmatpush1.msra.mxu0 %v1039
      %1088 = vmatprep.subr.mxu0 0.0
      %1089 = vmatpush1.msra.mxu0 %v1038
      %1090 = vmatprep.subr.mxu0 0.0
      %1091 = vmatpush1.msra.mxu0 %v1037
      %1092 = vmatprep.subr.mxu0 0.0
      %1093 = vmatpush1.msra.mxu0 %v1036
      %1094 = vmatprep.subr.mxu0 0.0
      %1095 = vmatpush1.msra.mxu0 %v1035
      %1096 = vmatprep.subr.mxu0 0.0
      %1097 = vmatpush1.msra.mxu0 %v1034
      %1098 = vmatprep.subr.mxu0 0.0
      %1099 = vmatpush2.msra.mxu0 %v1065
      %1100 = vmatprep.subr.mxu0 0.0
      %1101 = vmatpush2.msra.mxu0 %v1064
      %1102 = vmatprep.subr.mxu0 0.0
      %1103 = vmatpush2.msra.mxu0 %v1063
      %1104 = vmatprep.subr.mxu0 0.0
      %1105 = vmatpush2.msra.mxu0 %v1062
      %1106 = vmatprep.subr.mxu0 0.0
      %1107 = vmatpush2.msra.mxu0 %v1061
      %1108 = vmatprep.subr.mxu0 0.0
      %1109 = vmatpush2.msra.mxu0 %v1060
      %1110 = vmatprep.subr.mxu0 0.0
      %1111 = vmatpush2.msra.mxu0 %v1059
      %1112 = vmatprep.subr.mxu0 0.0
      %1113 = vmatpush2.msra.mxu0 %v1058
      %1114 = vmatprep.subr.mxu0 0.0
      %1115 = vmatpush2.msra.mxu0 %v1057
      %1116 = vmatprep.subr.mxu0 0.0
      %1117 = vmatpush2.msra.mxu0 %v1056
      %1118 = vmatprep.subr.mxu0 0.0
      %1119 = vmatpush2.msra.mxu0 %v1055
      %1120 = vmatprep.subr.mxu0 0.0
      %1121 = vmatpush2.msra.mxu0 %v1054
      %1122 = vmatprep.subr.mxu0 0.0
      %1123 = vmatpush2.msra.mxu0 %v1053
      %1124 = vmatprep.subr.mxu0 0.0
      %1125 = vmatpush2.msra.mxu0 %v1052
      %1126 = vmatprep.subr.mxu0 0.0
      %1127 = vmatpush2.msra.mxu0 %v1051
      %1128 = vmatprep.subr.mxu0 0.0
      %1129 = vmatpush2.msra.mxu0 %v1050
      %1130 = vmatprep.mubr.f32.mxu0 %v477
      %1131 = vmatmul.mubr.f32.gmra.mxu0 %v441
      %v1132 = vpop.f32.mrf.mxu0
      %v1133 = vadd.f32 0.0, %v1132
      %v1134 = vpop.f32.mrf.mxu0
      %1135 = vdwg.mxu0
      %s1136 = scalar_lea.vmem %s2, 48
      %v1137 = vld [vmem:[%s1136] sm:$0xff]
      %v1138 = vld [vmem:[%s1136 + $0x8] sm:$0xff]
      %v1140 = vsel %vm551, %v1137, 0
      %v1143 = vsel %vm551, %v1138, 0
      %v1146 = vsel %vm558, %v1133, 0
      %1148 = vmatprep.subr.mxu0 0.0
      %1149 = vmatpush1.msra.mxu0 0.0
      %1150 = vmatprep.subr.mxu0 0.0
      %1151 = vmatpush1.msra.mxu0 0.0
      %1152 = vmatprep.subr.mxu0 0.0
      %1153 = vmatpush1.msra.mxu0 0.0
      %1154 = vmatprep.subr.mxu0 0.0
      %1155 = vmatpush1.msra.mxu0 0.0
      %1156 = vmatprep.subr.mxu0 0.0
      %1157 = vmatpush1.msra.mxu0 0.0
      %1158 = vmatprep.subr.mxu0 0.0
      %1159 = vmatpush1.msra.mxu0 0.0
      %1160 = vmatprep.subr.mxu0 0.0
      %1161 = vmatpush1.msra.mxu0 0.0
      %1162 = vmatprep.subr.mxu0 0.0
      %1163 = vmatpush1.msra.mxu0 0.0
      %1164 = vmatprep.subr.mxu0 0.0
      %1165 = vmatpush1.msra.mxu0 0.0
      %1166 = vmatprep.subr.mxu0 0.0
      %1167 = vmatpush1.msra.mxu0 0.0
      %1168 = vmatprep.subr.mxu0 0.0
      %1169 = vmatpush1.msra.mxu0 0.0
      %1170 = vmatprep.subr.mxu0 0.0
      %1171 = vmatpush1.msra.mxu0 0.0
      %1172 = vmatprep.subr.mxu0 0.0
      %1173 = vmatpush1.msra.mxu0 0.0
      %1174 = vmatprep.subr.mxu0 0.0
      %1175 = vmatpush1.msra.mxu0 0.0
      %1176 = vmatprep.subr.mxu0 0.0
      %1177 = vmatpush1.msra.mxu0 0.0
      %1178 = vmatprep.subr.mxu0 0.0
      %1179 = vmatpush1.msra.mxu0 %v1146
      %1180 = vmatprep.subr.mxu0 0.0
      %1181 = vmatpush2.msra.mxu0 0.0
      %1182 = vmatprep.subr.mxu0 0.0
      %1183 = vmatpush2.msra.mxu0 0.0
      %1184 = vmatprep.subr.mxu0 0.0
      %1185 = vmatpush2.msra.mxu0 0.0
      %1186 = vmatprep.subr.mxu0 0.0
      %1187 = vmatpush2.msra.mxu0 0.0
      %1188 = vmatprep.subr.mxu0 0.0
      %1189 = vmatpush2.msra.mxu0 0.0
      %1190 = vmatprep.subr.mxu0 0.0
      %1191 = vmatpush2.msra.mxu0 0.0
      %1192 = vmatprep.subr.mxu0 0.0
      %1193 = vmatpush2.msra.mxu0 0.0
      %1194 = vmatprep.subr.mxu0 0.0
      %1195 = vmatpush2.msra.mxu0 0.0
      %1196 = vmatprep.subr.mxu0 0.0
      %1197 = vmatpush2.msra.mxu0 0.0
      %1198 = vmatprep.subr.mxu0 0.0
      %1199 = vmatpush2.msra.mxu0 0.0
      %1200 = vmatprep.subr.mxu0 0.0
      %1201 = vmatpush2.msra.mxu0 0.0
      %1202 = vmatprep.subr.mxu0 0.0
      %1203 = vmatpush2.msra.mxu0 0.0
      %1204 = vmatprep.subr.mxu0 0.0
      %1205 = vmatpush2.msra.mxu0 0.0
      %1206 = vmatprep.subr.mxu0 0.0
      %1207 = vmatpush2.msra.mxu0 0.0
      %1208 = vmatprep.subr.mxu0 0.0
      %1209 = vmatpush2.msra.mxu0 0.0
      %1210 = vmatprep.subr.mxu0 0.0
      %1211 = vmatpush2.msra.mxu0 0.0
      %1212 = vmatprep.mubr.f32.mxu0 0.0
      %1213 = vmatmul.mubr.f32.gmra.mxu0 %v1140
      %v1214 = vpop.f32.mrf.mxu0
      %v1215 = vadd.f32 0.0, %v1214
      %v1216 = vpop.f32.mrf.mxu0
      %1217 = vmatprep.mubr.f32.mxu0 0.0
      %1218 = vmatmul.mubr.f32.gmra.mxu0 %v1143
      %v1219 = vpop.f32.mrf.mxu0
      %v1220 = vadd.f32 0.0, %v1219
      %v1221 = vpop.f32.mrf.mxu0
      %1222 = vdwg.mxu0
      %v1223 = vadd.f32 %v1031, %v1215
      %v1224 = vadd.f32 %v1032, %v1220
      %s1225 = scalar_lea.vmem %s1, 1024
      %v1226 = vld [vmem:[%s1225] sm:$0xff]
      %v1227 = vld [vmem:[%s1225 + $0x8] sm:$0xff]
      %v1228 = vld [vmem:[%s1225 + $0x10] sm:$0xff]
      %v1229 = vld [vmem:[%s1225 + $0x18] sm:$0xff]
      %v1230 = vld [vmem:[%s1225 + $0x20] sm:$0xff]
      %v1231 = vld [vmem:[%s1225 + $0x28] sm:$0xff]
      %v1232 = vld [vmem:[%s1225 + $0x30] sm:$0xff]
      %v1233 = vld [vmem:[%s1225 + $0x38] sm:$0xff]
      %v1234 = vld [vmem:[%s1225 + $0x40] sm:$0xff]
      %v1235 = vld [vmem:[%s1225 + $0x48] sm:$0xff]
      %v1236 = vld [vmem:[%s1225 + $0x50] sm:$0xff]
      %v1237 = vld [vmem:[%s1225 + $0x58] sm:$0xff]
      %v1238 = vld [vmem:[%s1225 + $0x60] sm:$0xff]
      %v1239 = vld [vmem:[%s1225 + $0x68] sm:$0xff]
      %v1240 = vld [vmem:[%s1225 + $0x70] sm:$0xff]
      %v1241 = vld [vmem:[%s1225 + $0x78] sm:$0xff]
      %v1242 = vld [vmem:[%s1225 + $0x80] sm:$0xff]
      %v1243 = vld [vmem:[%s1225 + $0x88] sm:$0xff]
      %v1244 = vld [vmem:[%s1225 + $0x90] sm:$0xff]
      %v1245 = vld [vmem:[%s1225 + $0x98] sm:$0xff]
      %v1246 = vld [vmem:[%s1225 + $0xa0] sm:$0xff]
      %v1247 = vld [vmem:[%s1225 + $0xa8] sm:$0xff]
      %v1248 = vld [vmem:[%s1225 + $0xb0] sm:$0xff]
      %v1249 = vld [vmem:[%s1225 + $0xb8] sm:$0xff]
      %v1250 = vld [vmem:[%s1225 + $0xc0] sm:$0xff]
      %v1251 = vld [vmem:[%s1225 + $0xc8] sm:$0xff]
      %v1252 = vld [vmem:[%s1225 + $0xd0] sm:$0xff]
      %v1253 = vld [vmem:[%s1225 + $0xd8] sm:$0xff]
      %v1254 = vld [vmem:[%s1225 + $0xe0] sm:$0xff]
      %v1255 = vld [vmem:[%s1225 + $0xe8] sm:$0xff]
      %v1256 = vld [vmem:[%s1225 + $0xf0] sm:$0xff]
      %v1257 = vld [vmem:[%s1225 + $0xf8] sm:$0xff]
      %1258 = vmatprep.subr.mxu0 0.0
      %1259 = vmatpush1.msra.mxu0 %v1241
      %1260 = vmatprep.subr.mxu0 0.0
      %1261 = vmatpush1.msra.mxu0 %v1240
      %1262 = vmatprep.subr.mxu0 0.0
      %1263 = vmatpush1.msra.mxu0 %v1239
      %1264 = vmatprep.subr.mxu0 0.0
      %1265 = vmatpush1.msra.mxu0 %v1238
      %1266 = vmatprep.subr.mxu0 0.0
      %1267 = vmatpush1.msra.mxu0 %v1237
      %1268 = vmatprep.subr.mxu0 0.0
      %1269 = vmatpush1.msra.mxu0 %v1236
      %1270 = vmatprep.subr.mxu0 0.0
      %1271 = vmatpush1.msra.mxu0 %v1235
      %1272 = vmatprep.subr.mxu0 0.0
      %1273 = vmatpush1.msra.mxu0 %v1234
      %1274 = vmatprep.subr.mxu0 0.0
      %1275 = vmatpush1.msra.mxu0 %v1233
      %1276 = vmatprep.subr.mxu0 0.0
      %1277 = vmatpush1.msra.mxu0 %v1232
      %1278 = vmatprep.subr.mxu0 0.0
      %1279 = vmatpush1.msra.mxu0 %v1231
      %1280 = vmatprep.subr.mxu0 0.0
      %1281 = vmatpush1.msra.mxu0 %v1230
      %1282 = vmatprep.subr.mxu0 0.0
      %1283 = vmatpush1.msra.mxu0 %v1229
      %1284 = vmatprep.subr.mxu0 0.0
      %1285 = vmatpush1.msra.mxu0 %v1228
      %1286 = vmatprep.subr.mxu0 0.0
      %1287 = vmatpush1.msra.mxu0 %v1227
      %1288 = vmatprep.subr.mxu0 0.0
      %1289 = vmatpush1.msra.mxu0 %v1226
      %1290 = vmatprep.subr.mxu0 0.0
      %1291 = vmatpush2.msra.mxu0 %v1257
      %1292 = vmatprep.subr.mxu0 0.0
      %1293 = vmatpush2.msra.mxu0 %v1256
      %1294 = vmatprep.subr.mxu0 0.0
      %1295 = vmatpush2.msra.mxu0 %v1255
      %1296 = vmatprep.subr.mxu0 0.0
      %1297 = vmatpush2.msra.mxu0 %v1254
      %1298 = vmatprep.subr.mxu0 0.0
      %1299 = vmatpush2.msra.mxu0 %v1253
      %1300 = vmatprep.subr.mxu0 0.0
      %1301 = vmatpush2.msra.mxu0 %v1252
      %1302 = vmatprep.subr.mxu0 0.0
      %1303 = vmatpush2.msra.mxu0 %v1251
      %1304 = vmatprep.subr.mxu0 0.0
      %1305 = vmatpush2.msra.mxu0 %v1250
      %1306 = vmatprep.subr.mxu0 0.0
      %1307 = vmatpush2.msra.mxu0 %v1249
      %1308 = vmatprep.subr.mxu0 0.0
      %1309 = vmatpush2.msra.mxu0 %v1248
      %1310 = vmatprep.subr.mxu0 0.0
      %1311 = vmatpush2.msra.mxu0 %v1247
      %1312 = vmatprep.subr.mxu0 0.0
      %1313 = vmatpush2.msra.mxu0 %v1246
      %1314 = vmatprep.subr.mxu0 0.0
      %1315 = vmatpush2.msra.mxu0 %v1245
      %1316 = vmatprep.subr.mxu0 0.0
      %1317 = vmatpush2.msra.mxu0 %v1244
      %1318 = vmatprep.subr.mxu0 0.0
      %1319 = vmatpush2.msra.mxu0 %v1243
      %1320 = vmatprep.subr.mxu0 0.0
      %1321 = vmatpush2.msra.mxu0 %v1242
      %1322 = vmatprep.mubr.f32.mxu0 %v477
      %1323 = vmatmul.mubr.f32.gmra.mxu0 %v441
      %v1324 = vpop.f32.mrf.mxu0
      %v1325 = vadd.f32 0.0, %v1324
      %v1326 = vpop.f32.mrf.mxu0
      %1327 = vdwg.mxu0
      %s1328 = scalar_lea.vmem %s2, 64
      %v1329 = vld [vmem:[%s1328] sm:$0xff]
      %v1330 = vld [vmem:[%s1328 + $0x8] sm:$0xff]
      %v1332 = vsel %vm551, %v1329, 0
      %v1335 = vsel %vm551, %v1330, 0
      %v1338 = vsel %vm558, %v1325, 0
      %1340 = vmatprep.subr.mxu0 0.0
      %1341 = vmatpush1.msra.mxu0 0.0
      %1342 = vmatprep.subr.mxu0 0.0
      %1343 = vmatpush1.msra.mxu0 0.0
      %1344 = vmatprep.subr.mxu0 0.0
      %1345 = vmatpush1.msra.mxu0 0.0
      %1346 = vmatprep.subr.mxu0 0.0
      %1347 = vmatpush1.msra.mxu0 0.0
      %1348 = vmatprep.subr.mxu0 0.0
      %1349 = vmatpush1.msra.mxu0 0.0
      %1350 = vmatprep.subr.mxu0 0.0
      %1351 = vmatpush1.msra.mxu0 0.0
      %1352 = vmatprep.subr.mxu0 0.0
      %1353 = vmatpush1.msra.mxu0 0.0
      %1354 = vmatprep.subr.mxu0 0.0
      %1355 = vmatpush1.msra.mxu0 0.0
      %1356 = vmatprep.subr.mxu0 0.0
      %1357 = vmatpush1.msra.mxu0 0.0
      %1358 = vmatprep.subr.mxu0 0.0
      %1359 = vmatpush1.msra.mxu0 0.0
      %1360 = vmatprep.subr.mxu0 0.0
      %1361 = vmatpush1.msra.mxu0 0.0
      %1362 = vmatprep.subr.mxu0 0.0
      %1363 = vmatpush1.msra.mxu0 0.0
      %1364 = vmatprep.subr.mxu0 0.0
      %1365 = vmatpush1.msra.mxu0 0.0
      %1366 = vmatprep.subr.mxu0 0.0
      %1367 = vmatpush1.msra.mxu0 0.0
      %1368 = vmatprep.subr.mxu0 0.0
      %1369 = vmatpush1.msra.mxu0 0.0
      %1370 = vmatprep.subr.mxu0 0.0
      %1371 = vmatpush1.msra.mxu0 %v1338
      %1372 = vmatprep.subr.mxu0 0.0
      %1373 = vmatpush2.msra.mxu0 0.0
      %1374 = vmatprep.subr.mxu0 0.0
      %1375 = vmatpush2.msra.mxu0 0.0
      %1376 = vmatprep.subr.mxu0 0.0
      %1377 = vmatpush2.msra.mxu0 0.0
      %1378 = vmatprep.subr.mxu0 0.0
      %1379 = vmatpush2.msra.mxu0 0.0
      %1380 = vmatprep.subr.mxu0 0.0
      %1381 = vmatpush2.msra.mxu0 0.0
      %1382 = vmatprep.subr.mxu0 0.0
      %1383 = vmatpush2.msra.mxu0 0.0
      %1384 = vmatprep.subr.mxu0 0.0
      %1385 = vmatpush2.msra.mxu0 0.0
      %1386 = vmatprep.subr.mxu0 0.0
      %1387 = vmatpush2.msra.mxu0 0.0
      %1388 = vmatprep.subr.mxu0 0.0
      %1389 = vmatpush2.msra.mxu0 0.0
      %1390 = vmatprep.subr.mxu0 0.0
      %1391 = vmatpush2.msra.mxu0 0.0
      %1392 = vmatprep.subr.mxu0 0.0
      %1393 = vmatpush2.msra.mxu0 0.0
      %1394 = vmatprep.subr.mxu0 0.0
      %1395 = vmatpush2.msra.mxu0 0.0
      %1396 = vmatprep.subr.mxu0 0.0
      %1397 = vmatpush2.msra.mxu0 0.0
      %1398 = vmatprep.subr.mxu0 0.0
      %1399 = vmatpush2.msra.mxu0 0.0
      %1400 = vmatprep.subr.mxu0 0.0
      %1401 = vmatpush2.msra.mxu0 0.0
      %1402 = vmatprep.subr.mxu0 0.0
      %1403 = vmatpush2.msra.mxu0 0.0
      %1404 = vmatprep.mubr.f32.mxu0 0.0
      %1405 = vmatmul.mubr.f32.gmra.mxu0 %v1332
      %v1406 = vpop.f32.mrf.mxu0
      %v1407 = vadd.f32 0.0, %v1406
      %v1408 = vpop.f32.mrf.mxu0
      %1409 = vmatprep.mubr.f32.mxu0 0.0
      %1410 = vmatmul.mubr.f32.gmra.mxu0 %v1335
      %v1411 = vpop.f32.mrf.mxu0
      %v1412 = vadd.f32 0.0, %v1411
      %v1413 = vpop.f32.mrf.mxu0
      %1414 = vdwg.mxu0
      %v1415 = vadd.f32 %v1223, %v1407
      %v1416 = vadd.f32 %v1224, %v1412
      %s1417 = scalar_lea.vmem %s1, 1280
      %v1418 = vld [vmem:[%s1417] sm:$0xff]
      %v1419 = vld [vmem:[%s1417 + $0x8] sm:$0xff]
      %v1420 = vld [vmem:[%s1417 + $0x10] sm:$0xff]
      %v1421 = vld [vmem:[%s1417 + $0x18] sm:$0xff]
      %v1422 = vld [vmem:[%s1417 + $0x20] sm:$0xff]
      %v1423 = vld [vmem:[%s1417 + $0x28] sm:$0xff]
      %v1424 = vld [vmem:[%s1417 + $0x30] sm:$0xff]
      %v1425 = vld [vmem:[%s1417 + $0x38] sm:$0xff]
      %v1426 = vld [vmem:[%s1417 + $0x40] sm:$0xff]
      %v1427 = vld [vmem:[%s1417 + $0x48] sm:$0xff]
      %v1428 = vld [vmem:[%s1417 + $0x50] sm:$0xff]
      %v1429 = vld [vmem:[%s1417 + $0x58] sm:$0xff]
      %v1430 = vld [vmem:[%s1417 + $0x60] sm:$0xff]
      %v1431 = vld [vmem:[%s1417 + $0x68] sm:$0xff]
      %v1432 = vld [vmem:[%s1417 + $0x70] sm:$0xff]
      %v1433 = vld [vmem:[%s1417 + $0x78] sm:$0xff]
      %v1434 = vld [vmem:[%s1417 + $0x80] sm:$0xff]
      %v1435 = vld [vmem:[%s1417 + $0x88] sm:$0xff]
      %v1436 = vld [vmem:[%s1417 + $0x90] sm:$0xff]
      %v1437 = vld [vmem:[%s1417 + $0x98] sm:$0xff]
      %v1438 = vld [vmem:[%s1417 + $0xa0] sm:$0xff]
      %v1439 = vld [vmem:[%s1417 + $0xa8] sm:$0xff]
      %v1440 = vld [vmem:[%s1417 + $0xb0] sm:$0xff]
      %v1441 = vld [vmem:[%s1417 + $0xb8] sm:$0xff]
      %v1442 = vld [vmem:[%s1417 + $0xc0] sm:$0xff]
      %v1443 = vld [vmem:[%s1417 + $0xc8] sm:$0xff]
      %v1444 = vld [vmem:[%s1417 + $0xd0] sm:$0xff]
      %v1445 = vld [vmem:[%s1417 + $0xd8] sm:$0xff]
      %v1446 = vld [vmem:[%s1417 + $0xe0] sm:$0xff]
      %v1447 = vld [vmem:[%s1417 + $0xe8] sm:$0xff]
      %v1448 = vld [vmem:[%s1417 + $0xf0] sm:$0xff]
      %v1449 = vld [vmem:[%s1417 + $0xf8] sm:$0xff]
      %1450 = vmatprep.subr.mxu0 0.0
      %1451 = vmatpush1.msra.mxu0 %v1433
      %1452 = vmatprep.subr.mxu0 0.0
      %1453 = vmatpush1.msra.mxu0 %v1432
      %1454 = vmatprep.subr.mxu0 0.0
      %1455 = vmatpush1.msra.mxu0 %v1431
      %1456 = vmatprep.subr.mxu0 0.0
      %1457 = vmatpush1.msra.mxu0 %v1430
      %1458 = vmatprep.subr.mxu0 0.0
      %1459 = vmatpush1.msra.mxu0 %v1429
      %1460 = vmatprep.subr.mxu0 0.0
      %1461 = vmatpush1.msra.mxu0 %v1428
      %1462 = vmatprep.subr.mxu0 0.0
      %1463 = vmatpush1.msra.mxu0 %v1427
      %1464 = vmatprep.subr.mxu0 0.0
      %1465 = vmatpush1.msra.mxu0 %v1426
      %1466 = vmatprep.subr.mxu0 0.0
      %1467 = vmatpush1.msra.mxu0 %v1425
      %1468 = vmatprep.subr.mxu0 0.0
      %1469 = vmatpush1.msra.mxu0 %v1424
      %1470 = vmatprep.subr.mxu0 0.0
      %1471 = vmatpush1.msra.mxu0 %v1423
      %1472 = vmatprep.subr.mxu0 0.0
      %1473 = vmatpush1.msra.mxu0 %v1422
      %1474 = vmatprep.subr.mxu0 0.0
      %1475 = vmatpush1.msra.mxu0 %v1421
      %1476 = vmatprep.subr.mxu0 0.0
      %1477 = vmatpush1.msra.mxu0 %v1420
      %1478 = vmatprep.subr.mxu0 0.0
      %1479 = vmatpush1.msra.mxu0 %v1419
      %1480 = vmatprep.subr.mxu0 0.0
      %1481 = vmatpush1.msra.mxu0 %v1418
      %1482 = vmatprep.subr.mxu0 0.0
      %1483 = vmatpush2.msra.mxu0 %v1449
      %1484 = vmatprep.subr.mxu0 0.0
      %1485 = vmatpush2.msra.mxu0 %v1448
      %1486 = vmatprep.subr.mxu0 0.0
      %1487 = vmatpush2.msra.mxu0 %v1447
      %1488 = vmatprep.subr.mxu0 0.0
      %1489 = vmatpush2.msra.mxu0 %v1446
      %1490 = vmatprep.subr.mxu0 0.0
      %1491 = vmatpush2.msra.mxu0 %v1445
      %1492 = vmatprep.subr.mxu0 0.0
      %1493 = vmatpush2.msra.mxu0 %v1444
      %1494 = vmatprep.subr.mxu0 0.0
      %1495 = vmatpush2.msra.mxu0 %v1443
      %1496 = vmatprep.subr.mxu0 0.0
      %1497 = vmatpush2.msra.mxu0 %v1442
      %1498 = vmatprep.subr.mxu0 0.0
      %1499 = vmatpush2.msra.mxu0 %v1441
      %1500 = vmatprep.subr.mxu0 0.0
      %1501 = vmatpush2.msra.mxu0 %v1440
      %1502 = vmatprep.subr.mxu0 0.0
      %1503 = vmatpush2.msra.mxu0 %v1439
      %1504 = vmatprep.subr.mxu0 0.0
      %1505 = vmatpush2.msra.mxu0 %v1438
      %1506 = vmatprep.subr.mxu0 0.0
      %1507 = vmatpush2.msra.mxu0 %v1437
      %1508 = vmatprep.subr.mxu0 0.0
      %1509 = vmatpush2.msra.mxu0 %v1436
      %1510 = vmatprep.subr.mxu0 0.0
      %1511 = vmatpush2.msra.mxu0 %v1435
      %1512 = vmatprep.subr.mxu0 0.0
      %1513 = vmatpush2.msra.mxu0 %v1434
      %1514 = vmatprep.mubr.f32.mxu0 %v477
      %1515 = vmatmul.mubr.f32.gmra.mxu0 %v441
      %v1516 = vpop.f32.mrf.mxu0
      %v1517 = vadd.f32 0.0, %v1516
      %v1518 = vpop.f32.mrf.mxu0
      %1519 = vdwg.mxu0
      %s1520 = scalar_lea.vmem %s2, 80
      %v1521 = vld [vmem:[%s1520] sm:$0xff]
      %v1522 = vld [vmem:[%s1520 + $0x8] sm:$0xff]
      %v1524 = vsel %vm551, %v1521, 0
      %v1527 = vsel %vm551, %v1522, 0
      %v1530 = vsel %vm558, %v1517, 0
      %1532 = vmatprep.subr.mxu0 0.0
      %1533 = vmatpush1.msra.mxu0 0.0
      %1534 = vmatprep.subr.mxu0 0.0
      %1535 = vmatpush1.msra.mxu0 0.0
      %1536 = vmatprep.subr.mxu0 0.0
      %1537 = vmatpush1.msra.mxu0 0.0
      %1538 = vmatprep.subr.mxu0 0.0
      %1539 = vmatpush1.msra.mxu0 0.0
      %1540 = vmatprep.subr.mxu0 0.0
      %1541 = vmatpush1.msra.mxu0 0.0
      %1542 = vmatprep.subr.mxu0 0.0
      %1543 = vmatpush1.msra.mxu0 0.0
      %1544 = vmatprep.subr.mxu0 0.0
      %1545 = vmatpush1.msra.mxu0 0.0
      %1546 = vmatprep.subr.mxu0 0.0
      %1547 = vmatpush1.msra.mxu0 0.0
      %1548 = vmatprep.subr.mxu0 0.0
      %1549 = vmatpush1.msra.mxu0 0.0
      %1550 = vmatprep.subr.mxu0 0.0
      %1551 = vmatpush1.msra.mxu0 0.0
      %1552 = vmatprep.subr.mxu0 0.0
      %1553 = vmatpush1.msra.mxu0 0.0
      %1554 = vmatprep.subr.mxu0 0.0
      %1555 = vmatpush1.msra.mxu0 0.0
      %1556 = vmatprep.subr.mxu0 0.0
      %1557 = vmatpush1.msra.mxu0 0.0
      %1558 = vmatprep.subr.mxu0 0.0
      %1559 = vmatpush1.msra.mxu0 0.0
      %1560 = vmatprep.subr.mxu0 0.0
      %1561 = vmatpush1.msra.mxu0 0.0
      %1562 = vmatprep.subr.mxu0 0.0
      %1563 = vmatpush1.msra.mxu0 %v1530
      %1564 = vmatprep.subr.mxu0 0.0
      %1565 = vmatpush2.msra.mxu0 0.0
      %1566 = vmatprep.subr.mxu0 0.0
      %1567 = vmatpush2.msra.mxu0 0.0
      %1568 = vmatprep.subr.mxu0 0.0
      %1569 = vmatpush2.msra.mxu0 0.0
      %1570 = vmatprep.subr.mxu0 0.0
      %1571 = vmatpush2.msra.mxu0 0.0
      %1572 = vmatprep.subr.mxu0 0.0
      %1573 = vmatpush2.msra.mxu0 0.0
      %1574 = vmatprep.subr.mxu0 0.0
      %1575 = vmatpush2.msra.mxu0 0.0
      %1576 = vmatprep.subr.mxu0 0.0
      %1577 = vmatpush2.msra.mxu0 0.0
      %1578 = vmatprep.subr.mxu0 0.0
      %1579 = vmatpush2.msra.mxu0 0.0
      %1580 = vmatprep.subr.mxu0 0.0
      %1581 = vmatpush2.msra.mxu0 0.0
      %1582 = vmatprep.subr.mxu0 0.0
      %1583 = vmatpush2.msra.mxu0 0.0
      %1584 = vmatprep.subr.mxu0 0.0
      %1585 = vmatpush2.msra.mxu0 0.0
      %1586 = vmatprep.subr.mxu0 0.0
      %1587 = vmatpush2.msra.mxu0 0.0
      %1588 = vmatprep.subr.mxu0 0.0
      %1589 = vmatpush2.msra.mxu0 0.0
      %1590 = vmatprep.subr.mxu0 0.0
      %1591 = vmatpush2.msra.mxu0 0.0
      %1592 = vmatprep.subr.mxu0 0.0
      %1593 = vmatpush2.msra.mxu0 0.0
      %1594 = vmatprep.subr.mxu0 0.0
      %1595 = vmatpush2.msra.mxu0 0.0
      %1596 = vmatprep.mubr.f32.mxu0 0.0
      %1597 = vmatmul.mubr.f32.gmra.mxu0 %v1524
      %v1598 = vpop.f32.mrf.mxu0
      %v1599 = vadd.f32 0.0, %v1598
      %v1600 = vpop.f32.mrf.mxu0
      %1601 = vmatprep.mubr.f32.mxu0 0.0
      %1602 = vmatmul.mubr.f32.gmra.mxu0 %v1527
      %v1603 = vpop.f32.mrf.mxu0
      %v1604 = vadd.f32 0.0, %v1603
      %v1605 = vpop.f32.mrf.mxu0
      %1606 = vdwg.mxu0
      %v1607 = vadd.f32 %v1415, %v1599
      %v1608 = vadd.f32 %v1416, %v1604
      %s1609 = scalar_lea.vmem %s1, 1536
      %v1610 = vld [vmem:[%s1609] sm:$0xff]
      %v1611 = vld [vmem:[%s1609 + $0x8] sm:$0xff]
      %v1612 = vld [vmem:[%s1609 + $0x10] sm:$0xff]
      %v1613 = vld [vmem:[%s1609 + $0x18] sm:$0xff]
      %v1614 = vld [vmem:[%s1609 + $0x20] sm:$0xff]
      %v1615 = vld [vmem:[%s1609 + $0x28] sm:$0xff]
      %v1616 = vld [vmem:[%s1609 + $0x30] sm:$0xff]
      %v1617 = vld [vmem:[%s1609 + $0x38] sm:$0xff]
      %v1618 = vld [vmem:[%s1609 + $0x40] sm:$0xff]
      %v1619 = vld [vmem:[%s1609 + $0x48] sm:$0xff]
      %v1620 = vld [vmem:[%s1609 + $0x50] sm:$0xff]
      %v1621 = vld [vmem:[%s1609 + $0x58] sm:$0xff]
      %v1622 = vld [vmem:[%s1609 + $0x60] sm:$0xff]
      %v1623 = vld [vmem:[%s1609 + $0x68] sm:$0xff]
      %v1624 = vld [vmem:[%s1609 + $0x70] sm:$0xff]
      %v1625 = vld [vmem:[%s1609 + $0x78] sm:$0xff]
      %v1626 = vld [vmem:[%s1609 + $0x80] sm:$0xff]
      %v1627 = vld [vmem:[%s1609 + $0x88] sm:$0xff]
      %v1628 = vld [vmem:[%s1609 + $0x90] sm:$0xff]
      %v1629 = vld [vmem:[%s1609 + $0x98] sm:$0xff]
      %v1630 = vld [vmem:[%s1609 + $0xa0] sm:$0xff]
      %v1631 = vld [vmem:[%s1609 + $0xa8] sm:$0xff]
      %v1632 = vld [vmem:[%s1609 + $0xb0] sm:$0xff]
      %v1633 = vld [vmem:[%s1609 + $0xb8] sm:$0xff]
      %v1634 = vld [vmem:[%s1609 + $0xc0] sm:$0xff]
      %v1635 = vld [vmem:[%s1609 + $0xc8] sm:$0xff]
      %v1636 = vld [vmem:[%s1609 + $0xd0] sm:$0xff]
      %v1637 = vld [vmem:[%s1609 + $0xd8] sm:$0xff]
      %v1638 = vld [vmem:[%s1609 + $0xe0] sm:$0xff]
      %v1639 = vld [vmem:[%s1609 + $0xe8] sm:$0xff]
      %v1640 = vld [vmem:[%s1609 + $0xf0] sm:$0xff]
      %v1641 = vld [vmem:[%s1609 + $0xf8] sm:$0xff]
      %1642 = vmatprep.subr.mxu0 0.0
      %1643 = vmatpush1.msra.mxu0 %v1625
      %1644 = vmatprep.subr.mxu0 0.0
      %1645 = vmatpush1.msra.mxu0 %v1624
      %1646 = vmatprep.subr.mxu0 0.0
      %1647 = vmatpush1.msra.mxu0 %v1623
      %1648 = vmatprep.subr.mxu0 0.0
      %1649 = vmatpush1.msra.mxu0 %v1622
      %1650 = vmatprep.subr.mxu0 0.0
      %1651 = vmatpush1.msra.mxu0 %v1621
      %1652 = vmatprep.subr.mxu0 0.0
      %1653 = vmatpush1.msra.mxu0 %v1620
      %1654 = vmatprep.subr.mxu0 0.0
      %1655 = vmatpush1.msra.mxu0 %v1619
      %1656 = vmatprep.subr.mxu0 0.0
      %1657 = vmatpush1.msra.mxu0 %v1618
      %1658 = vmatprep.subr.mxu0 0.0
      %1659 = vmatpush1.msra.mxu0 %v1617
      %1660 = vmatprep.subr.mxu0 0.0
      %1661 = vmatpush1.msra.mxu0 %v1616
      %1662 = vmatprep.subr.mxu0 0.0
      %1663 = vmatpush1.msra.mxu0 %v1615
      %1664 = vmatprep.subr.mxu0 0.0
      %1665 = vmatpush1.msra.mxu0 %v1614
      %1666 = vmatprep.subr.mxu0 0.0
      %1667 = vmatpush1.msra.mxu0 %v1613
      %1668 = vmatprep.subr.mxu0 0.0
      %1669 = vmatpush1.msra.mxu0 %v1612
      %1670 = vmatprep.subr.mxu0 0.0
      %1671 = vmatpush1.msra.mxu0 %v1611
      %1672 = vmatprep.subr.mxu0 0.0
      %1673 = vmatpush1.msra.mxu0 %v1610
      %1674 = vmatprep.subr.mxu0 0.0
      %1675 = vmatpush2.msra.mxu0 %v1641
      %1676 = vmatprep.subr.mxu0 0.0
      %1677 = vmatpush2.msra.mxu0 %v1640
      %1678 = vmatprep.subr.mxu0 0.0
      %1679 = vmatpush2.msra.mxu0 %v1639
      %1680 = vmatprep.subr.mxu0 0.0
      %1681 = vmatpush2.msra.mxu0 %v1638
      %1682 = vmatprep.subr.mxu0 0.0
      %1683 = vmatpush2.msra.mxu0 %v1637
      %1684 = vmatprep.subr.mxu0 0.0
      %1685 = vmatpush2.msra.mxu0 %v1636
      %1686 = vmatprep.subr.mxu0 0.0
      %1687 = vmatpush2.msra.mxu0 %v1635
      %1688 = vmatprep.subr.mxu0 0.0
      %1689 = vmatpush2.msra.mxu0 %v1634
      %1690 = vmatprep.subr.mxu0 0.0
      %1691 = vmatpush2.msra.mxu0 %v1633
      %1692 = vmatprep.subr.mxu0 0.0
      %1693 = vmatpush2.msra.mxu0 %v1632
      %1694 = vmatprep.subr.mxu0 0.0
      %1695 = vmatpush2.msra.mxu0 %v1631
      %1696 = vmatprep.subr.mxu0 0.0
      %1697 = vmatpush2.msra.mxu0 %v1630
      %1698 = vmatprep.subr.mxu0 0.0
      %1699 = vmatpush2.msra.mxu0 %v1629
      %1700 = vmatprep.subr.mxu0 0.0
      %1701 = vmatpush2.msra.mxu0 %v1628
      %1702 = vmatprep.subr.mxu0 0.0
      %1703 = vmatpush2.msra.mxu0 %v1627
      %1704 = vmatprep.subr.mxu0 0.0
      %1705 = vmatpush2.msra.mxu0 %v1626
      %1706 = vmatprep.mubr.f32.mxu0 %v477
      %1707 = vmatmul.mubr.f32.gmra.mxu0 %v441
      %v1708 = vpop.f32.mrf.mxu0
      %v1709 = vadd.f32 0.0, %v1708
      %v1710 = vpop.f32.mrf.mxu0
      %1711 = vdwg.mxu0
      %s1712 = scalar_lea.vmem %s2, 96
      %v1713 = vld [vmem:[%s1712] sm:$0xff]
      %v1714 = vld [vmem:[%s1712 + $0x8] sm:$0xff]
      %v1716 = vsel %vm551, %v1713, 0
      %v1719 = vsel %vm551, %v1714, 0
      %v1722 = vsel %vm558, %v1709, 0
      %1724 = vmatprep.subr.mxu0 0.0
      %1725 = vmatpush1.msra.mxu0 0.0
      %1726 = vmatprep.subr.mxu0 0.0
      %1727 = vmatpush1.msra.mxu0 0.0
      %1728 = vmatprep.subr.mxu0 0.0
      %1729 = vmatpush1.msra.mxu0 0.0
      %1730 = vmatprep.subr.mxu0 0.0
      %1731 = vmatpush1.msra.mxu0 0.0
      %1732 = vmatprep.subr.mxu0 0.0
      %1733 = vmatpush1.msra.mxu0 0.0
      %1734 = vmatprep.subr.mxu0 0.0
      %1735 = vmatpush1.msra.mxu0 0.0
      %1736 = vmatprep.subr.mxu0 0.0
      %1737 = vmatpush1.msra.mxu0 0.0
      %1738 = vmatprep.subr.mxu0 0.0
      %1739 = vmatpush1.msra.mxu0 0.0
      %1740 = vmatprep.subr.mxu0 0.0
      %1741 = vmatpush1.msra.mxu0 0.0
      %1742 = vmatprep.subr.mxu0 0.0
      %1743 = vmatpush1.msra.mxu0 0.0
      %1744 = vmatprep.subr.mxu0 0.0
      %1745 = vmatpush1.msra.mxu0 0.0
      %1746 = vmatprep.subr.mxu0 0.0
      %1747 = vmatpush1.msra.mxu0 0.0
      %1748 = vmatprep.subr.mxu0 0.0
      %1749 = vmatpush1.msra.mxu0 0.0
      %1750 = vmatprep.subr.mxu0 0.0
      %1751 = vmatpush1.msra.mxu0 0.0
      %1752 = vmatprep.subr.mxu0 0.0
      %1753 = vmatpush1.msra.mxu0 0.0
      %1754 = vmatprep.subr.mxu0 0.0
      %1755 = vmatpush1.msra.mxu0 %v1722
      %1756 = vmatprep.subr.mxu0 0.0
      %1757 = vmatpush2.msra.mxu0 0.0
      %1758 = vmatprep.subr.mxu0 0.0
      %1759 = vmatpush2.msra.mxu0 0.0
      %1760 = vmatprep.subr.mxu0 0.0
      %1761 = vmatpush2.msra.mxu0 0.0
      %1762 = vmatprep.subr.mxu0 0.0
      %1763 = vmatpush2.msra.mxu0 0.0
      %1764 = vmatprep.subr.mxu0 0.0
      %1765 = vmatpush2.msra.mxu0 0.0
      %1766 = vmatprep.subr.mxu0 0.0
      %1767 = vmatpush2.msra.mxu0 0.0
      %1768 = vmatprep.subr.mxu0 0.0
      %1769 = vmatpush2.msra.mxu0 0.0
      %1770 = vmatprep.subr.mxu0 0.0
      %1771 = vmatpush2.msra.mxu0 0.0
      %1772 = vmatprep.subr.mxu0 0.0
      %1773 = vmatpush2.msra.mxu0 0.0
      %1774 = vmatprep.subr.mxu0 0.0
      %1775 = vmatpush2.msra.mxu0 0.0
      %1776 = vmatprep.subr.mxu0 0.0
      %1777 = vmatpush2.msra.mxu0 0.0
      %1778 = vmatprep.subr.mxu0 0.0
      %1779 = vmatpush2.msra.mxu0 0.0
      %1780 = vmatprep.subr.mxu0 0.0
      %1781 = vmatpush2.msra.mxu0 0.0
      %1782 = vmatprep.subr.mxu0 0.0
      %1783 = vmatpush2.msra.mxu0 0.0
      %1784 = vmatprep.subr.mxu0 0.0
      %1785 = vmatpush2.msra.mxu0 0.0
      %1786 = vmatprep.subr.mxu0 0.0
      %1787 = vmatpush2.msra.mxu0 0.0
      %1788 = vmatprep.mubr.f32.mxu0 0.0
      %1789 = vmatmul.mubr.f32.gmra.mxu0 %v1716
      %v1790 = vpop.f32.mrf.mxu0
      %v1791 = vadd.f32 0.0, %v1790
      %v1792 = vpop.f32.mrf.mxu0
      %1793 = vmatprep.mubr.f32.mxu0 0.0
      %1794 = vmatmul.mubr.f32.gmra.mxu0 %v1719
      %v1795 = vpop.f32.mrf.mxu0
      %v1796 = vadd.f32 0.0, %v1795
      %v1797 = vpop.f32.mrf.mxu0
      %1798 = vdwg.mxu0
      %v1799 = vadd.f32 %v1607, %v1791
      %v1800 = vadd.f32 %v1608, %v1796
      %s1801 = scalar_lea.vmem %s1, 1792
      %v1802 = vld [vmem:[%s1801] sm:$0xff]
      %v1803 = vld [vmem:[%s1801 + $0x8] sm:$0xff]
      %v1804 = vld [vmem:[%s1801 + $0x10] sm:$0xff]
      %v1805 = vld [vmem:[%s1801 + $0x18] sm:$0xff]
      %v1806 = vld [vmem:[%s1801 + $0x20] sm:$0xff]
      %v1807 = vld [vmem:[%s1801 + $0x28] sm:$0xff]
      %v1808 = vld [vmem:[%s1801 + $0x30] sm:$0xff]
      %v1809 = vld [vmem:[%s1801 + $0x38] sm:$0xff]
      %v1810 = vld [vmem:[%s1801 + $0x40] sm:$0xff]
      %v1811 = vld [vmem:[%s1801 + $0x48] sm:$0xff]
      %v1812 = vld [vmem:[%s1801 + $0x50] sm:$0xff]
      %v1813 = vld [vmem:[%s1801 + $0x58] sm:$0xff]
      %v1814 = vld [vmem:[%s1801 + $0x60] sm:$0xff]
      %v1815 = vld [vmem:[%s1801 + $0x68] sm:$0xff]
      %v1816 = vld [vmem:[%s1801 + $0x70] sm:$0xff]
      %v1817 = vld [vmem:[%s1801 + $0x78] sm:$0xff]
      %v1818 = vld [vmem:[%s1801 + $0x80] sm:$0xff]
      %v1819 = vld [vmem:[%s1801 + $0x88] sm:$0xff]
      %v1820 = vld [vmem:[%s1801 + $0x90] sm:$0xff]
      %v1821 = vld [vmem:[%s1801 + $0x98] sm:$0xff]
      %v1822 = vld [vmem:[%s1801 + $0xa0] sm:$0xff]
      %v1823 = vld [vmem:[%s1801 + $0xa8] sm:$0xff]
      %v1824 = vld [vmem:[%s1801 + $0xb0] sm:$0xff]
      %v1825 = vld [vmem:[%s1801 + $0xb8] sm:$0xff]
      %v1826 = vld [vmem:[%s1801 + $0xc0] sm:$0xff]
      %v1827 = vld [vmem:[%s1801 + $0xc8] sm:$0xff]
      %v1828 = vld [vmem:[%s1801 + $0xd0] sm:$0xff]
      %v1829 = vld [vmem:[%s1801 + $0xd8] sm:$0xff]
      %v1830 = vld [vmem:[%s1801 + $0xe0] sm:$0xff]
      %v1831 = vld [vmem:[%s1801 + $0xe8] sm:$0xff]
      %v1832 = vld [vmem:[%s1801 + $0xf0] sm:$0xff]
      %v1833 = vld [vmem:[%s1801 + $0xf8] sm:$0xff]
      %1834 = vmatprep.subr.mxu0 0.0
      %1835 = vmatpush1.msra.mxu0 %v1817
      %1836 = vmatprep.subr.mxu0 0.0
      %1837 = vmatpush1.msra.mxu0 %v1816
      %1838 = vmatprep.subr.mxu0 0.0
      %1839 = vmatpush1.msra.mxu0 %v1815
      %1840 = vmatprep.subr.mxu0 0.0
      %1841 = vmatpush1.msra.mxu0 %v1814
      %1842 = vmatprep.subr.mxu0 0.0
      %1843 = vmatpush1.msra.mxu0 %v1813
      %1844 = vmatprep.subr.mxu0 0.0
      %1845 = vmatpush1.msra.mxu0 %v1812
      %1846 = vmatprep.subr.mxu0 0.0
      %1847 = vmatpush1.msra.mxu0 %v1811
      %1848 = vmatprep.subr.mxu0 0.0
      %1849 = vmatpush1.msra.mxu0 %v1810
      %1850 = vmatprep.subr.mxu0 0.0
      %1851 = vmatpush1.msra.mxu0 %v1809
      %1852 = vmatprep.subr.mxu0 0.0
      %1853 = vmatpush1.msra.mxu0 %v1808
      %1854 = vmatprep.subr.mxu0 0.0
      %1855 = vmatpush1.msra.mxu0 %v1807
      %1856 = vmatprep.subr.mxu0 0.0
      %1857 = vmatpush1.msra.mxu0 %v1806
      %1858 = vmatprep.subr.mxu0 0.0
      %1859 = vmatpush1.msra.mxu0 %v1805
      %1860 = vmatprep.subr.mxu0 0.0
      %1861 = vmatpush1.msra.mxu0 %v1804
      %1862 = vmatprep.subr.mxu0 0.0
      %1863 = vmatpush1.msra.mxu0 %v1803
      %1864 = vmatprep.subr.mxu0 0.0
      %1865 = vmatpush1.msra.mxu0 %v1802
      %1866 = vmatprep.subr.mxu0 0.0
      %1867 = vmatpush2.msra.mxu0 %v1833
      %1868 = vmatprep.subr.mxu0 0.0
      %1869 = vmatpush2.msra.mxu0 %v1832
      %1870 = vmatprep.subr.mxu0 0.0
      %1871 = vmatpush2.msra.mxu0 %v1831
      %1872 = vmatprep.subr.mxu0 0.0
      %1873 = vmatpush2.msra.mxu0 %v1830
      %1874 = vmatprep.subr.mxu0 0.0
      %1875 = vmatpush2.msra.mxu0 %v1829
      %1876 = vmatprep.subr.mxu0 0.0
      %1877 = vmatpush2.msra.mxu0 %v1828
      %1878 = vmatprep.subr.mxu0 0.0
      %1879 = vmatpush2.msra.mxu0 %v1827
      %1880 = vmatprep.subr.mxu0 0.0
      %1881 = vmatpush2.msra.mxu0 %v1826
      %1882 = vmatprep.subr.mxu0 0.0
      %1883 = vmatpush2.msra.mxu0 %v1825
      %1884 = vmatprep.subr.mxu0 0.0
      %1885 = vmatpush2.msra.mxu0 %v1824
      %1886 = vmatprep.subr.mxu0 0.0
      %1887 = vmatpush2.msra.mxu0 %v1823
      %1888 = vmatprep.subr.mxu0 0.0
      %1889 = vmatpush2.msra.mxu0 %v1822
      %1890 = vmatprep.subr.mxu0 0.0
      %1891 = vmatpush2.msra.mxu0 %v1821
      %1892 = vmatprep.subr.mxu0 0.0
      %1893 = vmatpush2.msra.mxu0 %v1820
      %1894 = vmatprep.subr.mxu0 0.0
      %1895 = vmatpush2.msra.mxu0 %v1819
      %1896 = vmatprep.subr.mxu0 0.0
      %1897 = vmatpush2.msra.mxu0 %v1818
      %1898 = vmatprep.mubr.f32.mxu0 %v477
      %1899 = vmatmul.mubr.f32.gmra.mxu0 %v441
      %v1900 = vpop.f32.mrf.mxu0
      %v1901 = vadd.f32 0.0, %v1900
      %v1902 = vpop.f32.mrf.mxu0
      %1903 = vdwg.mxu0
      %s1904 = scalar_lea.vmem %s2, 112
      %v1905 = vld [vmem:[%s1904] sm:$0xff]
      %v1906 = vld [vmem:[%s1904 + $0x8] sm:$0xff]
      %v1908 = vsel %vm551, %v1905, 0
      %v1911 = vsel %vm551, %v1906, 0
      %v1914 = vsel %vm558, %v1901, 0
      %1916 = vmatprep.subr.mxu0 0.0
      %1917 = vmatpush1.msra.mxu0 0.0
      %1918 = vmatprep.subr.mxu0 0.0
      %1919 = vmatpush1.msra.mxu0 0.0
      %1920 = vmatprep.subr.mxu0 0.0
      %1921 = vmatpush1.msra.mxu0 0.0
      %1922 = vmatprep.subr.mxu0 0.0
      %1923 = vmatpush1.msra.mxu0 0.0
      %1924 = vmatprep.subr.mxu0 0.0
      %1925 = vmatpush1.msra.mxu0 0.0
      %1926 = vmatprep.subr.mxu0 0.0
      %1927 = vmatpush1.msra.mxu0 0.0
      %1928 = vmatprep.subr.mxu0 0.0
      %1929 = vmatpush1.msra.mxu0 0.0
      %1930 = vmatprep.subr.mxu0 0.0
      %1931 = vmatpush1.msra.mxu0 0.0
      %1932 = vmatprep.subr.mxu0 0.0
      %1933 = vmatpush1.msra.mxu0 0.0
      %1934 = vmatprep.subr.mxu0 0.0
      %1935 = vmatpush1.msra.mxu0 0.0
      %1936 = vmatprep.subr.mxu0 0.0
      %1937 = vmatpush1.msra.mxu0 0.0
      %1938 = vmatprep.subr.mxu0 0.0
      %1939 = vmatpush1.msra.mxu0 0.0
      %1940 = vmatprep.subr.mxu0 0.0
      %1941 = vmatpush1.msra.mxu0 0.0
      %1942 = vmatprep.subr.mxu0 0.0
      %1943 = vmatpush1.msra.mxu0 0.0
      %1944 = vmatprep.subr.mxu0 0.0
      %1945 = vmatpush1.msra.mxu0 0.0
      %1946 = vmatprep.subr.mxu0 0.0
      %1947 = vmatpush1.msra.mxu0 %v1914
      %1948 = vmatprep.subr.mxu0 0.0
      %1949 = vmatpush2.msra.mxu0 0.0
      %1950 = vmatprep.subr.mxu0 0.0
      %1951 = vmatpush2.msra.mxu0 0.0
      %1952 = vmatprep.subr.mxu0 0.0
      %1953 = vmatpush2.msra.mxu0 0.0
      %1954 = vmatprep.subr.mxu0 0.0
      %1955 = vmatpush2.msra.mxu0 0.0
      %1956 = vmatprep.subr.mxu0 0.0
      %1957 = vmatpush2.msra.mxu0 0.0
      %1958 = vmatprep.subr.mxu0 0.0
      %1959 = vmatpush2.msra.mxu0 0.0
      %1960 = vmatprep.subr.mxu0 0.0
      %1961 = vmatpush2.msra.mxu0 0.0
      %1962 = vmatprep.subr.mxu0 0.0
      %1963 = vmatpush2.msra.mxu0 0.0
      %1964 = vmatprep.subr.mxu0 0.0
      %1965 = vmatpush2.msra.mxu0 0.0
      %1966 = vmatprep.subr.mxu0 0.0
      %1967 = vmatpush2.msra.mxu0 0.0
      %1968 = vmatprep.subr.mxu0 0.0
      %1969 = vmatpush2.msra.mxu0 0.0
      %1970 = vmatprep.subr.mxu0 0.0
      %1971 = vmatpush2.msra.mxu0 0.0
      %1972 = vmatprep.subr.mxu0 0.0
      %1973 = vmatpush2.msra.mxu0 0.0
      %1974 = vmatprep.subr.mxu0 0.0
      %1975 = vmatpush2.msra.mxu0 0.0
      %1976 = vmatprep.subr.mxu0 0.0
      %1977 = vmatpush2.msra.mxu0 0.0
      %1978 = vmatprep.subr.mxu0 0.0
      %1979 = vmatpush2.msra.mxu0 0.0
      %1980 = vmatprep.mubr.f32.mxu0 0.0
      %1981 = vmatmul.mubr.f32.gmra.mxu0 %v1908
      %v1982 = vpop.f32.mrf.mxu0
      %v1983 = vadd.f32 0.0, %v1982
      %v1984 = vpop.f32.mrf.mxu0
      %1985 = vmatprep.mubr.f32.mxu0 0.0
      %1986 = vmatmul.mubr.f32.gmra.mxu0 %v1911
      %v1987 = vpop.f32.mrf.mxu0
      %v1988 = vadd.f32 0.0, %v1987
      %v1989 = vpop.f32.mrf.mxu0
      %1990 = vdwg.mxu0
      %v1991 = vadd.f32 %v1799, %v1983
      %v1992 = vadd.f32 %v1800, %v1988
      %s1993 = scalar_lea.vmem %s1, 2048
      %v1994 = vld [vmem:[%s1993] sm:$0xff]
      %v1995 = vld [vmem:[%s1993 + $0x8] sm:$0xff]
      %v1996 = vld [vmem:[%s1993 + $0x10] sm:$0xff]
      %v1997 = vld [vmem:[%s1993 + $0x18] sm:$0xff]
      %v1998 = vld [vmem:[%s1993 + $0x20] sm:$0xff]
      %v1999 = vld [vmem:[%s1993 + $0x28] sm:$0xff]
      %v2000 = vld [vmem:[%s1993 + $0x30] sm:$0xff]
      %v2001 = vld [vmem:[%s1993 + $0x38] sm:$0xff]
      %v2002 = vld [vmem:[%s1993 + $0x40] sm:$0xff]
      %v2003 = vld [vmem:[%s1993 + $0x48] sm:$0xff]
      %v2004 = vld [vmem:[%s1993 + $0x50] sm:$0xff]
      %v2005 = vld [vmem:[%s1993 + $0x58] sm:$0xff]
      %v2006 = vld [vmem:[%s1993 + $0x60] sm:$0xff]
      %v2007 = vld [vmem:[%s1993 + $0x68] sm:$0xff]
      %v2008 = vld [vmem:[%s1993 + $0x70] sm:$0xff]
      %v2009 = vld [vmem:[%s1993 + $0x78] sm:$0xff]
      %v2010 = vld [vmem:[%s1993 + $0x80] sm:$0xff]
      %v2011 = vld [vmem:[%s1993 + $0x88] sm:$0xff]
      %v2012 = vld [vmem:[%s1993 + $0x90] sm:$0xff]
      %v2013 = vld [vmem:[%s1993 + $0x98] sm:$0xff]
      %v2014 = vld [vmem:[%s1993 + $0xa0] sm:$0xff]
      %v2015 = vld [vmem:[%s1993 + $0xa8] sm:$0xff]
      %v2016 = vld [vmem:[%s1993 + $0xb0] sm:$0xff]
      %v2017 = vld [vmem:[%s1993 + $0xb8] sm:$0xff]
      %v2018 = vld [vmem:[%s1993 + $0xc0] sm:$0xff]
      %v2019 = vld [vmem:[%s1993 + $0xc8] sm:$0xff]
      %v2020 = vld [vmem:[%s1993 + $0xd0] sm:$0xff]
      %v2021 = vld [vmem:[%s1993 + $0xd8] sm:$0xff]
      %v2022 = vld [vmem:[%s1993 + $0xe0] sm:$0xff]
      %v2023 = vld [vmem:[%s1993 + $0xe8] sm:$0xff]
      %v2024 = vld [vmem:[%s1993 + $0xf0] sm:$0xff]
      %v2025 = vld [vmem:[%s1993 + $0xf8] sm:$0xff]
      %2026 = vmatprep.subr.mxu0 0.0
      %2027 = vmatpush1.msra.mxu0 %v2009
      %2028 = vmatprep.subr.mxu0 0.0
      %2029 = vmatpush1.msra.mxu0 %v2008
      %2030 = vmatprep.subr.mxu0 0.0
      %2031 = vmatpush1.msra.mxu0 %v2007
      %2032 = vmatprep.subr.mxu0 0.0
      %2033 = vmatpush1.msra.mxu0 %v2006
      %2034 = vmatprep.subr.mxu0 0.0
      %2035 = vmatpush1.msra.mxu0 %v2005
      %2036 = vmatprep.subr.mxu0 0.0
      %2037 = vmatpush1.msra.mxu0 %v2004
      %2038 = vmatprep.subr.mxu0 0.0
      %2039 = vmatpush1.msra.mxu0 %v2003
      %2040 = vmatprep.subr.mxu0 0.0
      %2041 = vmatpush1.msra.mxu0 %v2002
      %2042 = vmatprep.subr.mxu0 0.0
      %2043 = vmatpush1.msra.mxu0 %v2001
      %2044 = vmatprep.subr.mxu0 0.0
      %2045 = vmatpush1.msra.mxu0 %v2000
      %2046 = vmatprep.subr.mxu0 0.0
      %2047 = vmatpush1.msra.mxu0 %v1999
      %2048 = vmatprep.subr.mxu0 0.0
      %2049 = vmatpush1.msra.mxu0 %v1998
      %2050 = vmatprep.subr.mxu0 0.0
      %2051 = vmatpush1.msra.mxu0 %v1997
      %2052 = vmatprep.subr.mxu0 0.0
      %2053 = vmatpush1.msra.mxu0 %v1996
      %2054 = vmatprep.subr.mxu0 0.0
      %2055 = vmatpush1.msra.mxu0 %v1995
      %2056 = vmatprep.subr.mxu0 0.0
      %2057 = vmatpush1.msra.mxu0 %v1994
      %2058 = vmatprep.subr.mxu0 0.0
      %2059 = vmatpush2.msra.mxu0 %v2025
      %2060 = vmatprep.subr.mxu0 0.0
      %2061 = vmatpush2.msra.mxu0 %v2024
      %2062 = vmatprep.subr.mxu0 0.0
      %2063 = vmatpush2.msra.mxu0 %v2023
      %2064 = vmatprep.subr.mxu0 0.0
      %2065 = vmatpush2.msra.mxu0 %v2022
      %2066 = vmatprep.subr.mxu0 0.0
      %2067 = vmatpush2.msra.mxu0 %v2021
      %2068 = vmatprep.subr.mxu0 0.0
      %2069 = vmatpush2.msra.mxu0 %v2020
      %2070 = vmatprep.subr.mxu0 0.0
      %2071 = vmatpush2.msra.mxu0 %v2019
      %2072 = vmatprep.subr.mxu0 0.0
      %2073 = vmatpush2.msra.mxu0 %v2018
      %2074 = vmatprep.subr.mxu0 0.0
      %2075 = vmatpush2.msra.mxu0 %v2017
      %2076 = vmatprep.subr.mxu0 0.0
      %2077 = vmatpush2.msra.mxu0 %v2016
      %2078 = vmatprep.subr.mxu0 0.0
      %2079 = vmatpush2.msra.mxu0 %v2015
      %2080 = vmatprep.subr.mxu0 0.0
      %2081 = vmatpush2.msra.mxu0 %v2014
      %2082 = vmatprep.subr.mxu0 0.0
      %2083 = vmatpush2.msra.mxu0 %v2013
      %2084 = vmatprep.subr.mxu0 0.0
      %2085 = vmatpush2.msra.mxu0 %v2012
      %2086 = vmatprep.subr.mxu0 0.0
      %2087 = vmatpush2.msra.mxu0 %v2011
      %2088 = vmatprep.subr.mxu0 0.0
      %2089 = vmatpush2.msra.mxu0 %v2010
      %2090 = vmatprep.mubr.f32.mxu0 %v477
      %2091 = vmatmul.mubr.f32.gmra.mxu0 %v441
      %v2092 = vpop.f32.mrf.mxu0
      %v2093 = vadd.f32 0.0, %v2092
      %v2094 = vpop.f32.mrf.mxu0
      %2095 = vdwg.mxu0
      %s2096 = scalar_lea.vmem %s2, 128
      %v2097 = vld [vmem:[%s2096] sm:$0xff]
      %v2098 = vld [vmem:[%s2096 + $0x8] sm:$0xff]
      %v2100 = vsel %vm551, %v2097, 0
      %v2103 = vsel %vm551, %v2098, 0
      %v2106 = vsel %vm558, %v2093, 0
      %2108 = vmatprep.subr.mxu0 0.0
      %2109 = vmatpush1.msra.mxu0 0.0
      %2110 = vmatprep.subr.mxu0 0.0
      %2111 = vmatpush1.msra.mxu0 0.0
      %2112 = vmatprep.subr.mxu0 0.0
      %2113 = vmatpush1.msra.mxu0 0.0
      %2114 = vmatprep.subr.mxu0 0.0
      %2115 = vmatpush1.msra.mxu0 0.0
      %2116 = vmatprep.subr.mxu0 0.0
      %2117 = vmatpush1.msra.mxu0 0.0
      %2118 = vmatprep.subr.mxu0 0.0
      %2119 = vmatpush1.msra.mxu0 0.0
      %2120 = vmatprep.subr.mxu0 0.0
      %2121 = vmatpush1.msra.mxu0 0.0
      %2122 = vmatprep.subr.mxu0 0.0
      %2123 = vmatpush1.msra.mxu0 0.0
      %2124 = vmatprep.subr.mxu0 0.0
      %2125 = vmatpush1.msra.mxu0 0.0
      %2126 = vmatprep.subr.mxu0 0.0
      %2127 = vmatpush1.msra.mxu0 0.0
      %2128 = vmatprep.subr.mxu0 0.0
      %2129 = vmatpush1.msra.mxu0 0.0
      %2130 = vmatprep.subr.mxu0 0.0
      %2131 = vmatpush1.msra.mxu0 0.0
      %2132 = vmatprep.subr.mxu0 0.0
      %2133 = vmatpush1.msra.mxu0 0.0
      %2134 = vmatprep.subr.mxu0 0.0
      %2135 = vmatpush1.msra.mxu0 0.0
      %2136 = vmatprep.subr.mxu0 0.0
      %2137 = vmatpush1.msra.mxu0 0.0
      %2138 = vmatprep.subr.mxu0 0.0
      %2139 = vmatpush1.msra.mxu0 %v2106
      %2140 = vmatprep.subr.mxu0 0.0
      %2141 = vmatpush2.msra.mxu0 0.0
      %2142 = vmatprep.subr.mxu0 0.0
      %2143 = vmatpush2.msra.mxu0 0.0
      %2144 = vmatprep.subr.mxu0 0.0
      %2145 = vmatpush2.msra.mxu0 0.0
      %2146 = vmatprep.subr.mxu0 0.0
      %2147 = vmatpush2.msra.mxu0 0.0
      %2148 = vmatprep.subr.mxu0 0.0
      %2149 = vmatpush2.msra.mxu0 0.0
      %2150 = vmatprep.subr.mxu0 0.0
      %2151 = vmatpush2.msra.mxu0 0.0
      %2152 = vmatprep.subr.mxu0 0.0
      %2153 = vmatpush2.msra.mxu0 0.0
      %2154 = vmatprep.subr.mxu0 0.0
      %2155 = vmatpush2.msra.mxu0 0.0
      %2156 = vmatprep.subr.mxu0 0.0
      %2157 = vmatpush2.msra.mxu0 0.0
      %2158 = vmatprep.subr.mxu0 0.0
      %2159 = vmatpush2.msra.mxu0 0.0
      %2160 = vmatprep.subr.mxu0 0.0
      %2161 = vmatpush2.msra.mxu0 0.0
      %2162 = vmatprep.subr.mxu0 0.0
      %2163 = vmatpush2.msra.mxu0 0.0
      %2164 = vmatprep.subr.mxu0 0.0
      %2165 = vmatpush2.msra.mxu0 0.0
      %2166 = vmatprep.subr.mxu0 0.0
      %2167 = vmatpush2.msra.mxu0 0.0
      %2168 = vmatprep.subr.mxu0 0.0
      %2169 = vmatpush2.msra.mxu0 0.0
      %2170 = vmatprep.subr.mxu0 0.0
      %2171 = vmatpush2.msra.mxu0 0.0
      %2172 = vmatprep.mubr.f32.mxu0 0.0
      %2173 = vmatmul.mubr.f32.gmra.mxu0 %v2100
      %v2174 = vpop.f32.mrf.mxu0
      %v2175 = vadd.f32 0.0, %v2174
      %v2176 = vpop.f32.mrf.mxu0
      %2177 = vmatprep.mubr.f32.mxu0 0.0
      %2178 = vmatmul.mubr.f32.gmra.mxu0 %v2103
      %v2179 = vpop.f32.mrf.mxu0
      %v2180 = vadd.f32 0.0, %v2179
      %v2181 = vpop.f32.mrf.mxu0
      %2182 = vdwg.mxu0
      %v2183 = vadd.f32 %v1991, %v2175
      %v2184 = vadd.f32 %v1992, %v2180
      %v2185 = vmax.f32 %v2183, 0.0
      %v2186 = vmax.f32 %v2184, 0.0
      %v2187 = vld [vmem:[%s6] sm:$0xff]
      %v2188 = vld [vmem:[%s6 + $0x8] sm:$0xff]
      %v2189 = vld [vmem:[%s6 + $0x10] sm:$0xff]
      %v2190 = vld [vmem:[%s6 + $0x18] sm:$0xff]
      %v2191 = vld [vmem:[%s4] sm:$0xff]
      %v2192 = vld [vmem:[%s4 + $0x8] sm:$0xff]
      %v2193 = vld [vmem:[%s4 + $0x10] sm:$0xff]
      %v2194 = vld [vmem:[%s4 + $0x18] sm:$0xff]
      %v2195 = vld [vmem:[%s4 + $0x20] sm:$0xff]
      %v2196 = vld [vmem:[%s4 + $0x28] sm:$0xff]
      %v2197 = vld [vmem:[%s4 + $0x30] sm:$0xff]
      %v2198 = vld [vmem:[%s4 + $0x38] sm:$0xff]
      %vm2199 = vcmask 523264
      %v2201 = vsel %vm2199, %v2185, 0
      %v2204 = vsel %vm2199, %v2186, 0
      %2206 = vmatprep.subr.mxu0 0.0
      %2207 = vmatpush1.msra.mxu0 0.0
      %2208 = vmatprep.subr.mxu0 0.0
      %2209 = vmatpush1.msra.mxu0 0.0
      %2210 = vmatprep.subr.mxu0 0.0
      %2211 = vmatpush1.msra.mxu0 0.0
      %2212 = vmatprep.subr.mxu0 0.0
      %2213 = vmatpush1.msra.mxu0 0.0
      %2214 = vmatprep.subr.mxu0 0.0
      %2215 = vmatpush1.msra.mxu0 0.0
      %2216 = vmatprep.subr.mxu0 0.0
      %2217 = vmatpush1.msra.mxu0 0.0
      %2218 = vmatprep.subr.mxu0 0.0
      %2219 = vmatpush1.msra.mxu0 0.0
      %2220 = vmatprep.subr.mxu0 0.0
      %2221 = vmatpush1.msra.mxu0 0.0
      %2222 = vmatprep.subr.mxu0 0.0
      %2223 = vmatpush1.msra.mxu0 %v2198
      %2224 = vmatprep.subr.mxu0 0.0
      %2225 = vmatpush1.msra.mxu0 %v2197
      %2226 = vmatprep.subr.mxu0 0.0
      %2227 = vmatpush1.msra.mxu0 %v2196
      %2228 = vmatprep.subr.mxu0 0.0
      %2229 = vmatpush1.msra.mxu0 %v2195
      %2230 = vmatprep.subr.mxu0 0.0
      %2231 = vmatpush1.msra.mxu0 %v2194
      %2232 = vmatprep.subr.mxu0 0.0
      %2233 = vmatpush1.msra.mxu0 %v2193
      %2234 = vmatprep.subr.mxu0 0.0
      %2235 = vmatpush1.msra.mxu0 %v2192
      %2236 = vmatprep.subr.mxu0 0.0
      %2237 = vmatpush1.msra.mxu0 %v2191
      %2238 = vmatprep.subr.mxu0 0.0
      %2239 = vmatpush2.msra.mxu0 0.0
      %2240 = vmatprep.subr.mxu0 0.0
      %2241 = vmatpush2.msra.mxu0 0.0
      %2242 = vmatprep.subr.mxu0 0.0
      %2243 = vmatpush2.msra.mxu0 0.0
      %2244 = vmatprep.subr.mxu0 0.0
      %2245 = vmatpush2.msra.mxu0 0.0
      %2246 = vmatprep.subr.mxu0 0.0
      %2247 = vmatpush2.msra.mxu0 0.0
      %2248 = vmatprep.subr.mxu0 0.0
      %2249 = vmatpush2.msra.mxu0 0.0
      %2250 = vmatprep.subr.mxu0 0.0
      %2251 = vmatpush2.msra.mxu0 0.0
      %2252 = vmatprep.subr.mxu0 0.0
      %2253 = vmatpush2.msra.mxu0 0.0
      %2254 = vmatprep.subr.mxu0 0.0
      %2255 = vmatpush2.msra.mxu0 0.0
      %2256 = vmatprep.subr.mxu0 0.0
      %2257 = vmatpush2.msra.mxu0 0.0
      %2258 = vmatprep.subr.mxu0 0.0
      %2259 = vmatpush2.msra.mxu0 0.0
      %2260 = vmatprep.subr.mxu0 0.0
      %2261 = vmatpush2.msra.mxu0 0.0
      %2262 = vmatprep.subr.mxu0 0.0
      %2263 = vmatpush2.msra.mxu0 0.0
      %2264 = vmatprep.subr.mxu0 0.0
      %2265 = vmatpush2.msra.mxu0 0.0
      %2266 = vmatprep.subr.mxu0 0.0
      %2267 = vmatpush2.msra.mxu0 0.0
      %2268 = vmatprep.subr.mxu0 0.0
      %2269 = vmatpush2.msra.mxu0 0.0
      %2270 = vmatprep.mubr.f32.mxu0 0.0
      %2271 = vmatmul.mubr.f32.gmra.mxu0 %v2201
      %v2272 = vpop.f32.mrf.mxu0
      %v2273 = vadd.f32 0.0, %v2272
      %v2274 = vpop.f32.mrf.mxu0
      %2275 = vmatprep.mubr.f32.mxu0 0.0
      %2276 = vmatmul.mubr.f32.gmra.mxu0 %v2204
      %v2277 = vpop.f32.mrf.mxu0
      %v2278 = vadd.f32 0.0, %v2277
      %v2279 = vpop.f32.mrf.mxu0
      %2280 = vdwg.mxu0
      %v2281 = vld [vmem:[%s5] sm:$0xff]
      %v2282 = vld [vmem:[%s5 + $0x8] sm:$0xff]
      %v2283 = vld [vmem:[%s5 + $0x10] sm:$0xff]
      %v2284 = vld [vmem:[%s5 + $0x18] sm:$0xff]
      %vm2285 = vcmask 130048
      %v2287 = vsel %vm2285, %v2281, 0
      %v2290 = vsel %vm2285, %v2282, 0
      %v2293 = vsel %vm2285, %v2283, 0
      %v2296 = vsel %vm2285, %v2284, 0
      %2298 = vmatprep.subr.mxu0 0.0
      %2299 = vmatpush1.msra.mxu0 0.0
      %2300 = vmatprep.subr.mxu0 0.0
      %2301 = vmatpush1.msra.mxu0 0.0
      %2302 = vmatprep.subr.mxu0 0.0
      %2303 = vmatpush1.msra.mxu0 0.0
      %2304 = vmatprep.subr.mxu0 0.0
      %2305 = vmatpush1.msra.mxu0 0.0
      %2306 = vmatprep.subr.mxu0 0.0
      %2307 = vmatpush1.msra.mxu0 0.0
      %2308 = vmatprep.subr.mxu0 0.0
      %2309 = vmatpush1.msra.mxu0 0.0
      %2310 = vmatprep.subr.mxu0 0.0
      %2311 = vmatpush1.msra.mxu0 0.0
      %2312 = vmatprep.subr.mxu0 0.0
      %2313 = vmatpush1.msra.mxu0 0.0
      %2314 = vmatprep.subr.mxu0 0.0
      %2315 = vmatpush1.msra.mxu0 0.0
      %2316 = vmatprep.subr.mxu0 0.0
      %2317 = vmatpush1.msra.mxu0 0.0
      %2318 = vmatprep.subr.mxu0 0.0
      %2319 = vmatpush1.msra.mxu0 0.0
      %2320 = vmatprep.subr.mxu0 0.0
      %2321 = vmatpush1.msra.mxu0 0.0
      %2322 = vmatprep.subr.mxu0 0.0
      %2323 = vmatpush1.msra.mxu0 0.0
      %2324 = vmatprep.subr.mxu0 0.0
      %2325 = vmatpush1.msra.mxu0 0.0
      %2326 = vmatprep.subr.mxu0 0.0
      %2327 = vmatpush1.msra.mxu0 %v2278
      %2328 = vmatprep.subr.mxu0 0.0
      %2329 = vmatpush1.msra.mxu0 %v2273
      %2330 = vmatprep.subr.mxu0 0.0
      %2331 = vmatpush2.msra.mxu0 0.0
      %2332 = vmatprep.subr.mxu0 0.0
      %2333 = vmatpush2.msra.mxu0 0.0
      %2334 = vmatprep.subr.mxu0 0.0
      %2335 = vmatpush2.msra.mxu0 0.0
      %2336 = vmatprep.subr.mxu0 0.0
      %2337 = vmatpush2.msra.mxu0 0.0
      %2338 = vmatprep.subr.mxu0 0.0
      %2339 = vmatpush2.msra.mxu0 0.0
      %2340 = vmatprep.subr.mxu0 0.0
      %2341 = vmatpush2.msra.mxu0 0.0
      %2342 = vmatprep.subr.mxu0 0.0
      %2343 = vmatpush2.msra.mxu0 0.0
      %2344 = vmatprep.subr.mxu0 0.0
      %2345 = vmatpush2.msra.mxu0 0.0
      %2346 = vmatprep.subr.mxu0 0.0
      %2347 = vmatpush2.msra.mxu0 0.0
      %2348 = vmatprep.subr.mxu0 0.0
      %2349 = vmatpush2.msra.mxu0 0.0
      %2350 = vmatprep.subr.mxu0 0.0
      %2351 = vmatpush2.msra.mxu0 0.0
      %2352 = vmatprep.subr.mxu0 0.0
      %2353 = vmatpush2.msra.mxu0 0.0
      %2354 = vmatprep.subr.mxu0 0.0
      %2355 = vmatpush2.msra.mxu0 0.0
      %2356 = vmatprep.subr.mxu0 0.0
      %2357 = vmatpush2.msra.mxu0 0.0
      %2358 = vmatprep.subr.mxu0 0.0
      %2359 = vmatpush2.msra.mxu0 0.0
      %2360 = vmatprep.subr.mxu0 0.0
      %2361 = vmatpush2.msra.mxu0 0.0
      %2362 = vmatprep.mubr.f32.mxu0 0.0
      %2363 = vmatmul.mubr.f32.gmra.mxu0 %v2287
      %v2364 = vpop.f32.mrf.mxu0
      %v2365 = vadd.f32 0.0, %v2364
      %v2366 = vpop.f32.mrf.mxu0
      %2367 = vmatprep.mubr.f32.mxu0 0.0
      %2368 = vmatmul.mubr.f32.gmra.mxu0 %v2290
      %v2369 = vpop.f32.mrf.mxu0
      %v2370 = vadd.f32 0.0, %v2369
      %v2371 = vpop.f32.mrf.mxu0
      %2372 = vmatprep.mubr.f32.mxu0 0.0
      %2373 = vmatmul.mubr.f32.gmra.mxu0 %v2293
      %v2374 = vpop.f32.mrf.mxu0
      %v2375 = vadd.f32 0.0, %v2374
      %v2376 = vpop.f32.mrf.mxu0
      %2377 = vmatprep.mubr.f32.mxu0 0.0
      %2378 = vmatmul.mubr.f32.gmra.mxu0 %v2296
      %v2379 = vpop.f32.mrf.mxu0
      %v2380 = vadd.f32 0.0, %v2379
      %v2381 = vpop.f32.mrf.mxu0
      %2382 = vdwg.mxu0
      %2384 = vset.pattern.permute.xlu0 0
      %2385 = vperm.xlu0 %2384, %v2187
      %v2386 = vpop.permute.xlu0 %2385
      %2389 = vset.pattern.permute.xlu0 0
      %2390 = vperm.xlu0 %2389, %v2188
      %v2391 = vpop.permute.xlu0 %2390
      %2394 = vset.pattern.permute.xlu0 0
      %2395 = vperm.xlu0 %2394, %v2189
      %v2396 = vpop.permute.xlu0 %2395
      %2399 = vset.pattern.permute.xlu0 0
      %2400 = vperm.xlu0 %2399, %v2190
      %v2401 = vpop.permute.xlu0 %2400
      %v2403 = vadd.f32 %v2386, %v2365
      %v2404 = vadd.f32 %v2391, %v2370
      %v2405 = vadd.f32 %v2396, %v2375
      %v2406 = vadd.f32 %v2401, %v2380
      %s2407 = scalar_lea.vmem %s4, 64
      %v2408 = vld [vmem:[%s2407] sm:$0xff]
      %v2409 = vld [vmem:[%s2407 + $0x8] sm:$0xff]
      %v2410 = vld [vmem:[%s2407 + $0x10] sm:$0xff]
      %v2411 = vld [vmem:[%s2407 + $0x18] sm:$0xff]
      %v2412 = vld [vmem:[%s2407 + $0x20] sm:$0xff]
      %v2413 = vld [vmem:[%s2407 + $0x28] sm:$0xff]
      %v2414 = vld [vmem:[%s2407 + $0x30] sm:$0xff]
      %v2415 = vld [vmem:[%s2407 + $0x38] sm:$0xff]
      %2416 = vmatprep.subr.mxu0 0.0
      %2417 = vmatpush1.msra.mxu0 0.0
      %2418 = vmatprep.subr.mxu0 0.0
      %2419 = vmatpush1.msra.mxu0 0.0
      %2420 = vmatprep.subr.mxu0 0.0
      %2421 = vmatpush1.msra.mxu0 0.0
      %2422 = vmatprep.subr.mxu0 0.0
      %2423 = vmatpush1.msra.mxu0 0.0
      %2424 = vmatprep.subr.mxu0 0.0
      %2425 = vmatpush1.msra.mxu0 0.0
      %2426 = vmatprep.subr.mxu0 0.0
      %2427 = vmatpush1.msra.mxu0 0.0
      %2428 = vmatprep.subr.mxu0 0.0
      %2429 = vmatpush1.msra.mxu0 0.0
      %2430 = vmatprep.subr.mxu0 0.0
      %2431 = vmatpush1.msra.mxu0 0.0
      %2432 = vmatprep.subr.mxu0 0.0
      %2433 = vmatpush1.msra.mxu0 %v2415
      %2434 = vmatprep.subr.mxu0 0.0
      %2435 = vmatpush1.msra.mxu0 %v2414
      %2436 = vmatprep.subr.mxu0 0.0
      %2437 = vmatpush1.msra.mxu0 %v2413
      %2438 = vmatprep.subr.mxu0 0.0
      %2439 = vmatpush1.msra.mxu0 %v2412
      %2440 = vmatprep.subr.mxu0 0.0
      %2441 = vmatpush1.msra.mxu0 %v2411
      %2442 = vmatprep.subr.mxu0 0.0
      %2443 = vmatpush1.msra.mxu0 %v2410
      %2444 = vmatprep.subr.mxu0 0.0
      %2445 = vmatpush1.msra.mxu0 %v2409
      %2446 = vmatprep.subr.mxu0 0.0
      %2447 = vmatpush1.msra.mxu0 %v2408
      %2448 = vmatprep.subr.mxu0 0.0
      %2449 = vmatpush2.msra.mxu0 0.0
      %2450 = vmatprep.subr.mxu0 0.0
      %2451 = vmatpush2.msra.mxu0 0.0
      %2452 = vmatprep.subr.mxu0 0.0
      %2453 = vmatpush2.msra.mxu0 0.0
      %2454 = vmatprep.subr.mxu0 0.0
      %2455 = vmatpush2.msra.mxu0 0.0
      %2456 = vmatprep.subr.mxu0 0.0
      %2457 = vmatpush2.msra.mxu0 0.0
      %2458 = vmatprep.subr.mxu0 0.0
      %2459 = vmatpush2.msra.mxu0 0.0
      %2460 = vmatprep.subr.mxu0 0.0
      %2461 = vmatpush2.msra.mxu0 0.0
      %2462 = vmatprep.subr.mxu0 0.0
      %2463 = vmatpush2.msra.mxu0 0.0
      %2464 = vmatprep.subr.mxu0 0.0
      %2465 = vmatpush2.msra.mxu0 0.0
      %2466 = vmatprep.subr.mxu0 0.0
      %2467 = vmatpush2.msra.mxu0 0.0
      %2468 = vmatprep.subr.mxu0 0.0
      %2469 = vmatpush2.msra.mxu0 0.0
      %2470 = vmatprep.subr.mxu0 0.0
      %2471 = vmatpush2.msra.mxu0 0.0
      %2472 = vmatprep.subr.mxu0 0.0
      %2473 = vmatpush2.msra.mxu0 0.0
      %2474 = vmatprep.subr.mxu0 0.0
      %2475 = vmatpush2.msra.mxu0 0.0
      %2476 = vmatprep.subr.mxu0 0.0
      %2477 = vmatpush2.msra.mxu0 0.0
      %2478 = vmatprep.subr.mxu0 0.0
      %2479 = vmatpush2.msra.mxu0 0.0
      %2480 = vmatprep.mubr.f32.mxu0 0.0
      %2481 = vmatmul.mubr.f32.gmra.mxu0 %v2201
      %v2482 = vpop.f32.mrf.mxu0
      %v2483 = vadd.f32 0.0, %v2482
      %v2484 = vpop.f32.mrf.mxu0
      %2485 = vmatprep.mubr.f32.mxu0 0.0
      %2486 = vmatmul.mubr.f32.gmra.mxu0 %v2204
      %v2487 = vpop.f32.mrf.mxu0
      %v2488 = vadd.f32 0.0, %v2487
      %v2489 = vpop.f32.mrf.mxu0
      %2490 = vdwg.mxu0
      %s2491 = scalar_lea.vmem %s5, 32
      %v2492 = vld [vmem:[%s2491] sm:$0xff]
      %v2493 = vld [vmem:[%s2491 + $0x8] sm:$0xff]
      %v2494 = vld [vmem:[%s2491 + $0x10] sm:$0xff]
      %v2495 = vld [vmem:[%s2491 + $0x18] sm:$0xff]
      %v2497 = vsel %vm2285, %v2492, 0
      %v2500 = vsel %vm2285, %v2493, 0
      %v2503 = vsel %vm2285, %v2494, 0
      %v2506 = vsel %vm2285, %v2495, 0
      %2508 = vmatprep.subr.mxu0 0.0
      %2509 = vmatpush1.msra.mxu0 0.0
      %2510 = vmatprep.subr.mxu0 0.0
      %2511 = vmatpush1.msra.mxu0 0.0
      %2512 = vmatprep.subr.mxu0 0.0
      %2513 = vmatpush1.msra.mxu0 0.0
      %2514 = vmatprep.subr.mxu0 0.0
      %2515 = vmatpush1.msra.mxu0 0.0
      %2516 = vmatprep.subr.mxu0 0.0
      %2517 = vmatpush1.msra.mxu0 0.0
      %2518 = vmatprep.subr.mxu0 0.0
      %2519 = vmatpush1.msra.mxu0 0.0
      %2520 = vmatprep.subr.mxu0 0.0
      %2521 = vmatpush1.msra.mxu0 0.0
      %2522 = vmatprep.subr.mxu0 0.0
      %2523 = vmatpush1.msra.mxu0 0.0
      %2524 = vmatprep.subr.mxu0 0.0
      %2525 = vmatpush1.msra.mxu0 0.0
      %2526 = vmatprep.subr.mxu0 0.0
      %2527 = vmatpush1.msra.mxu0 0.0
      %2528 = vmatprep.subr.mxu0 0.0
      %2529 = vmatpush1.msra.mxu0 0.0
      %2530 = vmatprep.subr.mxu0 0.0
      %2531 = vmatpush1.msra.mxu0 0.0
      %2532 = vmatprep.subr.mxu0 0.0
      %2533 = vmatpush1.msra.mxu0 0.0
      %2534 = vmatprep.subr.mxu0 0.0
      %2535 = vmatpush1.msra.mxu0 0.0
      %2536 = vmatprep.subr.mxu0 0.0
      %2537 = vmatpush1.msra.mxu0 %v2488
      %2538 = vmatprep.subr.mxu0 0.0
      %2539 = vmatpush1.msra.mxu0 %v2483
      %2540 = vmatprep.subr.mxu0 0.0
      %2541 = vmatpush2.msra.mxu0 0.0
      %2542 = vmatprep.subr.mxu0 0.0
      %2543 = vmatpush2.msra.mxu0 0.0
      %2544 = vmatprep.subr.mxu0 0.0
      %2545 = vmatpush2.msra.mxu0 0.0
      %2546 = vmatprep.subr.mxu0 0.0
      %2547 = vmatpush2.msra.mxu0 0.0
      %2548 = vmatprep.subr.mxu0 0.0
      %2549 = vmatpush2.msra.mxu0 0.0
      %2550 = vmatprep.subr.mxu0 0.0
      %2551 = vmatpush2.msra.mxu0 0.0
      %2552 = vmatprep.subr.mxu0 0.0
      %2553 = vmatpush2.msra.mxu0 0.0
      %2554 = vmatprep.subr.mxu0 0.0
      %2555 = vmatpush2.msra.mxu0 0.0
      %2556 = vmatprep.subr.mxu0 0.0
      %2557 = vmatpush2.msra.mxu0 0.0
      %2558 = vmatprep.subr.mxu0 0.0
      %2559 = vmatpush2.msra.mxu0 0.0
      %2560 = vmatprep.subr.mxu0 0.0
      %2561 = vmatpush2.msra.mxu0 0.0
      %2562 = vmatprep.subr.mxu0 0.0
      %2563 = vmatpush2.msra.mxu0 0.0
      %2564 = vmatprep.subr.mxu0 0.0
      %2565 = vmatpush2.msra.mxu0 0.0
      %2566 = vmatprep.subr.mxu0 0.0
      %2567 = vmatpush2.msra.mxu0 0.0
      %2568 = vmatprep.subr.mxu0 0.0
      %2569 = vmatpush2.msra.mxu0 0.0
      %2570 = vmatprep.subr.mxu0 0.0
      %2571 = vmatpush2.msra.mxu0 0.0
      %2572 = vmatprep.mubr.f32.mxu0 0.0
      %2573 = vmatmul.mubr.f32.gmra.mxu0 %v2497
      %v2574 = vpop.f32.mrf.mxu0
      %v2575 = vadd.f32 0.0, %v2574
      %v2576 = vpop.f32.mrf.mxu0
      %2577 = vmatprep.mubr.f32.mxu0 0.0
      %2578 = vmatmul.mubr.f32.gmra.mxu0 %v2500
      %v2579 = vpop.f32.mrf.mxu0
      %v2580 = vadd.f32 0.0, %v2579
      %v2581 = vpop.f32.mrf.mxu0
      %2582 = vmatprep.mubr.f32.mxu0 0.0
      %2583 = vmatmul.mubr.f32.gmra.mxu0 %v2503
      %v2584 = vpop.f32.mrf.mxu0
      %v2585 = vadd.f32 0.0, %v2584
      %v2586 = vpop.f32.mrf.mxu0
      %2587 = vmatprep.mubr.f32.mxu0 0.0
      %2588 = vmatmul.mubr.f32.gmra.mxu0 %v2506
      %v2589 = vpop.f32.mrf.mxu0
      %v2590 = vadd.f32 0.0, %v2589
      %v2591 = vpop.f32.mrf.mxu0
      %2592 = vdwg.mxu0
      %v2593 = vadd.f32 %v2403, %v2575
      %v2594 = vadd.f32 %v2404, %v2580
      %v2595 = vadd.f32 %v2405, %v2585
      %v2596 = vadd.f32 %v2406, %v2590
      %s2597 = scalar_lea.vmem %s4, 128
      %v2598 = vld [vmem:[%s2597] sm:$0xff]
      %v2599 = vld [vmem:[%s2597 + $0x8] sm:$0xff]
      %v2600 = vld [vmem:[%s2597 + $0x10] sm:$0xff]
      %v2601 = vld [vmem:[%s2597 + $0x18] sm:$0xff]
      %v2602 = vld [vmem:[%s2597 + $0x20] sm:$0xff]
      %v2603 = vld [vmem:[%s2597 + $0x28] sm:$0xff]
      %v2604 = vld [vmem:[%s2597 + $0x30] sm:$0xff]
      %v2605 = vld [vmem:[%s2597 + $0x38] sm:$0xff]
      %2606 = vmatprep.subr.mxu0 0.0
      %2607 = vmatpush1.msra.mxu0 0.0
      %2608 = vmatprep.subr.mxu0 0.0
      %2609 = vmatpush1.msra.mxu0 0.0
      %2610 = vmatprep.subr.mxu0 0.0
      %2611 = vmatpush1.msra.mxu0 0.0
      %2612 = vmatprep.subr.mxu0 0.0
      %2613 = vmatpush1.msra.mxu0 0.0
      %2614 = vmatprep.subr.mxu0 0.0
      %2615 = vmatpush1.msra.mxu0 0.0
      %2616 = vmatprep.subr.mxu0 0.0
      %2617 = vmatpush1.msra.mxu0 0.0
      %2618 = vmatprep.subr.mxu0 0.0
      %2619 = vmatpush1.msra.mxu0 0.0
      %2620 = vmatprep.subr.mxu0 0.0
      %2621 = vmatpush1.msra.mxu0 0.0
      %2622 = vmatprep.subr.mxu0 0.0
      %2623 = vmatpush1.msra.mxu0 %v2605
      %2624 = vmatprep.subr.mxu0 0.0
      %2625 = vmatpush1.msra.mxu0 %v2604
      %2626 = vmatprep.subr.mxu0 0.0
      %2627 = vmatpush1.msra.mxu0 %v2603
      %2628 = vmatprep.subr.mxu0 0.0
      %2629 = vmatpush1.msra.mxu0 %v2602
      %2630 = vmatprep.subr.mxu0 0.0
      %2631 = vmatpush1.msra.mxu0 %v2601
      %2632 = vmatprep.subr.mxu0 0.0
      %2633 = vmatpush1.msra.mxu0 %v2600
      %2634 = vmatprep.subr.mxu0 0.0
      %2635 = vmatpush1.msra.mxu0 %v2599
      %2636 = vmatprep.subr.mxu0 0.0
      %2637 = vmatpush1.msra.mxu0 %v2598
      %2638 = vmatprep.subr.mxu0 0.0
      %2639 = vmatpush2.msra.mxu0 0.0
      %2640 = vmatprep.subr.mxu0 0.0
      %2641 = vmatpush2.msra.mxu0 0.0
      %2642 = vmatprep.subr.mxu0 0.0
      %2643 = vmatpush2.msra.mxu0 0.0
      %2644 = vmatprep.subr.mxu0 0.0
      %2645 = vmatpush2.msra.mxu0 0.0
      %2646 = vmatprep.subr.mxu0 0.0
      %2647 = vmatpush2.msra.mxu0 0.0
      %2648 = vmatprep.subr.mxu0 0.0
      %2649 = vmatpush2.msra.mxu0 0.0
      %2650 = vmatprep.subr.mxu0 0.0
      %2651 = vmatpush2.msra.mxu0 0.0
      %2652 = vmatprep.subr.mxu0 0.0
      %2653 = vmatpush2.msra.mxu0 0.0
      %2654 = vmatprep.subr.mxu0 0.0
      %2655 = vmatpush2.msra.mxu0 0.0
      %2656 = vmatprep.subr.mxu0 0.0
      %2657 = vmatpush2.msra.mxu0 0.0
      %2658 = vmatprep.subr.mxu0 0.0
      %2659 = vmatpush2.msra.mxu0 0.0
      %2660 = vmatprep.subr.mxu0 0.0
      %2661 = vmatpush2.msra.mxu0 0.0
      %2662 = vmatprep.subr.mxu0 0.0
      %2663 = vmatpush2.msra.mxu0 0.0
      %2664 = vmatprep.subr.mxu0 0.0
      %2665 = vmatpush2.msra.mxu0 0.0
      %2666 = vmatprep.subr.mxu0 0.0
      %2667 = vmatpush2.msra.mxu0 0.0
      %2668 = vmatprep.subr.mxu0 0.0
      %2669 = vmatpush2.msra.mxu0 0.0
      %2670 = vmatprep.mubr.f32.mxu0 0.0
      %2671 = vmatmul.mubr.f32.gmra.mxu0 %v2201
      %v2672 = vpop.f32.mrf.mxu0
      %v2673 = vadd.f32 0.0, %v2672
      %v2674 = vpop.f32.mrf.mxu0
      %2675 = vmatprep.mubr.f32.mxu0 0.0
      %2676 = vmatmul.mubr.f32.gmra.mxu0 %v2204
      %v2677 = vpop.f32.mrf.mxu0
      %v2678 = vadd.f32 0.0, %v2677
      %v2679 = vpop.f32.mrf.mxu0
      %2680 = vdwg.mxu0
      %s2681 = scalar_lea.vmem %s5, 64
      %v2682 = vld [vmem:[%s2681] sm:$0xff]
      %v2683 = vld [vmem:[%s2681 + $0x8] sm:$0xff]
      %v2684 = vld [vmem:[%s2681 + $0x10] sm:$0xff]
      %v2685 = vld [vmem:[%s2681 + $0x18] sm:$0xff]
      %v2687 = vsel %vm2285, %v2682, 0
      %v2690 = vsel %vm2285, %v2683, 0
      %v2693 = vsel %vm2285, %v2684, 0
      %v2696 = vsel %vm2285, %v2685, 0
      %2698 = vmatprep.subr.mxu0 0.0
      %2699 = vmatpush1.msra.mxu0 0.0
      %2700 = vmatprep.subr.mxu0 0.0
      %2701 = vmatpush1.msra.mxu0 0.0
      %2702 = vmatprep.subr.mxu0 0.0
      %2703 = vmatpush1.msra.mxu0 0.0
      %2704 = vmatprep.subr.mxu0 0.0
      %2705 = vmatpush1.msra.mxu0 0.0
      %2706 = vmatprep.subr.mxu0 0.0
      %2707 = vmatpush1.msra.mxu0 0.0
      %2708 = vmatprep.subr.mxu0 0.0
      %2709 = vmatpush1.msra.mxu0 0.0
      %2710 = vmatprep.subr.mxu0 0.0
      %2711 = vmatpush1.msra.mxu0 0.0
      %2712 = vmatprep.subr.mxu0 0.0
      %2713 = vmatpush1.msra.mxu0 0.0
      %2714 = vmatprep.subr.mxu0 0.0
      %2715 = vmatpush1.msra.mxu0 0.0
      %2716 = vmatprep.subr.mxu0 0.0
      %2717 = vmatpush1.msra.mxu0 0.0
      %2718 = vmatprep.subr.mxu0 0.0
      %2719 = vmatpush1.msra.mxu0 0.0
      %2720 = vmatprep.subr.mxu0 0.0
      %2721 = vmatpush1.msra.mxu0 0.0
      %2722 = vmatprep.subr.mxu0 0.0
      %2723 = vmatpush1.msra.mxu0 0.0
      %2724 = vmatprep.subr.mxu0 0.0
      %2725 = vmatpush1.msra.mxu0 0.0
      %2726 = vmatprep.subr.mxu0 0.0
      %2727 = vmatpush1.msra.mxu0 %v2678
      %2728 = vmatprep.subr.mxu0 0.0
      %2729 = vmatpush1.msra.mxu0 %v2673
      %2730 = vmatprep.subr.mxu0 0.0
      %2731 = vmatpush2.msra.mxu0 0.0
      %2732 = vmatprep.subr.mxu0 0.0
      %2733 = vmatpush2.msra.mxu0 0.0
      %2734 = vmatprep.subr.mxu0 0.0
      %2735 = vmatpush2.msra.mxu0 0.0
      %2736 = vmatprep.subr.mxu0 0.0
      %2737 = vmatpush2.msra.mxu0 0.0
      %2738 = vmatprep.subr.mxu0 0.0
      %2739 = vmatpush2.msra.mxu0 0.0
      %2740 = vmatprep.subr.mxu0 0.0
      %2741 = vmatpush2.msra.mxu0 0.0
      %2742 = vmatprep.subr.mxu0 0.0
      %2743 = vmatpush2.msra.mxu0 0.0
      %2744 = vmatprep.subr.mxu0 0.0
      %2745 = vmatpush2.msra.mxu0 0.0
      %2746 = vmatprep.subr.mxu0 0.0
      %2747 = vmatpush2.msra.mxu0 0.0
      %2748 = vmatprep.subr.mxu0 0.0
      %2749 = vmatpush2.msra.mxu0 0.0
      %2750 = vmatprep.subr.mxu0 0.0
      %2751 = vmatpush2.msra.mxu0 0.0
      %2752 = vmatprep.subr.mxu0 0.0
      %2753 = vmatpush2.msra.mxu0 0.0
      %2754 = vmatprep.subr.mxu0 0.0
      %2755 = vmatpush2.msra.mxu0 0.0
      %2756 = vmatprep.subr.mxu0 0.0
      %2757 = vmatpush2.msra.mxu0 0.0
      %2758 = vmatprep.subr.mxu0 0.0
      %2759 = vmatpush2.msra.mxu0 0.0
      %2760 = vmatprep.subr.mxu0 0.0
      %2761 = vmatpush2.msra.mxu0 0.0
      %2762 = vmatprep.mubr.f32.mxu0 0.0
      %2763 = vmatmul.mubr.f32.gmra.mxu0 %v2687
      %v2764 = vpop.f32.mrf.mxu0
      %v2765 = vadd.f32 0.0, %v2764
      %v2766 = vpop.f32.mrf.mxu0
      %2767 = vmatprep.mubr.f32.mxu0 0.0
      %2768 = vmatmul.mubr.f32.gmra.mxu0 %v2690
      %v2769 = vpop.f32.mrf.mxu0
      %v2770 = vadd.f32 0.0, %v2769
      %v2771 = vpop.f32.mrf.mxu0
      %2772 = vmatprep.mubr.f32.mxu0 0.0
      %2773 = vmatmul.mubr.f32.gmra.mxu0 %v2693
      %v2774 = vpop.f32.mrf.mxu0
      %v2775 = vadd.f32 0.0, %v2774
      %v2776 = vpop.f32.mrf.mxu0
      %2777 = vmatprep.mubr.f32.mxu0 0.0
      %2778 = vmatmul.mubr.f32.gmra.mxu0 %v2696
      %v2779 = vpop.f32.mrf.mxu0
      %v2780 = vadd.f32 0.0, %v2779
      %v2781 = vpop.f32.mrf.mxu0
      %2782 = vdwg.mxu0
      %v2783 = vadd.f32 %v2593, %v2765
      %v2784 = vadd.f32 %v2594, %v2770
      %v2785 = vadd.f32 %v2595, %v2775
      %v2786 = vadd.f32 %v2596, %v2780
      %s2787 = scalar_lea.vmem %s4, 192
      %v2788 = vld [vmem:[%s2787] sm:$0xff]
      %v2789 = vld [vmem:[%s2787 + $0x8] sm:$0xff]
      %v2790 = vld [vmem:[%s2787 + $0x10] sm:$0xff]
      %v2791 = vld [vmem:[%s2787 + $0x18] sm:$0xff]
      %v2792 = vld [vmem:[%s2787 + $0x20] sm:$0xff]
      %v2793 = vld [vmem:[%s2787 + $0x28] sm:$0xff]
      %v2794 = vld [vmem:[%s2787 + $0x30] sm:$0xff]
      %v2795 = vld [vmem:[%s2787 + $0x38] sm:$0xff]
      %2796 = vmatprep.subr.mxu0 0.0
      %2797 = vmatpush1.msra.mxu0 0.0
      %2798 = vmatprep.subr.mxu0 0.0
      %2799 = vmatpush1.msra.mxu0 0.0
      %2800 = vmatprep.subr.mxu0 0.0
      %2801 = vmatpush1.msra.mxu0 0.0
      %2802 = vmatprep.subr.mxu0 0.0
      %2803 = vmatpush1.msra.mxu0 0.0
      %2804 = vmatprep.subr.mxu0 0.0
      %2805 = vmatpush1.msra.mxu0 0.0
      %2806 = vmatprep.subr.mxu0 0.0
      %2807 = vmatpush1.msra.mxu0 0.0
      %2808 = vmatprep.subr.mxu0 0.0
      %2809 = vmatpush1.msra.mxu0 0.0
      %2810 = vmatprep.subr.mxu0 0.0
      %2811 = vmatpush1.msra.mxu0 0.0
      %2812 = vmatprep.subr.mxu0 0.0
      %2813 = vmatpush1.msra.mxu0 %v2795
      %2814 = vmatprep.subr.mxu0 0.0
      %2815 = vmatpush1.msra.mxu0 %v2794
      %2816 = vmatprep.subr.mxu0 0.0
      %2817 = vmatpush1.msra.mxu0 %v2793
      %2818 = vmatprep.subr.mxu0 0.0
      %2819 = vmatpush1.msra.mxu0 %v2792
      %2820 = vmatprep.subr.mxu0 0.0
      %2821 = vmatpush1.msra.mxu0 %v2791
      %2822 = vmatprep.subr.mxu0 0.0
      %2823 = vmatpush1.msra.mxu0 %v2790
      %2824 = vmatprep.subr.mxu0 0.0
      %2825 = vmatpush1.msra.mxu0 %v2789
      %2826 = vmatprep.subr.mxu0 0.0
      %2827 = vmatpush1.msra.mxu0 %v2788
      %2828 = vmatprep.subr.mxu0 0.0
      %2829 = vmatpush2.msra.mxu0 0.0
      %2830 = vmatprep.subr.mxu0 0.0
      %2831 = vmatpush2.msra.mxu0 0.0
      %2832 = vmatprep.subr.mxu0 0.0
      %2833 = vmatpush2.msra.mxu0 0.0
      %2834 = vmatprep.subr.mxu0 0.0
      %2835 = vmatpush2.msra.mxu0 0.0
      %2836 = vmatprep.subr.mxu0 0.0
      %2837 = vmatpush2.msra.mxu0 0.0
      %2838 = vmatprep.subr.mxu0 0.0
      %2839 = vmatpush2.msra.mxu0 0.0
      %2840 = vmatprep.subr.mxu0 0.0
      %2841 = vmatpush2.msra.mxu0 0.0
      %2842 = vmatprep.subr.mxu0 0.0
      %2843 = vmatpush2.msra.mxu0 0.0
      %2844 = vmatprep.subr.mxu0 0.0
      %2845 = vmatpush2.msra.mxu0 0.0
      %2846 = vmatprep.subr.mxu0 0.0
      %2847 = vmatpush2.msra.mxu0 0.0
      %2848 = vmatprep.subr.mxu0 0.0
      %2849 = vmatpush2.msra.mxu0 0.0
      %2850 = vmatprep.subr.mxu0 0.0
      %2851 = vmatpush2.msra.mxu0 0.0
      %2852 = vmatprep.subr.mxu0 0.0
      %2853 = vmatpush2.msra.mxu0 0.0
      %2854 = vmatprep.subr.mxu0 0.0
      %2855 = vmatpush2.msra.mxu0 0.0
      %2856 = vmatprep.subr.mxu0 0.0
      %2857 = vmatpush2.msra.mxu0 0.0
      %2858 = vmatprep.subr.mxu0 0.0
      %2859 = vmatpush2.msra.mxu0 0.0
      %2860 = vmatprep.mubr.f32.mxu0 0.0
      %2861 = vmatmul.mubr.f32.gmra.mxu0 %v2201
      %v2862 = vpop.f32.mrf.mxu0
      %v2863 = vadd.f32 0.0, %v2862
      %v2864 = vpop.f32.mrf.mxu0
      %2865 = vmatprep.mubr.f32.mxu0 0.0
      %2866 = vmatmul.mubr.f32.gmra.mxu0 %v2204
      %v2867 = vpop.f32.mrf.mxu0
      %v2868 = vadd.f32 0.0, %v2867
      %v2869 = vpop.f32.mrf.mxu0
      %2870 = vdwg.mxu0
      %s2871 = scalar_lea.vmem %s5, 96
      %v2872 = vld [vmem:[%s2871] sm:$0xff]
      %v2873 = vld [vmem:[%s2871 + $0x8] sm:$0xff]
      %v2874 = vld [vmem:[%s2871 + $0x10] sm:$0xff]
      %v2875 = vld [vmem:[%s2871 + $0x18] sm:$0xff]
      %v2877 = vsel %vm2285, %v2872, 0
      %v2880 = vsel %vm2285, %v2873, 0
      %v2883 = vsel %vm2285, %v2874, 0
      %v2886 = vsel %vm2285, %v2875, 0
      %2888 = vmatprep.subr.mxu0 0.0
      %2889 = vmatpush1.msra.mxu0 0.0
      %2890 = vmatprep.subr.mxu0 0.0
      %2891 = vmatpush1.msra.mxu0 0.0
      %2892 = vmatprep.subr.mxu0 0.0
      %2893 = vmatpush1.msra.mxu0 0.0
      %2894 = vmatprep.subr.mxu0 0.0
      %2895 = vmatpush1.msra.mxu0 0.0
      %2896 = vmatprep.subr.mxu0 0.0
      %2897 = vmatpush1.msra.mxu0 0.0
      %2898 = vmatprep.subr.mxu0 0.0
      %2899 = vmatpush1.msra.mxu0 0.0
      %2900 = vmatprep.subr.mxu0 0.0
      %2901 = vmatpush1.msra.mxu0 0.0
      %2902 = vmatprep.subr.mxu0 0.0
      %2903 = vmatpush1.msra.mxu0 0.0
      %2904 = vmatprep.subr.mxu0 0.0
      %2905 = vmatpush1.msra.mxu0 0.0
      %2906 = vmatprep.subr.mxu0 0.0
      %2907 = vmatpush1.msra.mxu0 0.0
      %2908 = vmatprep.subr.mxu0 0.0
      %2909 = vmatpush1.msra.mxu0 0.0
      %2910 = vmatprep.subr.mxu0 0.0
      %2911 = vmatpush1.msra.mxu0 0.0
      %2912 = vmatprep.subr.mxu0 0.0
      %2913 = vmatpush1.msra.mxu0 0.0
      %2914 = vmatprep.subr.mxu0 0.0
      %2915 = vmatpush1.msra.mxu0 0.0
      %2916 = vmatprep.subr.mxu0 0.0
      %2917 = vmatpush1.msra.mxu0 %v2868
      %2918 = vmatprep.subr.mxu0 0.0
      %2919 = vmatpush1.msra.mxu0 %v2863
      %2920 = vmatprep.subr.mxu0 0.0
      %2921 = vmatpush2.msra.mxu0 0.0
      %2922 = vmatprep.subr.mxu0 0.0
      %2923 = vmatpush2.msra.mxu0 0.0
      %2924 = vmatprep.subr.mxu0 0.0
      %2925 = vmatpush2.msra.mxu0 0.0
      %2926 = vmatprep.subr.mxu0 0.0
      %2927 = vmatpush2.msra.mxu0 0.0
      %2928 = vmatprep.subr.mxu0 0.0
      %2929 = vmatpush2.msra.mxu0 0.0
      %2930 = vmatprep.subr.mxu0 0.0
      %2931 = vmatpush2.msra.mxu0 0.0
      %2932 = vmatprep.subr.mxu0 0.0
      %2933 = vmatpush2.msra.mxu0 0.0
      %2934 = vmatprep.subr.mxu0 0.0
      %2935 = vmatpush2.msra.mxu0 0.0
      %2936 = vmatprep.subr.mxu0 0.0
      %2937 = vmatpush2.msra.mxu0 0.0
      %2938 = vmatprep.subr.mxu0 0.0
      %2939 = vmatpush2.msra.mxu0 0.0
      %2940 = vmatprep.subr.mxu0 0.0
      %2941 = vmatpush2.msra.mxu0 0.0
      %2942 = vmatprep.subr.mxu0 0.0
      %2943 = vmatpush2.msra.mxu0 0.0
      %2944 = vmatprep.subr.mxu0 0.0
      %2945 = vmatpush2.msra.mxu0 0.0
      %2946 = vmatprep.subr.mxu0 0.0
      %2947 = vmatpush2.msra.mxu0 0.0
      %2948 = vmatprep.subr.mxu0 0.0
      %2949 = vmatpush2.msra.mxu0 0.0
      %2950 = vmatprep.subr.mxu0 0.0
      %2951 = vmatpush2.msra.mxu0 0.0
      %2952 = vmatprep.mubr.f32.mxu0 0.0
      %2953 = vmatmul.mubr.f32.gmra.mxu0 %v2877
      %v2954 = vpop.f32.mrf.mxu0
      %v2955 = vadd.f32 0.0, %v2954
      %v2956 = vpop.f32.mrf.mxu0
      %2957 = vmatprep.mubr.f32.mxu0 0.0
      %2958 = vmatmul.mubr.f32.gmra.mxu0 %v2880
      %v2959 = vpop.f32.mrf.mxu0
      %v2960 = vadd.f32 0.0, %v2959
      %v2961 = vpop.f32.mrf.mxu0
      %2962 = vmatprep.mubr.f32.mxu0 0.0
      %2963 = vmatmul.mubr.f32.gmra.mxu0 %v2883
      %v2964 = vpop.f32.mrf.mxu0
      %v2965 = vadd.f32 0.0, %v2964
      %v2966 = vpop.f32.mrf.mxu0
      %2967 = vmatprep.mubr.f32.mxu0 0.0
      %2968 = vmatmul.mubr.f32.gmra.mxu0 %v2886
      %v2969 = vpop.f32.mrf.mxu0
      %v2970 = vadd.f32 0.0, %v2969
      %v2971 = vpop.f32.mrf.mxu0
      %2972 = vdwg.mxu0
      %v2973 = vadd.f32 %v2783, %v2955
      %v2974 = vadd.f32 %v2784, %v2960
      %v2975 = vadd.f32 %v2785, %v2965
      %v2976 = vadd.f32 %v2786, %v2970
      %s2977 = scalar_lea.vmem %s4, 256
      %v2978 = vld [vmem:[%s2977] sm:$0xff]
      %v2979 = vld [vmem:[%s2977 + $0x8] sm:$0xff]
      %v2980 = vld [vmem:[%s2977 + $0x10] sm:$0xff]
      %v2981 = vld [vmem:[%s2977 + $0x18] sm:$0xff]
      %v2982 = vld [vmem:[%s2977 + $0x20] sm:$0xff]
      %v2983 = vld [vmem:[%s2977 + $0x28] sm:$0xff]
      %v2984 = vld [vmem:[%s2977 + $0x30] sm:$0xff]
      %v2985 = vld [vmem:[%s2977 + $0x38] sm:$0xff]
      %2986 = vmatprep.subr.mxu0 0.0
      %2987 = vmatpush1.msra.mxu0 0.0
      %2988 = vmatprep.subr.mxu0 0.0
      %2989 = vmatpush1.msra.mxu0 0.0
      %2990 = vmatprep.subr.mxu0 0.0
      %2991 = vmatpush1.msra.mxu0 0.0
      %2992 = vmatprep.subr.mxu0 0.0
      %2993 = vmatpush1.msra.mxu0 0.0
      %2994 = vmatprep.subr.mxu0 0.0
      %2995 = vmatpush1.msra.mxu0 0.0
      %2996 = vmatprep.subr.mxu0 0.0
      %2997 = vmatpush1.msra.mxu0 0.0
      %2998 = vmatprep.subr.mxu0 0.0
      %2999 = vmatpush1.msra.mxu0 0.0
      %3000 = vmatprep.subr.mxu0 0.0
      %3001 = vmatpush1.msra.mxu0 0.0
      %3002 = vmatprep.subr.mxu0 0.0
      %3003 = vmatpush1.msra.mxu0 %v2985
      %3004 = vmatprep.subr.mxu0 0.0
      %3005 = vmatpush1.msra.mxu0 %v2984
      %3006 = vmatprep.subr.mxu0 0.0
      %3007 = vmatpush1.msra.mxu0 %v2983
      %3008 = vmatprep.subr.mxu0 0.0
      %3009 = vmatpush1.msra.mxu0 %v2982
      %3010 = vmatprep.subr.mxu0 0.0
      %3011 = vmatpush1.msra.mxu0 %v2981
      %3012 = vmatprep.subr.mxu0 0.0
      %3013 = vmatpush1.msra.mxu0 %v2980
      %3014 = vmatprep.subr.mxu0 0.0
      %3015 = vmatpush1.msra.mxu0 %v2979
      %3016 = vmatprep.subr.mxu0 0.0
      %3017 = vmatpush1.msra.mxu0 %v2978
      %3018 = vmatprep.subr.mxu0 0.0
      %3019 = vmatpush2.msra.mxu0 0.0
      %3020 = vmatprep.subr.mxu0 0.0
      %3021 = vmatpush2.msra.mxu0 0.0
      %3022 = vmatprep.subr.mxu0 0.0
      %3023 = vmatpush2.msra.mxu0 0.0
      %3024 = vmatprep.subr.mxu0 0.0
      %3025 = vmatpush2.msra.mxu0 0.0
      %3026 = vmatprep.subr.mxu0 0.0
      %3027 = vmatpush2.msra.mxu0 0.0
      %3028 = vmatprep.subr.mxu0 0.0
      %3029 = vmatpush2.msra.mxu0 0.0
      %3030 = vmatprep.subr.mxu0 0.0
      %3031 = vmatpush2.msra.mxu0 0.0
      %3032 = vmatprep.subr.mxu0 0.0
      %3033 = vmatpush2.msra.mxu0 0.0
      %3034 = vmatprep.subr.mxu0 0.0
      %3035 = vmatpush2.msra.mxu0 0.0
      %3036 = vmatprep.subr.mxu0 0.0
      %3037 = vmatpush2.msra.mxu0 0.0
      %3038 = vmatprep.subr.mxu0 0.0
      %3039 = vmatpush2.msra.mxu0 0.0
      %3040 = vmatprep.subr.mxu0 0.0
      %3041 = vmatpush2.msra.mxu0 0.0
      %3042 = vmatprep.subr.mxu0 0.0
      %3043 = vmatpush2.msra.mxu0 0.0
      %3044 = vmatprep.subr.mxu0 0.0
      %3045 = vmatpush2.msra.mxu0 0.0
      %3046 = vmatprep.subr.mxu0 0.0
      %3047 = vmatpush2.msra.mxu0 0.0
      %3048 = vmatprep.subr.mxu0 0.0
      %3049 = vmatpush2.msra.mxu0 0.0
      %3050 = vmatprep.mubr.f32.mxu0 0.0
      %3051 = vmatmul.mubr.f32.gmra.mxu0 %v2201
      %v3052 = vpop.f32.mrf.mxu0
      %v3053 = vadd.f32 0.0, %v3052
      %v3054 = vpop.f32.mrf.mxu0
      %3055 = vmatprep.mubr.f32.mxu0 0.0
      %3056 = vmatmul.mubr.f32.gmra.mxu0 %v2204
      %v3057 = vpop.f32.mrf.mxu0
      %v3058 = vadd.f32 0.0, %v3057
      %v3059 = vpop.f32.mrf.mxu0
      %3060 = vdwg.mxu0
      %s3061 = scalar_lea.vmem %s5, 128
      %v3062 = vld [vmem:[%s3061] sm:$0xff]
      %v3063 = vld [vmem:[%s3061 + $0x8] sm:$0xff]
      %v3064 = vld [vmem:[%s3061 + $0x10] sm:$0xff]
      %v3065 = vld [vmem:[%s3061 + $0x18] sm:$0xff]
      %v3067 = vsel %vm2285, %v3062, 0
      %v3070 = vsel %vm2285, %v3063, 0
      %v3073 = vsel %vm2285, %v3064, 0
      %v3076 = vsel %vm2285, %v3065, 0
      %3078 = vmatprep.subr.mxu0 0.0
      %3079 = vmatpush1.msra.mxu0 0.0
      %3080 = vmatprep.subr.mxu0 0.0
      %3081 = vmatpush1.msra.mxu0 0.0
      %3082 = vmatprep.subr.mxu0 0.0
      %3083 = vmatpush1.msra.mxu0 0.0
      %3084 = vmatprep.subr.mxu0 0.0
      %3085 = vmatpush1.msra.mxu0 0.0
      %3086 = vmatprep.subr.mxu0 0.0
      %3087 = vmatpush1.msra.mxu0 0.0
      %3088 = vmatprep.subr.mxu0 0.0
      %3089 = vmatpush1.msra.mxu0 0.0
      %3090 = vmatprep.subr.mxu0 0.0
      %3091 = vmatpush1.msra.mxu0 0.0
      %3092 = vmatprep.subr.mxu0 0.0
      %3093 = vmatpush1.msra.mxu0 0.0
      %3094 = vmatprep.subr.mxu0 0.0
      %3095 = vmatpush1.msra.mxu0 0.0
      %3096 = vmatprep.subr.mxu0 0.0
      %3097 = vmatpush1.msra.mxu0 0.0
      %3098 = vmatprep.subr.mxu0 0.0
      %3099 = vmatpush1.msra.mxu0 0.0
      %3100 = vmatprep.subr.mxu0 0.0
      %3101 = vmatpush1.msra.mxu0 0.0
      %3102 = vmatprep.subr.mxu0 0.0
      %3103 = vmatpush1.msra.mxu0 0.0
      %3104 = vmatprep.subr.mxu0 0.0
      %3105 = vmatpush1.msra.mxu0 0.0
      %3106 = vmatprep.subr.mxu0 0.0
      %3107 = vmatpush1.msra.mxu0 %v3058
      %3108 = vmatprep.subr.mxu0 0.0
      %3109 = vmatpush1.msra.mxu0 %v3053
      %3110 = vmatprep.subr.mxu0 0.0
      %3111 = vmatpush2.msra.mxu0 0.0
      %3112 = vmatprep.subr.mxu0 0.0
      %3113 = vmatpush2.msra.mxu0 0.0
      %3114 = vmatprep.subr.mxu0 0.0
      %3115 = vmatpush2.msra.mxu0 0.0
      %3116 = vmatprep.subr.mxu0 0.0
      %3117 = vmatpush2.msra.mxu0 0.0
      %3118 = vmatprep.subr.mxu0 0.0
      %3119 = vmatpush2.msra.mxu0 0.0
      %3120 = vmatprep.subr.mxu0 0.0
      %3121 = vmatpush2.msra.mxu0 0.0
      %3122 = vmatprep.subr.mxu0 0.0
      %3123 = vmatpush2.msra.mxu0 0.0
      %3124 = vmatprep.subr.mxu0 0.0
      %3125 = vmatpush2.msra.mxu0 0.0
      %3126 = vmatprep.subr.mxu0 0.0
      %3127 = vmatpush2.msra.mxu0 0.0
      %3128 = vmatprep.subr.mxu0 0.0
      %3129 = vmatpush2.msra.mxu0 0.0
      %3130 = vmatprep.subr.mxu0 0.0
      %3131 = vmatpush2.msra.mxu0 0.0
      %3132 = vmatprep.subr.mxu0 0.0
      %3133 = vmatpush2.msra.mxu0 0.0
      %3134 = vmatprep.subr.mxu0 0.0
      %3135 = vmatpush2.msra.mxu0 0.0
      %3136 = vmatprep.subr.mxu0 0.0
      %3137 = vmatpush2.msra.mxu0 0.0
      %3138 = vmatprep.subr.mxu0 0.0
      %3139 = vmatpush2.msra.mxu0 0.0
      %3140 = vmatprep.subr.mxu0 0.0
      %3141 = vmatpush2.msra.mxu0 0.0
      %3142 = vmatprep.mubr.f32.mxu0 0.0
      %3143 = vmatmul.mubr.f32.gmra.mxu0 %v3067
      %v3144 = vpop.f32.mrf.mxu0
      %v3145 = vadd.f32 0.0, %v3144
      %v3146 = vpop.f32.mrf.mxu0
      %3147 = vmatprep.mubr.f32.mxu0 0.0
      %3148 = vmatmul.mubr.f32.gmra.mxu0 %v3070
      %v3149 = vpop.f32.mrf.mxu0
      %v3150 = vadd.f32 0.0, %v3149
      %v3151 = vpop.f32.mrf.mxu0
      %3152 = vmatprep.mubr.f32.mxu0 0.0
      %3153 = vmatmul.mubr.f32.gmra.mxu0 %v3073
      %v3154 = vpop.f32.mrf.mxu0
      %v3155 = vadd.f32 0.0, %v3154
      %v3156 = vpop.f32.mrf.mxu0
      %3157 = vmatprep.mubr.f32.mxu0 0.0
      %3158 = vmatmul.mubr.f32.gmra.mxu0 %v3076
      %v3159 = vpop.f32.mrf.mxu0
      %v3160 = vadd.f32 0.0, %v3159
      %v3161 = vpop.f32.mrf.mxu0
      %3162 = vdwg.mxu0
      %v3163 = vadd.f32 %v2973, %v3145
      %v3164 = vadd.f32 %v2974, %v3150
      %v3165 = vadd.f32 %v2975, %v3155
      %v3166 = vadd.f32 %v2976, %v3160
      %s3167 = scalar_lea.vmem %s4, 320
      %v3168 = vld [vmem:[%s3167] sm:$0xff]
      %v3169 = vld [vmem:[%s3167 + $0x8] sm:$0xff]
      %v3170 = vld [vmem:[%s3167 + $0x10] sm:$0xff]
      %v3171 = vld [vmem:[%s3167 + $0x18] sm:$0xff]
      %v3172 = vld [vmem:[%s3167 + $0x20] sm:$0xff]
      %v3173 = vld [vmem:[%s3167 + $0x28] sm:$0xff]
      %v3174 = vld [vmem:[%s3167 + $0x30] sm:$0xff]
      %v3175 = vld [vmem:[%s3167 + $0x38] sm:$0xff]
      %3176 = vmatprep.subr.mxu0 0.0
      %3177 = vmatpush1.msra.mxu0 0.0
      %3178 = vmatprep.subr.mxu0 0.0
      %3179 = vmatpush1.msra.mxu0 0.0
      %3180 = vmatprep.subr.mxu0 0.0
      %3181 = vmatpush1.msra.mxu0 0.0
      %3182 = vmatprep.subr.mxu0 0.0
      %3183 = vmatpush1.msra.mxu0 0.0
      %3184 = vmatprep.subr.mxu0 0.0
      %3185 = vmatpush1.msra.mxu0 0.0
      %3186 = vmatprep.subr.mxu0 0.0
      %3187 = vmatpush1.msra.mxu0 0.0
      %3188 = vmatprep.subr.mxu0 0.0
      %3189 = vmatpush1.msra.mxu0 0.0
      %3190 = vmatprep.subr.mxu0 0.0
      %3191 = vmatpush1.msra.mxu0 0.0
      %3192 = vmatprep.subr.mxu0 0.0
      %3193 = vmatpush1.msra.mxu0 %v3175
      %3194 = vmatprep.subr.mxu0 0.0
      %3195 = vmatpush1.msra.mxu0 %v3174
      %3196 = vmatprep.subr.mxu0 0.0
      %3197 = vmatpush1.msra.mxu0 %v3173
      %3198 = vmatprep.subr.mxu0 0.0
      %3199 = vmatpush1.msra.mxu0 %v3172
      %3200 = vmatprep.subr.mxu0 0.0
      %3201 = vmatpush1.msra.mxu0 %v3171
      %3202 = vmatprep.subr.mxu0 0.0
      %3203 = vmatpush1.msra.mxu0 %v3170
      %3204 = vmatprep.subr.mxu0 0.0
      %3205 = vmatpush1.msra.mxu0 %v3169
      %3206 = vmatprep.subr.mxu0 0.0
      %3207 = vmatpush1.msra.mxu0 %v3168
      %3208 = vmatprep.subr.mxu0 0.0
      %3209 = vmatpush2.msra.mxu0 0.0
      %3210 = vmatprep.subr.mxu0 0.0
      %3211 = vmatpush2.msra.mxu0 0.0
      %3212 = vmatprep.subr.mxu0 0.0
      %3213 = vmatpush2.msra.mxu0 0.0
      %3214 = vmatprep.subr.mxu0 0.0
      %3215 = vmatpush2.msra.mxu0 0.0
      %3216 = vmatprep.subr.mxu0 0.0
      %3217 = vmatpush2.msra.mxu0 0.0
      %3218 = vmatprep.subr.mxu0 0.0
      %3219 = vmatpush2.msra.mxu0 0.0
      %3220 = vmatprep.subr.mxu0 0.0
      %3221 = vmatpush2.msra.mxu0 0.0
      %3222 = vmatprep.subr.mxu0 0.0
      %3223 = vmatpush2.msra.mxu0 0.0
      %3224 = vmatprep.subr.mxu0 0.0
      %3225 = vmatpush2.msra.mxu0 0.0
      %3226 = vmatprep.subr.mxu0 0.0
      %3227 = vmatpush2.msra.mxu0 0.0
      %3228 = vmatprep.subr.mxu0 0.0
      %3229 = vmatpush2.msra.mxu0 0.0
      %3230 = vmatprep.subr.mxu0 0.0
      %3231 = vmatpush2.msra.mxu0 0.0
      %3232 = vmatprep.subr.mxu0 0.0
      %3233 = vmatpush2.msra.mxu0 0.0
      %3234 = vmatprep.subr.mxu0 0.0
      %3235 = vmatpush2.msra.mxu0 0.0
      %3236 = vmatprep.subr.mxu0 0.0
      %3237 = vmatpush2.msra.mxu0 0.0
      %3238 = vmatprep.subr.mxu0 0.0
      %3239 = vmatpush2.msra.mxu0 0.0
      %3240 = vmatprep.mubr.f32.mxu0 0.0
      %3241 = vmatmul.mubr.f32.gmra.mxu0 %v2201
      %v3242 = vpop.f32.mrf.mxu0
      %v3243 = vadd.f32 0.0, %v3242
      %v3244 = vpop.f32.mrf.mxu0
      %3245 = vmatprep.mubr.f32.mxu0 0.0
      %3246 = vmatmul.mubr.f32.gmra.mxu0 %v2204
      %v3247 = vpop.f32.mrf.mxu0
      %v3248 = vadd.f32 0.0, %v3247
      %v3249 = vpop.f32.mrf.mxu0
      %3250 = vdwg.mxu0
      %s3251 = scalar_lea.vmem %s5, 160
      %v3252 = vld [vmem:[%s3251] sm:$0xff]
      %v3253 = vld [vmem:[%s3251 + $0x8] sm:$0xff]
      %v3254 = vld [vmem:[%s3251 + $0x10] sm:$0xff]
      %v3255 = vld [vmem:[%s3251 + $0x18] sm:$0xff]
      %v3257 = vsel %vm2285, %v3252, 0
      %v3260 = vsel %vm2285, %v3253, 0
      %v3263 = vsel %vm2285, %v3254, 0
      %v3266 = vsel %vm2285, %v3255, 0
      %3268 = vmatprep.subr.mxu0 0.0
      %3269 = vmatpush1.msra.mxu0 0.0
      %3270 = vmatprep.subr.mxu0 0.0
      %3271 = vmatpush1.msra.mxu0 0.0
      %3272 = vmatprep.subr.mxu0 0.0
      %3273 = vmatpush1.msra.mxu0 0.0
      %3274 = vmatprep.subr.mxu0 0.0
      %3275 = vmatpush1.msra.mxu0 0.0
      %3276 = vmatprep.subr.mxu0 0.0
      %3277 = vmatpush1.msra.mxu0 0.0
      %3278 = vmatprep.subr.mxu0 0.0
      %3279 = vmatpush1.msra.mxu0 0.0
      %3280 = vmatprep.subr.mxu0 0.0
      %3281 = vmatpush1.msra.mxu0 0.0
      %3282 = vmatprep.subr.mxu0 0.0
      %3283 = vmatpush1.msra.mxu0 0.0
      %3284 = vmatprep.subr.mxu0 0.0
      %3285 = vmatpush1.msra.mxu0 0.0
      %3286 = vmatprep.subr.mxu0 0.0
      %3287 = vmatpush1.msra.mxu0 0.0
      %3288 = vmatprep.subr.mxu0 0.0
      %3289 = vmatpush1.msra.mxu0 0.0
      %3290 = vmatprep.subr.mxu0 0.0
      %3291 = vmatpush1.msra.mxu0 0.0
      %3292 = vmatprep.subr.mxu0 0.0
      %3293 = vmatpush1.msra.mxu0 0.0
      %3294 = vmatprep.subr.mxu0 0.0
      %3295 = vmatpush1.msra.mxu0 0.0
      %3296 = vmatprep.subr.mxu0 0.0
      %3297 = vmatpush1.msra.mxu0 %v3248
      %3298 = vmatprep.subr.mxu0 0.0
      %3299 = vmatpush1.msra.mxu0 %v3243
      %3300 = vmatprep.subr.mxu0 0.0
      %3301 = vmatpush2.msra.mxu0 0.0
      %3302 = vmatprep.subr.mxu0 0.0
      %3303 = vmatpush2.msra.mxu0 0.0
      %3304 = vmatprep.subr.mxu0 0.0
      %3305 = vmatpush2.msra.mxu0 0.0
      %3306 = vmatprep.subr.mxu0 0.0
      %3307 = vmatpush2.msra.mxu0 0.0
      %3308 = vmatprep.subr.mxu0 0.0
      %3309 = vmatpush2.msra.mxu0 0.0
      %3310 = vmatprep.subr.mxu0 0.0
      %3311 = vmatpush2.msra.mxu0 0.0
      %3312 = vmatprep.subr.mxu0 0.0
      %3313 = vmatpush2.msra.mxu0 0.0
      %3314 = vmatprep.subr.mxu0 0.0
      %3315 = vmatpush2.msra.mxu0 0.0
      %3316 = vmatprep.subr.mxu0 0.0
      %3317 = vmatpush2.msra.mxu0 0.0
      %3318 = vmatprep.subr.mxu0 0.0
      %3319 = vmatpush2.msra.mxu0 0.0
      %3320 = vmatprep.subr.mxu0 0.0
      %3321 = vmatpush2.msra.mxu0 0.0
      %3322 = vmatprep.subr.mxu0 0.0
      %3323 = vmatpush2.msra.mxu0 0.0
      %3324 = vmatprep.subr.mxu0 0.0
      %3325 = vmatpush2.msra.mxu0 0.0
      %3326 = vmatprep.subr.mxu0 0.0
      %3327 = vmatpush2.msra.mxu0 0.0
      %3328 = vmatprep.subr.mxu0 0.0
      %3329 = vmatpush2.msra.mxu0 0.0
      %3330 = vmatprep.subr.mxu0 0.0
      %3331 = vmatpush2.msra.mxu0 0.0
      %3332 = vmatprep.mubr.f32.mxu0 0.0
      %3333 = vmatmul.mubr.f32.gmra.mxu0 %v3257
      %v3334 = vpop.f32.mrf.mxu0
      %v3335 = vadd.f32 0.0, %v3334
      %v3336 = vpop.f32.mrf.mxu0
      %3337 = vmatprep.mubr.f32.mxu0 0.0
      %3338 = vmatmul.mubr.f32.gmra.mxu0 %v3260
      %v3339 = vpop.f32.mrf.mxu0
      %v3340 = vadd.f32 0.0, %v3339
      %v3341 = vpop.f32.mrf.mxu0
      %3342 = vmatprep.mubr.f32.mxu0 0.0
      %3343 = vmatmul.mubr.f32.gmra.mxu0 %v3263
      %v3344 = vpop.f32.mrf.mxu0
      %v3345 = vadd.f32 0.0, %v3344
      %v3346 = vpop.f32.mrf.mxu0
      %3347 = vmatprep.mubr.f32.mxu0 0.0
      %3348 = vmatmul.mubr.f32.gmra.mxu0 %v3266
      %v3349 = vpop.f32.mrf.mxu0
      %v3350 = vadd.f32 0.0, %v3349
      %v3351 = vpop.f32.mrf.mxu0
      %3352 = vdwg.mxu0
      %v3353 = vadd.f32 %v3163, %v3335
      %v3354 = vadd.f32 %v3164, %v3340
      %v3355 = vadd.f32 %v3165, %v3345
      %v3356 = vadd.f32 %v3166, %v3350
      %s3357 = scalar_lea.vmem %s4, 384
      %v3358 = vld [vmem:[%s3357] sm:$0xff]
      %v3359 = vld [vmem:[%s3357 + $0x8] sm:$0xff]
      %v3360 = vld [vmem:[%s3357 + $0x10] sm:$0xff]
      %v3361 = vld [vmem:[%s3357 + $0x18] sm:$0xff]
      %v3362 = vld [vmem:[%s3357 + $0x20] sm:$0xff]
      %v3363 = vld [vmem:[%s3357 + $0x28] sm:$0xff]
      %v3364 = vld [vmem:[%s3357 + $0x30] sm:$0xff]
      %v3365 = vld [vmem:[%s3357 + $0x38] sm:$0xff]
      %3366 = vmatprep.subr.mxu0 0.0
      %3367 = vmatpush1.msra.mxu0 0.0
      %3368 = vmatprep.subr.mxu0 0.0
      %3369 = vmatpush1.msra.mxu0 0.0
      %3370 = vmatprep.subr.mxu0 0.0
      %3371 = vmatpush1.msra.mxu0 0.0
      %3372 = vmatprep.subr.mxu0 0.0
      %3373 = vmatpush1.msra.mxu0 0.0
      %3374 = vmatprep.subr.mxu0 0.0
      %3375 = vmatpush1.msra.mxu0 0.0
      %3376 = vmatprep.subr.mxu0 0.0
      %3377 = vmatpush1.msra.mxu0 0.0
      %3378 = vmatprep.subr.mxu0 0.0
      %3379 = vmatpush1.msra.mxu0 0.0
      %3380 = vmatprep.subr.mxu0 0.0
      %3381 = vmatpush1.msra.mxu0 0.0
      %3382 = vmatprep.subr.mxu0 0.0
      %3383 = vmatpush1.msra.mxu0 %v3365
      %3384 = vmatprep.subr.mxu0 0.0
      %3385 = vmatpush1.msra.mxu0 %v3364
      %3386 = vmatprep.subr.mxu0 0.0
      %3387 = vmatpush1.msra.mxu0 %v3363
      %3388 = vmatprep.subr.mxu0 0.0
      %3389 = vmatpush1.msra.mxu0 %v3362
      %3390 = vmatprep.subr.mxu0 0.0
      %3391 = vmatpush1.msra.mxu0 %v3361
      %3392 = vmatprep.subr.mxu0 0.0
      %3393 = vmatpush1.msra.mxu0 %v3360
      %3394 = vmatprep.subr.mxu0 0.0
      %3395 = vmatpush1.msra.mxu0 %v3359
      %3396 = vmatprep.subr.mxu0 0.0
      %3397 = vmatpush1.msra.mxu0 %v3358
      %3398 = vmatprep.subr.mxu0 0.0
      %3399 = vmatpush2.msra.mxu0 0.0
      %3400 = vmatprep.subr.mxu0 0.0
      %3401 = vmatpush2.msra.mxu0 0.0
      %3402 = vmatprep.subr.mxu0 0.0
      %3403 = vmatpush2.msra.mxu0 0.0
      %3404 = vmatprep.subr.mxu0 0.0
      %3405 = vmatpush2.msra.mxu0 0.0
      %3406 = vmatprep.subr.mxu0 0.0
      %3407 = vmatpush2.msra.mxu0 0.0
      %3408 = vmatprep.subr.mxu0 0.0
      %3409 = vmatpush2.msra.mxu0 0.0
      %3410 = vmatprep.subr.mxu0 0.0
      %3411 = vmatpush2.msra.mxu0 0.0
      %3412 = vmatprep.subr.mxu0 0.0
      %3413 = vmatpush2.msra.mxu0 0.0
      %3414 = vmatprep.subr.mxu0 0.0
      %3415 = vmatpush2.msra.mxu0 0.0
      %3416 = vmatprep.subr.mxu0 0.0
      %3417 = vmatpush2.msra.mxu0 0.0
      %3418 = vmatprep.subr.mxu0 0.0
      %3419 = vmatpush2.msra.mxu0 0.0
      %3420 = vmatprep.subr.mxu0 0.0
      %3421 = vmatpush2.msra.mxu0 0.0
      %3422 = vmatprep.subr.mxu0 0.0
      %3423 = vmatpush2.msra.mxu0 0.0
      %3424 = vmatprep.subr.mxu0 0.0
      %3425 = vmatpush2.msra.mxu0 0.0
      %3426 = vmatprep.subr.mxu0 0.0
      %3427 = vmatpush2.msra.mxu0 0.0
      %3428 = vmatprep.subr.mxu0 0.0
      %3429 = vmatpush2.msra.mxu0 0.0
      %3430 = vmatprep.mubr.f32.mxu0 0.0
      %3431 = vmatmul.mubr.f32.gmra.mxu0 %v2201
      %v3432 = vpop.f32.mrf.mxu0
      %v3433 = vadd.f32 0.0, %v3432
      %v3434 = vpop.f32.mrf.mxu0
      %3435 = vmatprep.mubr.f32.mxu0 0.0
      %3436 = vmatmul.mubr.f32.gmra.mxu0 %v2204
      %v3437 = vpop.f32.mrf.mxu0
      %v3438 = vadd.f32 0.0, %v3437
      %v3439 = vpop.f32.mrf.mxu0
      %3440 = vdwg.mxu0
      %s3441 = scalar_lea.vmem %s5, 192
      %v3442 = vld [vmem:[%s3441] sm:$0xff]
      %v3443 = vld [vmem:[%s3441 + $0x8] sm:$0xff]
      %v3444 = vld [vmem:[%s3441 + $0x10] sm:$0xff]
      %v3445 = vld [vmem:[%s3441 + $0x18] sm:$0xff]
      %v3447 = vsel %vm2285, %v3442, 0
      %v3450 = vsel %vm2285, %v3443, 0
      %v3453 = vsel %vm2285, %v3444, 0
      %v3456 = vsel %vm2285, %v3445, 0
      %3458 = vmatprep.subr.mxu0 0.0
      %3459 = vmatpush1.msra.mxu0 0.0
      %3460 = vmatprep.subr.mxu0 0.0
      %3461 = vmatpush1.msra.mxu0 0.0
      %3462 = vmatprep.subr.mxu0 0.0
      %3463 = vmatpush1.msra.mxu0 0.0
      %3464 = vmatprep.subr.mxu0 0.0
      %3465 = vmatpush1.msra.mxu0 0.0
      %3466 = vmatprep.subr.mxu0 0.0
      %3467 = vmatpush1.msra.mxu0 0.0
      %3468 = vmatprep.subr.mxu0 0.0
      %3469 = vmatpush1.msra.mxu0 0.0
      %3470 = vmatprep.subr.mxu0 0.0
      %3471 = vmatpush1.msra.mxu0 0.0
      %3472 = vmatprep.subr.mxu0 0.0
      %3473 = vmatpush1.msra.mxu0 0.0
      %3474 = vmatprep.subr.mxu0 0.0
      %3475 = vmatpush1.msra.mxu0 0.0
      %3476 = vmatprep.subr.mxu0 0.0
      %3477 = vmatpush1.msra.mxu0 0.0
      %3478 = vmatprep.subr.mxu0 0.0
      %3479 = vmatpush1.msra.mxu0 0.0
      %3480 = vmatprep.subr.mxu0 0.0
      %3481 = vmatpush1.msra.mxu0 0.0
      %3482 = vmatprep.subr.mxu0 0.0
      %3483 = vmatpush1.msra.mxu0 0.0
      %3484 = vmatprep.subr.mxu0 0.0
      %3485 = vmatpush1.msra.mxu0 0.0
      %3486 = vmatprep.subr.mxu0 0.0
      %3487 = vmatpush1.msra.mxu0 %v3438
      %3488 = vmatprep.subr.mxu0 0.0
      %3489 = vmatpush1.msra.mxu0 %v3433
      %3490 = vmatprep.subr.mxu0 0.0
      %3491 = vmatpush2.msra.mxu0 0.0
      %3492 = vmatprep.subr.mxu0 0.0
      %3493 = vmatpush2.msra.mxu0 0.0
      %3494 = vmatprep.subr.mxu0 0.0
      %3495 = vmatpush2.msra.mxu0 0.0
      %3496 = vmatprep.subr.mxu0 0.0
      %3497 = vmatpush2.msra.mxu0 0.0
      %3498 = vmatprep.subr.mxu0 0.0
      %3499 = vmatpush2.msra.mxu0 0.0
      %3500 = vmatprep.subr.mxu0 0.0
      %3501 = vmatpush2.msra.mxu0 0.0
      %3502 = vmatprep.subr.mxu0 0.0
      %3503 = vmatpush2.msra.mxu0 0.0
      %3504 = vmatprep.subr.mxu0 0.0
      %3505 = vmatpush2.msra.mxu0 0.0
      %3506 = vmatprep.subr.mxu0 0.0
      %3507 = vmatpush2.msra.mxu0 0.0
      %3508 = vmatprep.subr.mxu0 0.0
      %3509 = vmatpush2.msra.mxu0 0.0
      %3510 = vmatprep.subr.mxu0 0.0
      %3511 = vmatpush2.msra.mxu0 0.0
      %3512 = vmatprep.subr.mxu0 0.0
      %3513 = vmatpush2.msra.mxu0 0.0
      %3514 = vmatprep.subr.mxu0 0.0
      %3515 = vmatpush2.msra.mxu0 0.0
      %3516 = vmatprep.subr.mxu0 0.0
      %3517 = vmatpush2.msra.mxu0 0.0
      %3518 = vmatprep.subr.mxu0 0.0
      %3519 = vmatpush2.msra.mxu0 0.0
      %3520 = vmatprep.subr.mxu0 0.0
      %3521 = vmatpush2.msra.mxu0 0.0
      %3522 = vmatprep.mubr.f32.mxu0 0.0
      %3523 = vmatmul.mubr.f32.gmra.mxu0 %v3447
      %v3524 = vpop.f32.mrf.mxu0
      %v3525 = vadd.f32 0.0, %v3524
      %v3526 = vpop.f32.mrf.mxu0
      %3527 = vmatprep.mubr.f32.mxu0 0.0
      %3528 = vmatmul.mubr.f32.gmra.mxu0 %v3450
      %v3529 = vpop.f32.mrf.mxu0
      %v3530 = vadd.f32 0.0, %v3529
      %v3531 = vpop.f32.mrf.mxu0
      %3532 = vmatprep.mubr.f32.mxu0 0.0
      %3533 = vmatmul.mubr.f32.gmra.mxu0 %v3453
      %v3534 = vpop.f32.mrf.mxu0
      %v3535 = vadd.f32 0.0, %v3534
      %v3536 = vpop.f32.mrf.mxu0
      %3537 = vmatprep.mubr.f32.mxu0 0.0
      %3538 = vmatmul.mubr.f32.gmra.mxu0 %v3456
      %v3539 = vpop.f32.mrf.mxu0
      %v3540 = vadd.f32 0.0, %v3539
      %v3541 = vpop.f32.mrf.mxu0
      %3542 = vdwg.mxu0
      %v3543 = vadd.f32 %v3353, %v3525
      %v3544 = vadd.f32 %v3354, %v3530
      %v3545 = vadd.f32 %v3355, %v3535
      %v3546 = vadd.f32 %v3356, %v3540
      %s3547 = scalar_lea.vmem %s4, 448
      %v3548 = vld [vmem:[%s3547] sm:$0xff]
      %v3549 = vld [vmem:[%s3547 + $0x8] sm:$0xff]
      %v3550 = vld [vmem:[%s3547 + $0x10] sm:$0xff]
      %v3551 = vld [vmem:[%s3547 + $0x18] sm:$0xff]
      %v3552 = vld [vmem:[%s3547 + $0x20] sm:$0xff]
      %v3553 = vld [vmem:[%s3547 + $0x28] sm:$0xff]
      %v3554 = vld [vmem:[%s3547 + $0x30] sm:$0xff]
      %v3555 = vld [vmem:[%s3547 + $0x38] sm:$0xff]
      %3556 = vmatprep.subr.mxu0 0.0
      %3557 = vmatpush1.msra.mxu0 0.0
      %3558 = vmatprep.subr.mxu0 0.0
      %3559 = vmatpush1.msra.mxu0 0.0
      %3560 = vmatprep.subr.mxu0 0.0
      %3561 = vmatpush1.msra.mxu0 0.0
      %3562 = vmatprep.subr.mxu0 0.0
      %3563 = vmatpush1.msra.mxu0 0.0
      %3564 = vmatprep.subr.mxu0 0.0
      %3565 = vmatpush1.msra.mxu0 0.0
      %3566 = vmatprep.subr.mxu0 0.0
      %3567 = vmatpush1.msra.mxu0 0.0
      %3568 = vmatprep.subr.mxu0 0.0
      %3569 = vmatpush1.msra.mxu0 0.0
      %3570 = vmatprep.subr.mxu0 0.0
      %3571 = vmatpush1.msra.mxu0 0.0
      %3572 = vmatprep.subr.mxu0 0.0
      %3573 = vmatpush1.msra.mxu0 %v3555
      %3574 = vmatprep.subr.mxu0 0.0
      %3575 = vmatpush1.msra.mxu0 %v3554
      %3576 = vmatprep.subr.mxu0 0.0
      %3577 = vmatpush1.msra.mxu0 %v3553
      %3578 = vmatprep.subr.mxu0 0.0
      %3579 = vmatpush1.msra.mxu0 %v3552
      %3580 = vmatprep.subr.mxu0 0.0
      %3581 = vmatpush1.msra.mxu0 %v3551
      %3582 = vmatprep.subr.mxu0 0.0
      %3583 = vmatpush1.msra.mxu0 %v3550
      %3584 = vmatprep.subr.mxu0 0.0
      %3585 = vmatpush1.msra.mxu0 %v3549
      %3586 = vmatprep.subr.mxu0 0.0
      %3587 = vmatpush1.msra.mxu0 %v3548
      %3588 = vmatprep.subr.mxu0 0.0
      %3589 = vmatpush2.msra.mxu0 0.0
      %3590 = vmatprep.subr.mxu0 0.0
      %3591 = vmatpush2.msra.mxu0 0.0
      %3592 = vmatprep.subr.mxu0 0.0
      %3593 = vmatpush2.msra.mxu0 0.0
      %3594 = vmatprep.subr.mxu0 0.0
      %3595 = vmatpush2.msra.mxu0 0.0
      %3596 = vmatprep.subr.mxu0 0.0
      %3597 = vmatpush2.msra.mxu0 0.0
      %3598 = vmatprep.subr.mxu0 0.0
      %3599 = vmatpush2.msra.mxu0 0.0
      %3600 = vmatprep.subr.mxu0 0.0
      %3601 = vmatpush2.msra.mxu0 0.0
      %3602 = vmatprep.subr.mxu0 0.0
      %3603 = vmatpush2.msra.mxu0 0.0
      %3604 = vmatprep.subr.mxu0 0.0
      %3605 = vmatpush2.msra.mxu0 0.0
      %3606 = vmatprep.subr.mxu0 0.0
      %3607 = vmatpush2.msra.mxu0 0.0
      %3608 = vmatprep.subr.mxu0 0.0
      %3609 = vmatpush2.msra.mxu0 0.0
      %3610 = vmatprep.subr.mxu0 0.0
      %3611 = vmatpush2.msra.mxu0 0.0
      %3612 = vmatprep.subr.mxu0 0.0
      %3613 = vmatpush2.msra.mxu0 0.0
      %3614 = vmatprep.subr.mxu0 0.0
      %3615 = vmatpush2.msra.mxu0 0.0
      %3616 = vmatprep.subr.mxu0 0.0
      %3617 = vmatpush2.msra.mxu0 0.0
      %3618 = vmatprep.subr.mxu0 0.0
      %3619 = vmatpush2.msra.mxu0 0.0
      %3620 = vmatprep.mubr.f32.mxu0 0.0
      %3621 = vmatmul.mubr.f32.gmra.mxu0 %v2201
      %v3622 = vpop.f32.mrf.mxu0
      %v3623 = vadd.f32 0.0, %v3622
      %v3624 = vpop.f32.mrf.mxu0
      %3625 = vmatprep.mubr.f32.mxu0 0.0
      %3626 = vmatmul.mubr.f32.gmra.mxu0 %v2204
      %v3627 = vpop.f32.mrf.mxu0
      %v3628 = vadd.f32 0.0, %v3627
      %v3629 = vpop.f32.mrf.mxu0
      %3630 = vdwg.mxu0
      %s3631 = scalar_lea.vmem %s5, 224
      %v3632 = vld [vmem:[%s3631] sm:$0xff]
      %v3633 = vld [vmem:[%s3631 + $0x8] sm:$0xff]
      %v3634 = vld [vmem:[%s3631 + $0x10] sm:$0xff]
      %v3635 = vld [vmem:[%s3631 + $0x18] sm:$0xff]
      %v3637 = vsel %vm2285, %v3632, 0
      %v3640 = vsel %vm2285, %v3633, 0
      %v3643 = vsel %vm2285, %v3634, 0
      %v3646 = vsel %vm2285, %v3635, 0
      %3648 = vmatprep.subr.mxu0 0.0
      %3649 = vmatpush1.msra.mxu0 0.0
      %3650 = vmatprep.subr.mxu0 0.0
      %3651 = vmatpush1.msra.mxu0 0.0
      %3652 = vmatprep.subr.mxu0 0.0
      %3653 = vmatpush1.msra.mxu0 0.0
      %3654 = vmatprep.subr.mxu0 0.0
      %3655 = vmatpush1.msra.mxu0 0.0
      %3656 = vmatprep.subr.mxu0 0.0
      %3657 = vmatpush1.msra.mxu0 0.0
      %3658 = vmatprep.subr.mxu0 0.0
      %3659 = vmatpush1.msra.mxu0 0.0
      %3660 = vmatprep.subr.mxu0 0.0
      %3661 = vmatpush1.msra.mxu0 0.0
      %3662 = vmatprep.subr.mxu0 0.0
      %3663 = vmatpush1.msra.mxu0 0.0
      %3664 = vmatprep.subr.mxu0 0.0
      %3665 = vmatpush1.msra.mxu0 0.0
      %3666 = vmatprep.subr.mxu0 0.0
      %3667 = vmatpush1.msra.mxu0 0.0
      %3668 = vmatprep.subr.mxu0 0.0
      %3669 = vmatpush1.msra.mxu0 0.0
      %3670 = vmatprep.subr.mxu0 0.0
      %3671 = vmatpush1.msra.mxu0 0.0
      %3672 = vmatprep.subr.mxu0 0.0
      %3673 = vmatpush1.msra.mxu0 0.0
      %3674 = vmatprep.subr.mxu0 0.0
      %3675 = vmatpush1.msra.mxu0 0.0
      %3676 = vmatprep.subr.mxu0 0.0
      %3677 = vmatpush1.msra.mxu0 %v3628
      %3678 = vmatprep.subr.mxu0 0.0
      %3679 = vmatpush1.msra.mxu0 %v3623
      %3680 = vmatprep.subr.mxu0 0.0
      %3681 = vmatpush2.msra.mxu0 0.0
      %3682 = vmatprep.subr.mxu0 0.0
      %3683 = vmatpush2.msra.mxu0 0.0
      %3684 = vmatprep.subr.mxu0 0.0
      %3685 = vmatpush2.msra.mxu0 0.0
      %3686 = vmatprep.subr.mxu0 0.0
      %3687 = vmatpush2.msra.mxu0 0.0
      %3688 = vmatprep.subr.mxu0 0.0
      %3689 = vmatpush2.msra.mxu0 0.0
      %3690 = vmatprep.subr.mxu0 0.0
      %3691 = vmatpush2.msra.mxu0 0.0
      %3692 = vmatprep.subr.mxu0 0.0
      %3693 = vmatpush2.msra.mxu0 0.0
      %3694 = vmatprep.subr.mxu0 0.0
      %3695 = vmatpush2.msra.mxu0 0.0
      %3696 = vmatprep.subr.mxu0 0.0
      %3697 = vmatpush2.msra.mxu0 0.0
      %3698 = vmatprep.subr.mxu0 0.0
      %3699 = vmatpush2.msra.mxu0 0.0
      %3700 = vmatprep.subr.mxu0 0.0
      %3701 = vmatpush2.msra.mxu0 0.0
      %3702 = vmatprep.subr.mxu0 0.0
      %3703 = vmatpush2.msra.mxu0 0.0
      %3704 = vmatprep.subr.mxu0 0.0
      %3705 = vmatpush2.msra.mxu0 0.0
      %3706 = vmatprep.subr.mxu0 0.0
      %3707 = vmatpush2.msra.mxu0 0.0
      %3708 = vmatprep.subr.mxu0 0.0
      %3709 = vmatpush2.msra.mxu0 0.0
      %3710 = vmatprep.subr.mxu0 0.0
      %3711 = vmatpush2.msra.mxu0 0.0
      %3712 = vmatprep.mubr.f32.mxu0 0.0
      %3713 = vmatmul.mubr.f32.gmra.mxu0 %v3637
      %v3714 = vpop.f32.mrf.mxu0
      %v3715 = vadd.f32 0.0, %v3714
      %v3716 = vpop.f32.mrf.mxu0
      %3717 = vmatprep.mubr.f32.mxu0 0.0
      %3718 = vmatmul.mubr.f32.gmra.mxu0 %v3640
      %v3719 = vpop.f32.mrf.mxu0
      %v3720 = vadd.f32 0.0, %v3719
      %v3721 = vpop.f32.mrf.mxu0
      %3722 = vmatprep.mubr.f32.mxu0 0.0
      %3723 = vmatmul.mubr.f32.gmra.mxu0 %v3643
      %v3724 = vpop.f32.mrf.mxu0
      %v3725 = vadd.f32 0.0, %v3724
      %v3726 = vpop.f32.mrf.mxu0
      %3727 = vmatprep.mubr.f32.mxu0 0.0
      %3728 = vmatmul.mubr.f32.gmra.mxu0 %v3646
      %v3729 = vpop.f32.mrf.mxu0
      %v3730 = vadd.f32 0.0, %v3729
      %v3731 = vpop.f32.mrf.mxu0
      %3732 = vdwg.mxu0
      %v3733 = vadd.f32 %v3543, %v3715
      %v3734 = vadd.f32 %v3544, %v3720
      %v3735 = vadd.f32 %v3545, %v3725
      %v3736 = vadd.f32 %v3546, %v3730
      %s3737 = scalar_lea.vmem %s4, 512
      %v3738 = vld [vmem:[%s3737] sm:$0xff]
      %v3739 = vld [vmem:[%s3737 + $0x8] sm:$0xff]
      %v3740 = vld [vmem:[%s3737 + $0x10] sm:$0xff]
      %v3741 = vld [vmem:[%s3737 + $0x18] sm:$0xff]
      %v3742 = vld [vmem:[%s3737 + $0x20] sm:$0xff]
      %v3743 = vld [vmem:[%s3737 + $0x28] sm:$0xff]
      %v3744 = vld [vmem:[%s3737 + $0x30] sm:$0xff]
      %v3745 = vld [vmem:[%s3737 + $0x38] sm:$0xff]
      %3746 = vmatprep.subr.mxu0 0.0
      %3747 = vmatpush1.msra.mxu0 0.0
      %3748 = vmatprep.subr.mxu0 0.0
      %3749 = vmatpush1.msra.mxu0 0.0
      %3750 = vmatprep.subr.mxu0 0.0
      %3751 = vmatpush1.msra.mxu0 0.0
      %3752 = vmatprep.subr.mxu0 0.0
      %3753 = vmatpush1.msra.mxu0 0.0
      %3754 = vmatprep.subr.mxu0 0.0
      %3755 = vmatpush1.msra.mxu0 0.0
      %3756 = vmatprep.subr.mxu0 0.0
      %3757 = vmatpush1.msra.mxu0 0.0
      %3758 = vmatprep.subr.mxu0 0.0
      %3759 = vmatpush1.msra.mxu0 0.0
      %3760 = vmatprep.subr.mxu0 0.0
      %3761 = vmatpush1.msra.mxu0 0.0
      %3762 = vmatprep.subr.mxu0 0.0
      %3763 = vmatpush1.msra.mxu0 %v3745
      %3764 = vmatprep.subr.mxu0 0.0
      %3765 = vmatpush1.msra.mxu0 %v3744
      %3766 = vmatprep.subr.mxu0 0.0
      %3767 = vmatpush1.msra.mxu0 %v3743
      %3768 = vmatprep.subr.mxu0 0.0
      %3769 = vmatpush1.msra.mxu0 %v3742
      %3770 = vmatprep.subr.mxu0 0.0
      %3771 = vmatpush1.msra.mxu0 %v3741
      %3772 = vmatprep.subr.mxu0 0.0
      %3773 = vmatpush1.msra.mxu0 %v3740
      %3774 = vmatprep.subr.mxu0 0.0
      %3775 = vmatpush1.msra.mxu0 %v3739
      %3776 = vmatprep.subr.mxu0 0.0
      %3777 = vmatpush1.msra.mxu0 %v3738
      %3778 = vmatprep.subr.mxu0 0.0
      %3779 = vmatpush2.msra.mxu0 0.0
      %3780 = vmatprep.subr.mxu0 0.0
      %3781 = vmatpush2.msra.mxu0 0.0
      %3782 = vmatprep.subr.mxu0 0.0
      %3783 = vmatpush2.msra.mxu0 0.0
      %3784 = vmatprep.subr.mxu0 0.0
      %3785 = vmatpush2.msra.mxu0 0.0
      %3786 = vmatprep.subr.mxu0 0.0
      %3787 = vmatpush2.msra.mxu0 0.0
      %3788 = vmatprep.subr.mxu0 0.0
      %3789 = vmatpush2.msra.mxu0 0.0
      %3790 = vmatprep.subr.mxu0 0.0
      %3791 = vmatpush2.msra.mxu0 0.0
      %3792 = vmatprep.subr.mxu0 0.0
      %3793 = vmatpush2.msra.mxu0 0.0
      %3794 = vmatprep.subr.mxu0 0.0
      %3795 = vmatpush2.msra.mxu0 0.0
      %3796 = vmatprep.subr.mxu0 0.0
      %3797 = vmatpush2.msra.mxu0 0.0
      %3798 = vmatprep.subr.mxu0 0.0
      %3799 = vmatpush2.msra.mxu0 0.0
      %3800 = vmatprep.subr.mxu0 0.0
      %3801 = vmatpush2.msra.mxu0 0.0
      %3802 = vmatprep.subr.mxu0 0.0
      %3803 = vmatpush2.msra.mxu0 0.0
      %3804 = vmatprep.subr.mxu0 0.0
      %3805 = vmatpush2.msra.mxu0 0.0
      %3806 = vmatprep.subr.mxu0 0.0
      %3807 = vmatpush2.msra.mxu0 0.0
      %3808 = vmatprep.subr.mxu0 0.0
      %3809 = vmatpush2.msra.mxu0 0.0
      %3810 = vmatprep.mubr.f32.mxu0 0.0
      %3811 = vmatmul.mubr.f32.gmra.mxu0 %v2201
      %v3812 = vpop.f32.mrf.mxu0
      %v3813 = vadd.f32 0.0, %v3812
      %v3814 = vpop.f32.mrf.mxu0
      %3815 = vmatprep.mubr.f32.mxu0 0.0
      %3816 = vmatmul.mubr.f32.gmra.mxu0 %v2204
      %v3817 = vpop.f32.mrf.mxu0
      %v3818 = vadd.f32 0.0, %v3817
      %v3819 = vpop.f32.mrf.mxu0
      %3820 = vdwg.mxu0
      %s3821 = scalar_lea.vmem %s5, 256
      %v3822 = vld [vmem:[%s3821] sm:$0xff]
      %v3823 = vld [vmem:[%s3821 + $0x8] sm:$0xff]
      %v3824 = vld [vmem:[%s3821 + $0x10] sm:$0xff]
      %v3825 = vld [vmem:[%s3821 + $0x18] sm:$0xff]
      %v3827 = vsel %vm2285, %v3822, 0
      %v3830 = vsel %vm2285, %v3823, 0
      %v3833 = vsel %vm2285, %v3824, 0
      %v3836 = vsel %vm2285, %v3825, 0
      %3838 = vmatprep.subr.mxu0 0.0
      %3839 = vmatpush1.msra.mxu0 0.0
      %3840 = vmatprep.subr.mxu0 0.0
      %3841 = vmatpush1.msra.mxu0 0.0
      %3842 = vmatprep.subr.mxu0 0.0
      %3843 = vmatpush1.msra.mxu0 0.0
      %3844 = vmatprep.subr.mxu0 0.0
      %3845 = vmatpush1.msra.mxu0 0.0
      %3846 = vmatprep.subr.mxu0 0.0
      %3847 = vmatpush1.msra.mxu0 0.0
      %3848 = vmatprep.subr.mxu0 0.0
      %3849 = vmatpush1.msra.mxu0 0.0
      %3850 = vmatprep.subr.mxu0 0.0
      %3851 = vmatpush1.msra.mxu0 0.0
      %3852 = vmatprep.subr.mxu0 0.0
      %3853 = vmatpush1.msra.mxu0 0.0
      %3854 = vmatprep.subr.mxu0 0.0
      %3855 = vmatpush1.msra.mxu0 0.0
      %3856 = vmatprep.subr.mxu0 0.0
      %3857 = vmatpush1.msra.mxu0 0.0
      %3858 = vmatprep.subr.mxu0 0.0
      %3859 = vmatpush1.msra.mxu0 0.0
      %3860 = vmatprep.subr.mxu0 0.0
      %3861 = vmatpush1.msra.mxu0 0.0
      %3862 = vmatprep.subr.mxu0 0.0
      %3863 = vmatpush1.msra.mxu0 0.0
      %3864 = vmatprep.subr.mxu0 0.0
      %3865 = vmatpush1.msra.mxu0 0.0
      %3866 = vmatprep.subr.mxu0 0.0
      %3867 = vmatpush1.msra.mxu0 %v3818
      %3868 = vmatprep.subr.mxu0 0.0
      %3869 = vmatpush1.msra.mxu0 %v3813
      %3870 = vmatprep.subr.mxu0 0.0
      %3871 = vmatpush2.msra.mxu0 0.0
      %3872 = vmatprep.subr.mxu0 0.0
      %3873 = vmatpush2.msra.mxu0 0.0
      %3874 = vmatprep.subr.mxu0 0.0
      %3875 = vmatpush2.msra.mxu0 0.0
      %3876 = vmatprep.subr.mxu0 0.0
      %3877 = vmatpush2.msra.mxu0 0.0
      %3878 = vmatprep.subr.mxu0 0.0
      %3879 = vmatpush2.msra.mxu0 0.0
      %3880 = vmatprep.subr.mxu0 0.0
      %3881 = vmatpush2.msra.mxu0 0.0
      %3882 = vmatprep.subr.mxu0 0.0
      %3883 = vmatpush2.msra.mxu0 0.0
      %3884 = vmatprep.subr.mxu0 0.0
      %3885 = vmatpush2.msra.mxu0 0.0
      %3886 = vmatprep.subr.mxu0 0.0
      %3887 = vmatpush2.msra.mxu0 0.0
      %3888 = vmatprep.subr.mxu0 0.0
      %3889 = vmatpush2.msra.mxu0 0.0
      %3890 = vmatprep.subr.mxu0 0.0
      %3891 = vmatpush2.msra.mxu0 0.0
      %3892 = vmatprep.subr.mxu0 0.0
      %3893 = vmatpush2.msra.mxu0 0.0
      %3894 = vmatprep.subr.mxu0 0.0
      %3895 = vmatpush2.msra.mxu0 0.0
      %3896 = vmatprep.subr.mxu0 0.0
      %3897 = vmatpush2.msra.mxu0 0.0
      %3898 = vmatprep.subr.mxu0 0.0
      %3899 = vmatpush2.msra.mxu0 0.0
      %3900 = vmatprep.subr.mxu0 0.0
      %3901 = vmatpush2.msra.mxu0 0.0
      %3902 = vmatprep.mubr.f32.mxu0 0.0
      %3903 = vmatmul.mubr.f32.gmra.mxu0 %v3827
      %v3904 = vpop.f32.mrf.mxu0
      %v3905 = vadd.f32 0.0, %v3904
      %v3906 = vpop.f32.mrf.mxu0
      %3907 = vmatprep.mubr.f32.mxu0 0.0
      %3908 = vmatmul.mubr.f32.gmra.mxu0 %v3830
      %v3909 = vpop.f32.mrf.mxu0
      %v3910 = vadd.f32 0.0, %v3909
      %v3911 = vpop.f32.mrf.mxu0
      %3912 = vmatprep.mubr.f32.mxu0 0.0
      %3913 = vmatmul.mubr.f32.gmra.mxu0 %v3833
      %v3914 = vpop.f32.mrf.mxu0
      %v3915 = vadd.f32 0.0, %v3914
      %v3916 = vpop.f32.mrf.mxu0
      %3917 = vmatprep.mubr.f32.mxu0 0.0
      %3918 = vmatmul.mubr.f32.gmra.mxu0 %v3836
      %v3919 = vpop.f32.mrf.mxu0
      %v3920 = vadd.f32 0.0, %v3919
      %v3921 = vpop.f32.mrf.mxu0
      %3922 = vdwg.mxu0
      %v3923 = vadd.f32 %v3733, %v3905
      %v3924 = vadd.f32 %v3734, %v3910
      %v3925 = vadd.f32 %v3735, %v3915
      %v3926 = vadd.f32 %v3736, %v3920
      %v3927 = vmax.f32 %v3923, 0.0
      %v3928 = vmax.f32 %v3924, 0.0
      %v3929 = vmax.f32 %v3925, 0.0
      %v3930 = vmax.f32 %v3926, 0.0
      %v3931 = vld [vmem:[%s7] sm:$0xff]
      %v3932 = vld [vmem:[%s7 + $0x8] sm:$0xff]
      %v3933 = vld [vmem:[%s8] sm:$0xff]
      %v3934 = vld [vmem:[%s8 + $0x8] sm:$0xff]
      %3936 = vset.pattern.permute.xlu0 0
      %3937 = vperm.xlu0 %3936, %v3933
      %v3938 = vpop.permute.xlu0 %3937
      %3941 = vset.pattern.permute.xlu0 0
      %3942 = vperm.xlu0 %3941, %v3934
      %v3943 = vpop.permute.xlu0 %3942
      %vm3945 = vcmask 261120
      %v3947 = vsel %vm3945, %v3931, 0
      %v3950 = vsel %vm3945, %v3932, 0
      %3952 = vmatprep.subr.mxu0 0.0
      %3953 = vmatpush1.msra.mxu0 0.0
      %3954 = vmatprep.subr.mxu0 0.0
      %3955 = vmatpush1.msra.mxu0 0.0
      %3956 = vmatprep.subr.mxu0 0.0
      %3957 = vmatpush1.msra.mxu0 0.0
      %3958 = vmatprep.subr.mxu0 0.0
      %3959 = vmatpush1.msra.mxu0 0.0
      %3960 = vmatprep.subr.mxu0 0.0
      %3961 = vmatpush1.msra.mxu0 0.0
      %3962 = vmatprep.subr.mxu0 0.0
      %3963 = vmatpush1.msra.mxu0 0.0
      %3964 = vmatprep.subr.mxu0 0.0
      %3965 = vmatpush1.msra.mxu0 0.0
      %3966 = vmatprep.subr.mxu0 0.0
      %3967 = vmatpush1.msra.mxu0 0.0
      %3968 = vmatprep.subr.mxu0 0.0
      %3969 = vmatpush1.msra.mxu0 0.0
      %3970 = vmatprep.subr.mxu0 0.0
      %3971 = vmatpush1.msra.mxu0 0.0
      %3972 = vmatprep.subr.mxu0 0.0
      %3973 = vmatpush1.msra.mxu0 0.0
      %3974 = vmatprep.subr.mxu0 0.0
      %3975 = vmatpush1.msra.mxu0 0.0
      %3976 = vmatprep.subr.mxu0 0.0
      %3977 = vmatpush1.msra.mxu0 %v3930
      %3978 = vmatprep.subr.mxu0 0.0
      %3979 = vmatpush1.msra.mxu0 %v3929
      %3980 = vmatprep.subr.mxu0 0.0
      %3981 = vmatpush1.msra.mxu0 %v3928
      %3982 = vmatprep.subr.mxu0 0.0
      %3983 = vmatpush1.msra.mxu0 %v3927
      %3984 = vmatprep.subr.mxu0 0.0
      %3985 = vmatpush2.msra.mxu0 0.0
      %3986 = vmatprep.subr.mxu0 0.0
      %3987 = vmatpush2.msra.mxu0 0.0
      %3988 = vmatprep.subr.mxu0 0.0
      %3989 = vmatpush2.msra.mxu0 0.0
      %3990 = vmatprep.subr.mxu0 0.0
      %3991 = vmatpush2.msra.mxu0 0.0
      %3992 = vmatprep.subr.mxu0 0.0
      %3993 = vmatpush2.msra.mxu0 0.0
      %3994 = vmatprep.subr.mxu0 0.0
      %3995 = vmatpush2.msra.mxu0 0.0
      %3996 = vmatprep.subr.mxu0 0.0
      %3997 = vmatpush2.msra.mxu0 0.0
      %3998 = vmatprep.subr.mxu0 0.0
      %3999 = vmatpush2.msra.mxu0 0.0
      %4000 = vmatprep.subr.mxu0 0.0
      %4001 = vmatpush2.msra.mxu0 0.0
      %4002 = vmatprep.subr.mxu0 0.0
      %4003 = vmatpush2.msra.mxu0 0.0
      %4004 = vmatprep.subr.mxu0 0.0
      %4005 = vmatpush2.msra.mxu0 0.0
      %4006 = vmatprep.subr.mxu0 0.0
      %4007 = vmatpush2.msra.mxu0 0.0
      %4008 = vmatprep.subr.mxu0 0.0
      %4009 = vmatpush2.msra.mxu0 0.0
      %4010 = vmatprep.subr.mxu0 0.0
      %4011 = vmatpush2.msra.mxu0 0.0
      %4012 = vmatprep.subr.mxu0 0.0
      %4013 = vmatpush2.msra.mxu0 0.0
      %4014 = vmatprep.subr.mxu0 0.0
      %4015 = vmatpush2.msra.mxu0 0.0
      %4016 = vmatprep.mubr.f32.mxu0 0.0
      %4017 = vmatmul.mubr.f32.gmra.mxu0 %v3947
      %v4018 = vpop.f32.mrf.mxu0
      %v4019 = vadd.f32 %v3938, %v4018
      %v4020 = vpop.f32.mrf.mxu0
      %4021 = vmatprep.mubr.f32.mxu0 0.0
      %4022 = vmatmul.mubr.f32.gmra.mxu0 %v3950
      %v4023 = vpop.f32.mrf.mxu0
      %v4024 = vadd.f32 %v3943, %v4023
      %v4025 = vpop.f32.mrf.mxu0
      %4026 = vdwg.mxu0
      %v4027 = vmax.f32 %v4019, 0.0
      %v4028 = vmax.f32 %v4024, 0.0
      %v4029 = vld [vmem:[#allocation2] sm:$0x1]
      %v4030 = vld [vmem:[%s9] sm:$0xff]
      %v4031 = vld [vmem:[%s9 + $0x8] sm:$0xff]
      %v4033 = vsel %vm2285, %v4027, 0
      %v4036 = vsel %vm2285, %v4028, 0
      %4038 = vmatprep.subr.mxu0 0.0
      %4039 = vmatpush1.msra.mxu0 0.0
      %4040 = vmatprep.subr.mxu0 0.0
      %4041 = vmatpush1.msra.mxu0 0.0
      %4042 = vmatprep.subr.mxu0 0.0
      %4043 = vmatpush1.msra.mxu0 0.0
      %4044 = vmatprep.subr.mxu0 0.0
      %4045 = vmatpush1.msra.mxu0 0.0
      %4046 = vmatprep.subr.mxu0 0.0
      %4047 = vmatpush1.msra.mxu0 0.0
      %4048 = vmatprep.subr.mxu0 0.0
      %4049 = vmatpush1.msra.mxu0 0.0
      %4050 = vmatprep.subr.mxu0 0.0
      %4051 = vmatpush1.msra.mxu0 0.0
      %4052 = vmatprep.subr.mxu0 0.0
      %4053 = vmatpush1.msra.mxu0 0.0
      %4054 = vmatprep.subr.mxu0 0.0
      %4055 = vmatpush1.msra.mxu0 0.0
      %4056 = vmatprep.subr.mxu0 0.0
      %4057 = vmatpush1.msra.mxu0 0.0
      %4058 = vmatprep.subr.mxu0 0.0
      %4059 = vmatpush1.msra.mxu0 0.0
      %4060 = vmatprep.subr.mxu0 0.0
      %4061 = vmatpush1.msra.mxu0 0.0
      %4062 = vmatprep.subr.mxu0 0.0
      %4063 = vmatpush1.msra.mxu0 0.0
      %4064 = vmatprep.subr.mxu0 0.0
      %4065 = vmatpush1.msra.mxu0 0.0
      %4066 = vmatprep.subr.mxu0 0.0
      %4067 = vmatpush1.msra.mxu0 %v4031
      %4068 = vmatprep.subr.mxu0 0.0
      %4069 = vmatpush1.msra.mxu0 %v4030
      %4070 = vmatprep.subr.mxu0 0.0
      %4071 = vmatpush2.msra.mxu0 0.0
      %4072 = vmatprep.subr.mxu0 0.0
      %4073 = vmatpush2.msra.mxu0 0.0
      %4074 = vmatprep.subr.mxu0 0.0
      %4075 = vmatpush2.msra.mxu0 0.0
      %4076 = vmatprep.subr.mxu0 0.0
      %4077 = vmatpush2.msra.mxu0 0.0
      %4078 = vmatprep.subr.mxu0 0.0
      %4079 = vmatpush2.msra.mxu0 0.0
      %4080 = vmatprep.subr.mxu0 0.0
      %4081 = vmatpush2.msra.mxu0 0.0
      %4082 = vmatprep.subr.mxu0 0.0
      %4083 = vmatpush2.msra.mxu0 0.0
      %4084 = vmatprep.subr.mxu0 0.0
      %4085 = vmatpush2.msra.mxu0 0.0
      %4086 = vmatprep.subr.mxu0 0.0
      %4087 = vmatpush2.msra.mxu0 0.0
      %4088 = vmatprep.subr.mxu0 0.0
      %4089 = vmatpush2.msra.mxu0 0.0
      %4090 = vmatprep.subr.mxu0 0.0
      %4091 = vmatpush2.msra.mxu0 0.0
      %4092 = vmatprep.subr.mxu0 0.0
      %4093 = vmatpush2.msra.mxu0 0.0
      %4094 = vmatprep.subr.mxu0 0.0
      %4095 = vmatpush2.msra.mxu0 0.0
      %4096 = vmatprep.subr.mxu0 0.0
      %4097 = vmatpush2.msra.mxu0 0.0
      %4098 = vmatprep.subr.mxu0 0.0
      %4099 = vmatpush2.msra.mxu0 0.0
      %4100 = vmatprep.subr.mxu0 0.0
      %4101 = vmatpush2.msra.mxu0 0.0
      %4102 = vmatprep.mubr.f32.mxu0 0.0
      %4103 = vmatmul.mubr.f32.gmra.mxu0 %v4033
      %v4104 = vpop.f32.mrf.mxu0
      %v4105 = vadd.f32 0.0, %v4104
      %v4106 = vpop.f32.mrf.mxu0
      %4107 = vmatprep.mubr.f32.mxu0 0.0
      %4108 = vmatmul.mubr.f32.gmra.mxu0 %v4036
      %v4109 = vpop.f32.mrf.mxu0
      %v4110 = vadd.f32 0.0, %v4109
      %v4111 = vpop.f32.mrf.mxu0
      %4112 = vdwg.mxu0
      %v4113 = vld [vmem:[%s10] sm:$0x1]
      %v4115 = vsel %vm2285, %v4113, 0
      %4117 = vmatprep.subr.mxu0 0.0
      %4118 = vmatpush1.msra.mxu0 0.0
      %4119 = vmatprep.subr.mxu0 0.0
      %4120 = vmatpush1.msra.mxu0 0.0
      %4121 = vmatprep.subr.mxu0 0.0
      %4122 = vmatpush1.msra.mxu0 0.0
      %4123 = vmatprep.subr.mxu0 0.0
      %4124 = vmatpush1.msra.mxu0 0.0
      %4125 = vmatprep.subr.mxu0 0.0
      %4126 = vmatpush1.msra.mxu0 0.0
      %4127 = vmatprep.subr.mxu0 0.0
      %4128 = vmatpush1.msra.mxu0 0.0
      %4129 = vmatprep.subr.mxu0 0.0
      %4130 = vmatpush1.msra.mxu0 0.0
      %4131 = vmatprep.subr.mxu0 0.0
      %4132 = vmatpush1.msra.mxu0 0.0
      %4133 = vmatprep.subr.mxu0 0.0
      %4134 = vmatpush1.msra.mxu0 0.0
      %4135 = vmatprep.subr.mxu0 0.0
      %4136 = vmatpush1.msra.mxu0 0.0
      %4137 = vmatprep.subr.mxu0 0.0
      %4138 = vmatpush1.msra.mxu0 0.0
      %4139 = vmatprep.subr.mxu0 0.0
      %4140 = vmatpush1.msra.mxu0 0.0
      %4141 = vmatprep.subr.mxu0 0.0
      %4142 = vmatpush1.msra.mxu0 0.0
      %4143 = vmatprep.subr.mxu0 0.0
      %4144 = vmatpush1.msra.mxu0 0.0
      %4145 = vmatprep.subr.mxu0 0.0
      %4146 = vmatpush1.msra.mxu0 %v4110
      %4147 = vmatprep.subr.mxu0 0.0
      %4148 = vmatpush1.msra.mxu0 %v4105
      %4149 = vmatprep.subr.mxu0 0.0
      %4150 = vmatpush2.msra.mxu0 0.0
      %4151 = vmatprep.subr.mxu0 0.0
      %4152 = vmatpush2.msra.mxu0 0.0
      %4153 = vmatprep.subr.mxu0 0.0
      %4154 = vmatpush2.msra.mxu0 0.0
      %4155 = vmatprep.subr.mxu0 0.0
      %4156 = vmatpush2.msra.mxu0 0.0
      %4157 = vmatprep.subr.mxu0 0.0
      %4158 = vmatpush2.msra.mxu0 0.0
      %4159 = vmatprep.subr.mxu0 0.0
      %4160 = vmatpush2.msra.mxu0 0.0
      %4161 = vmatprep.subr.mxu0 0.0
      %4162 = vmatpush2.msra.mxu0 0.0
      %4163 = vmatprep.subr.mxu0 0.0
      %4164 = vmatpush2.msra.mxu0 0.0
      %4165 = vmatprep.subr.mxu0 0.0
      %4166 = vmatpush2.msra.mxu0 0.0
      %4167 = vmatprep.subr.mxu0 0.0
      %4168 = vmatpush2.msra.mxu0 0.0
      %4169 = vmatprep.subr.mxu0 0.0
      %4170 = vmatpush2.msra.mxu0 0.0
      %4171 = vmatprep.subr.mxu0 0.0
      %4172 = vmatpush2.msra.mxu0 0.0
      %4173 = vmatprep.subr.mxu0 0.0
      %4174 = vmatpush2.msra.mxu0 0.0
      %4175 = vmatprep.subr.mxu0 0.0
      %4176 = vmatpush2.msra.mxu0 0.0
      %4177 = vmatprep.subr.mxu0 0.0
      %4178 = vmatpush2.msra.mxu0 0.0
      %4179 = vmatprep.subr.mxu0 0.0
      %4180 = vmatpush2.msra.mxu0 0.0
      %4181 = vmatprep.mubr.f32.mxu0 0.0
      %4182 = vmatmul.mubr.f32.gmra.mxu0 %v4115
      %v4183 = vpop.f32.mrf.mxu0
      %v4184 = vadd.f32 0.0, %v4183
      %v4185 = vpop.f32.mrf.mxu0
      %4186 = vdwg.mxu0
      %4188 = vset.pattern.permute.xlu0 0
      %4189 = vperm.xlu0 %4188, %v4029
      %v4190 = vpop.permute.xlu0 %4189
      %v4192 = vlaneseq
      %v4193 = vshrl.u32 %v4192, 7
      %v4194 = vsub.s32 0, %v4193
      %v4195 = vrot.slane %v4190, %v4194
      %v4196 = vadd.f32 %v4195, %v4184
      %s4197 = scalar_lea.vmem %s9, 16
      %v4198 = vld [vmem:[%s4197] sm:$0xff]
      %v4199 = vld [vmem:[%s4197 + $0x8] sm:$0xff]
      %4200 = vmatprep.subr.mxu0 0.0
      %4201 = vmatpush1.msra.mxu0 0.0
      %4202 = vmatprep.subr.mxu0 0.0
      %4203 = vmatpush1.msra.mxu0 0.0
      %4204 = vmatprep.subr.mxu0 0.0
      %4205 = vmatpush1.msra.mxu0 0.0
      %4206 = vmatprep.subr.mxu0 0.0
      %4207 = vmatpush1.msra.mxu0 0.0
      %4208 = vmatprep.subr.mxu0 0.0
      %4209 = vmatpush1.msra.mxu0 0.0
      %4210 = vmatprep.subr.mxu0 0.0
      %4211 = vmatpush1.msra.mxu0 0.0
      %4212 = vmatprep.subr.mxu0 0.0
      %4213 = vmatpush1.msra.mxu0 0.0
      %4214 = vmatprep.subr.mxu0 0.0
      %4215 = vmatpush1.msra.mxu0 0.0
      %4216 = vmatprep.subr.mxu0 0.0
      %4217 = vmatpush1.msra.mxu0 0.0
      %4218 = vmatprep.subr.mxu0 0.0
      %4219 = vmatpush1.msra.mxu0 0.0
      %4220 = vmatprep.subr.mxu0 0.0
      %4221 = vmatpush1.msra.mxu0 0.0
      %4222 = vmatprep.subr.mxu0 0.0
      %4223 = vmatpush1.msra.mxu0 0.0
      %4224 = vmatprep.subr.mxu0 0.0
      %4225 = vmatpush1.msra.mxu0 0.0
      %4226 = vmatprep.subr.mxu0 0.0
      %4227 = vmatpush1.msra.mxu0 0.0
      %4228 = vmatprep.subr.mxu0 0.0
      %4229 = vmatpush1.msra.mxu0 %v4199
      %4230 = vmatprep.subr.mxu0 0.0
      %4231 = vmatpush1.msra.mxu0 %v4198
      %4232 = vmatprep.subr.mxu0 0.0
      %4233 = vmatpush2.msra.mxu0 0.0
      %4234 = vmatprep.subr.mxu0 0.0
      %4235 = vmatpush2.msra.mxu0 0.0
      %4236 = vmatprep.subr.mxu0 0.0
      %4237 = vmatpush2.msra.mxu0 0.0
      %4238 = vmatprep.subr.mxu0 0.0
      %4239 = vmatpush2.msra.mxu0 0.0
      %4240 = vmatprep.subr.mxu0 0.0
      %4241 = vmatpush2.msra.mxu0 0.0
      %4242 = vmatprep.subr.mxu0 0.0
      %4243 = vmatpush2.msra.mxu0 0.0
      %4244 = vmatprep.subr.mxu0 0.0
      %4245 = vmatpush2.msra.mxu0 0.0
      %4246 = vmatprep.subr.mxu0 0.0
      %4247 = vmatpush2.msra.mxu0 0.0
      %4248 = vmatprep.subr.mxu0 0.0
      %4249 = vmatpush2.msra.mxu0 0.0
      %4250 = vmatprep.subr.mxu0 0.0
      %4251 = vmatpush2.msra.mxu0 0.0
      %4252 = vmatprep.subr.mxu0 0.0
      %4253 = vmatpush2.msra.mxu0 0.0
      %4254 = vmatprep.subr.mxu0 0.0
      %4255 = vmatpush2.msra.mxu0 0.0
      %4256 = vmatprep.subr.mxu0 0.0
      %4257 = vmatpush2.msra.mxu0 0.0
      %4258 = vmatprep.subr.mxu0 0.0
      %4259 = vmatpush2.msra.mxu0 0.0
      %4260 = vmatprep.subr.mxu0 0.0
      %4261 = vmatpush2.msra.mxu0 0.0
      %4262 = vmatprep.subr.mxu0 0.0
      %4263 = vmatpush2.msra.mxu0 0.0
      %4264 = vmatprep.mubr.f32.mxu0 0.0
      %4265 = vmatmul.mubr.f32.gmra.mxu0 %v4033
      %v4266 = vpop.f32.mrf.mxu0
      %v4267 = vadd.f32 0.0, %v4266
      %v4268 = vpop.f32.mrf.mxu0
      %4269 = vmatprep.mubr.f32.mxu0 0.0
      %4270 = vmatmul.mubr.f32.gmra.mxu0 %v4036
      %v4271 = vpop.f32.mrf.mxu0
      %v4272 = vadd.f32 0.0, %v4271
      %v4273 = vpop.f32.mrf.mxu0
      %4274 = vdwg.mxu0
      %s4275 = scalar_lea.vmem %s10, 1
      %v4276 = vld [vmem:[%s4275] sm:$0x1]
      %v4278 = vsel %vm2285, %v4276, 0
      %4280 = vmatprep.subr.mxu0 0.0
      %4281 = vmatpush1.msra.mxu0 0.0
      %4282 = vmatprep.subr.mxu0 0.0
      %4283 = vmatpush1.msra.mxu0 0.0
      %4284 = vmatprep.subr.mxu0 0.0
      %4285 = vmatpush1.msra.mxu0 0.0
      %4286 = vmatprep.subr.mxu0 0.0
      %4287 = vmatpush1.msra.mxu0 0.0
      %4288 = vmatprep.subr.mxu0 0.0
      %4289 = vmatpush1.msra.mxu0 0.0
      %4290 = vmatprep.subr.mxu0 0.0
      %4291 = vmatpush1.msra.mxu0 0.0
      %4292 = vmatprep.subr.mxu0 0.0
      %4293 = vmatpush1.msra.mxu0 0.0
      %4294 = vmatprep.subr.mxu0 0.0
      %4295 = vmatpush1.msra.mxu0 0.0
      %4296 = vmatprep.subr.mxu0 0.0
      %4297 = vmatpush1.msra.mxu0 0.0
      %4298 = vmatprep.subr.mxu0 0.0
      %4299 = vmatpush1.msra.mxu0 0.0
      %4300 = vmatprep.subr.mxu0 0.0
      %4301 = vmatpush1.msra.mxu0 0.0
      %4302 = vmatprep.subr.mxu0 0.0
      %4303 = vmatpush1.msra.mxu0 0.0
      %4304 = vmatprep.subr.mxu0 0.0
      %4305 = vmatpush1.msra.mxu0 0.0
      %4306 = vmatprep.subr.mxu0 0.0
      %4307 = vmatpush1.msra.mxu0 0.0
      %4308 = vmatprep.subr.mxu0 0.0
      %4309 = vmatpush1.msra.mxu0 %v4272
      %4310 = vmatprep.subr.mxu0 0.0
      %4311 = vmatpush1.msra.mxu0 %v4267
      %4312 = vmatprep.subr.mxu0 0.0
      %4313 = vmatpush2.msra.mxu0 0.0
      %4314 = vmatprep.subr.mxu0 0.0
      %4315 = vmatpush2.msra.mxu0 0.0
      %4316 = vmatprep.subr.mxu0 0.0
      %4317 = vmatpush2.msra.mxu0 0.0
      %4318 = vmatprep.subr.mxu0 0.0
      %4319 = vmatpush2.msra.mxu0 0.0
      %4320 = vmatprep.subr.mxu0 0.0
      %4321 = vmatpush2.msra.mxu0 0.0
      %4322 = vmatprep.subr.mxu0 0.0
      %4323 = vmatpush2.msra.mxu0 0.0
      %4324 = vmatprep.subr.mxu0 0.0
      %4325 = vmatpush2.msra.mxu0 0.0
      %4326 = vmatprep.subr.mxu0 0.0
      %4327 = vmatpush2.msra.mxu0 0.0
      %4328 = vmatprep.subr.mxu0 0.0
      %4329 = vmatpush2.msra.mxu0 0.0
      %4330 = vmatprep.subr.mxu0 0.0
      %4331 = vmatpush2.msra.mxu0 0.0
      %4332 = vmatprep.subr.mxu0 0.0
      %4333 = vmatpush2.msra.mxu0 0.0
      %4334 = vmatprep.subr.mxu0 0.0
      %4335 = vmatpush2.msra.mxu0 0.0
      %4336 = vmatprep.subr.mxu0 0.0
      %4337 = vmatpush2.msra.mxu0 0.0
      %4338 = vmatprep.subr.mxu0 0.0
      %4339 = vmatpush2.msra.mxu0 0.0
      %4340 = vmatprep.subr.mxu0 0.0
      %4341 = vmatpush2.msra.mxu0 0.0
      %4342 = vmatprep.subr.mxu0 0.0
      %4343 = vmatpush2.msra.mxu0 0.0
      %4344 = vmatprep.mubr.f32.mxu0 0.0
      %4345 = vmatmul.mubr.f32.gmra.mxu0 %v4278
      %v4346 = vpop.f32.mrf.mxu0
      %v4347 = vadd.f32 0.0, %v4346
      %v4348 = vpop.f32.mrf.mxu0
      %4349 = vdwg.mxu0
      %v4350 = vadd.f32 %v4196, %v4347
      %s4351 = scalar_lea.vmem %s9, 32
      %v4352 = vld [vmem:[%s4351] sm:$0xff]
      %v4353 = vld [vmem:[%s4351 + $0x8] sm:$0xff]
      %4354 = vmatprep.subr.mxu0 0.0
      %4355 = vmatpush1.msra.mxu0 0.0
      %4356 = vmatprep.subr.mxu0 0.0
      %4357 = vmatpush1.msra.mxu0 0.0
      %4358 = vmatprep.subr.mxu0 0.0
      %4359 = vmatpush1.msra.mxu0 0.0
      %4360 = vmatprep.subr.mxu0 0.0
      %4361 = vmatpush1.msra.mxu0 0.0
      %4362 = vmatprep.subr.mxu0 0.0
      %4363 = vmatpush1.msra.mxu0 0.0
      %4364 = vmatprep.subr.mxu0 0.0
      %4365 = vmatpush1.msra.mxu0 0.0
      %4366 = vmatprep.subr.mxu0 0.0
      %4367 = vmatpush1.msra.mxu0 0.0
      %4368 = vmatprep.subr.mxu0 0.0
      %4369 = vmatpush1.msra.mxu0 0.0
      %4370 = vmatprep.subr.mxu0 0.0
      %4371 = vmatpush1.msra.mxu0 0.0
      %4372 = vmatprep.subr.mxu0 0.0
      %4373 = vmatpush1.msra.mxu0 0.0
      %4374 = vmatprep.subr.mxu0 0.0
      %4375 = vmatpush1.msra.mxu0 0.0
      %4376 = vmatprep.subr.mxu0 0.0
      %4377 = vmatpush1.msra.mxu0 0.0
      %4378 = vmatprep.subr.mxu0 0.0
      %4379 = vmatpush1.msra.mxu0 0.0
      %4380 = vmatprep.subr.mxu0 0.0
      %4381 = vmatpush1.msra.mxu0 0.0
      %4382 = vmatprep.subr.mxu0 0.0
      %4383 = vmatpush1.msra.mxu0 %v4353
      %4384 = vmatprep.subr.mxu0 0.0
      %4385 = vmatpush1.msra.mxu0 %v4352
      %4386 = vmatprep.subr.mxu0 0.0
      %4387 = vmatpush2.msra.mxu0 0.0
      %4388 = vmatprep.subr.mxu0 0.0
      %4389 = vmatpush2.msra.mxu0 0.0
      %4390 = vmatprep.subr.mxu0 0.0
      %4391 = vmatpush2.msra.mxu0 0.0
      %4392 = vmatprep.subr.mxu0 0.0
      %4393 = vmatpush2.msra.mxu0 0.0
      %4394 = vmatprep.subr.mxu0 0.0
      %4395 = vmatpush2.msra.mxu0 0.0
      %4396 = vmatprep.subr.mxu0 0.0
      %4397 = vmatpush2.msra.mxu0 0.0
      %4398 = vmatprep.subr.mxu0 0.0
      %4399 = vmatpush2.msra.mxu0 0.0
      %4400 = vmatprep.subr.mxu0 0.0
      %4401 = vmatpush2.msra.mxu0 0.0
      %4402 = vmatprep.subr.mxu0 0.0
      %4403 = vmatpush2.msra.mxu0 0.0
      %4404 = vmatprep.subr.mxu0 0.0
      %4405 = vmatpush2.msra.mxu0 0.0
      %4406 = vmatprep.subr.mxu0 0.0
      %4407 = vmatpush2.msra.mxu0 0.0
      %4408 = vmatprep.subr.mxu0 0.0
      %4409 = vmatpush2.msra.mxu0 0.0
      %4410 = vmatprep.subr.mxu0 0.0
      %4411 = vmatpush2.msra.mxu0 0.0
      %4412 = vmatprep.subr.mxu0 0.0
      %4413 = vmatpush2.msra.mxu0 0.0
      %4414 = vmatprep.subr.mxu0 0.0
      %4415 = vmatpush2.msra.mxu0 0.0
      %4416 = vmatprep.subr.mxu0 0.0
      %4417 = vmatpush2.msra.mxu0 0.0
      %4418 = vmatprep.mubr.f32.mxu0 0.0
      %4419 = vmatmul.mubr.f32.gmra.mxu0 %v4033
      %v4420 = vpop.f32.mrf.mxu0
      %v4421 = vadd.f32 0.0, %v4420
      %v4422 = vpop.f32.mrf.mxu0
      %4423 = vmatprep.mubr.f32.mxu0 0.0
      %4424 = vmatmul.mubr.f32.gmra.mxu0 %v4036
      %v4425 = vpop.f32.mrf.mxu0
      %v4426 = vadd.f32 0.0, %v4425
      %v4427 = vpop.f32.mrf.mxu0
      %4428 = vdwg.mxu0
      %s4429 = scalar_lea.vmem %s10, 2
      %v4430 = vld [vmem:[%s4429] sm:$0x1]
      %v4432 = vsel %vm2285, %v4430, 0
      %4434 = vmatprep.subr.mxu0 0.0
      %4435 = vmatpush1.msra.mxu0 0.0
      %4436 = vmatprep.subr.mxu0 0.0
      %4437 = vmatpush1.msra.mxu0 0.0
      %4438 = vmatprep.subr.mxu0 0.0
      %4439 = vmatpush1.msra.mxu0 0.0
      %4440 = vmatprep.subr.mxu0 0.0
      %4441 = vmatpush1.msra.mxu0 0.0
      %4442 = vmatprep.subr.mxu0 0.0
      %4443 = vmatpush1.msra.mxu0 0.0
      %4444 = vmatprep.subr.mxu0 0.0
      %4445 = vmatpush1.msra.mxu0 0.0
      %4446 = vmatprep.subr.mxu0 0.0
      %4447 = vmatpush1.msra.mxu0 0.0
      %4448 = vmatprep.subr.mxu0 0.0
      %4449 = vmatpush1.msra.mxu0 0.0
      %4450 = vmatprep.subr.mxu0 0.0
      %4451 = vmatpush1.msra.mxu0 0.0
      %4452 = vmatprep.subr.mxu0 0.0
      %4453 = vmatpush1.msra.mxu0 0.0
      %4454 = vmatprep.subr.mxu0 0.0
      %4455 = vmatpush1.msra.mxu0 0.0
      %4456 = vmatprep.subr.mxu0 0.0
      %4457 = vmatpush1.msra.mxu0 0.0
      %4458 = vmatprep.subr.mxu0 0.0
      %4459 = vmatpush1.msra.mxu0 0.0
      %4460 = vmatprep.subr.mxu0 0.0
      %4461 = vmatpush1.msra.mxu0 0.0
      %4462 = vmatprep.subr.mxu0 0.0
      %4463 = vmatpush1.msra.mxu0 %v4426
      %4464 = vmatprep.subr.mxu0 0.0
      %4465 = vmatpush1.msra.mxu0 %v4421
      %4466 = vmatprep.subr.mxu0 0.0
      %4467 = vmatpush2.msra.mxu0 0.0
      %4468 = vmatprep.subr.mxu0 0.0
      %4469 = vmatpush2.msra.mxu0 0.0
      %4470 = vmatprep.subr.mxu0 0.0
      %4471 = vmatpush2.msra.mxu0 0.0
      %4472 = vmatprep.subr.mxu0 0.0
      %4473 = vmatpush2.msra.mxu0 0.0
      %4474 = vmatprep.subr.mxu0 0.0
      %4475 = vmatpush2.msra.mxu0 0.0
      %4476 = vmatprep.subr.mxu0 0.0
      %4477 = vmatpush2.msra.mxu0 0.0
      %4478 = vmatprep.subr.mxu0 0.0
      %4479 = vmatpush2.msra.mxu0 0.0
      %4480 = vmatprep.subr.mxu0 0.0
      %4481 = vmatpush2.msra.mxu0 0.0
      %4482 = vmatprep.subr.mxu0 0.0
      %4483 = vmatpush2.msra.mxu0 0.0
      %4484 = vmatprep.subr.mxu0 0.0
      %4485 = vmatpush2.msra.mxu0 0.0
      %4486 = vmatprep.subr.mxu0 0.0
      %4487 = vmatpush2.msra.mxu0 0.0
      %4488 = vmatprep.subr.mxu0 0.0
      %4489 = vmatpush2.msra.mxu0 0.0
      %4490 = vmatprep.subr.mxu0 0.0
      %4491 = vmatpush2.msra.mxu0 0.0
      %4492 = vmatprep.subr.mxu0 0.0
      %4493 = vmatpush2.msra.mxu0 0.0
      %4494 = vmatprep.subr.mxu0 0.0
      %4495 = vmatpush2.msra.mxu0 0.0
      %4496 = vmatprep.subr.mxu0 0.0
      %4497 = vmatpush2.msra.mxu0 0.0
      %4498 = vmatprep.mubr.f32.mxu0 0.0
      %4499 = vmatmul.mubr.f32.gmra.mxu0 %v4432
      %v4500 = vpop.f32.mrf.mxu0
      %v4501 = vadd.f32 0.0, %v4500
      %v4502 = vpop.f32.mrf.mxu0
      %4503 = vdwg.mxu0
      %v4504 = vadd.f32 %v4350, %v4501
      %s4505 = scalar_lea.vmem %s9, 48
      %v4506 = vld [vmem:[%s4505] sm:$0xff]
      %v4507 = vld [vmem:[%s4505 + $0x8] sm:$0xff]
      %4508 = vmatprep.subr.mxu0 0.0
      %4509 = vmatpush1.msra.mxu0 0.0
      %4510 = vmatprep.subr.mxu0 0.0
      %4511 = vmatpush1.msra.mxu0 0.0
      %4512 = vmatprep.subr.mxu0 0.0
      %4513 = vmatpush1.msra.mxu0 0.0
      %4514 = vmatprep.subr.mxu0 0.0
      %4515 = vmatpush1.msra.mxu0 0.0
      %4516 = vmatprep.subr.mxu0 0.0
      %4517 = vmatpush1.msra.mxu0 0.0
      %4518 = vmatprep.subr.mxu0 0.0
      %4519 = vmatpush1.msra.mxu0 0.0
      %4520 = vmatprep.subr.mxu0 0.0
      %4521 = vmatpush1.msra.mxu0 0.0
      %4522 = vmatprep.subr.mxu0 0.0
      %4523 = vmatpush1.msra.mxu0 0.0
      %4524 = vmatprep.subr.mxu0 0.0
      %4525 = vmatpush1.msra.mxu0 0.0
      %4526 = vmatprep.subr.mxu0 0.0
      %4527 = vmatpush1.msra.mxu0 0.0
      %4528 = vmatprep.subr.mxu0 0.0
      %4529 = vmatpush1.msra.mxu0 0.0
      %4530 = vmatprep.subr.mxu0 0.0
      %4531 = vmatpush1.msra.mxu0 0.0
      %4532 = vmatprep.subr.mxu0 0.0
      %4533 = vmatpush1.msra.mxu0 0.0
      %4534 = vmatprep.subr.mxu0 0.0
      %4535 = vmatpush1.msra.mxu0 0.0
      %4536 = vmatprep.subr.mxu0 0.0
      %4537 = vmatpush1.msra.mxu0 %v4507
      %4538 = vmatprep.subr.mxu0 0.0
      %4539 = vmatpush1.msra.mxu0 %v4506
      %4540 = vmatprep.subr.mxu0 0.0
      %4541 = vmatpush2.msra.mxu0 0.0
      %4542 = vmatprep.subr.mxu0 0.0
      %4543 = vmatpush2.msra.mxu0 0.0
      %4544 = vmatprep.subr.mxu0 0.0
      %4545 = vmatpush2.msra.mxu0 0.0
      %4546 = vmatprep.subr.mxu0 0.0
      %4547 = vmatpush2.msra.mxu0 0.0
      %4548 = vmatprep.subr.mxu0 0.0
      %4549 = vmatpush2.msra.mxu0 0.0
      %4550 = vmatprep.subr.mxu0 0.0
      %4551 = vmatpush2.msra.mxu0 0.0
      %4552 = vmatprep.subr.mxu0 0.0
      %4553 = vmatpush2.msra.mxu0 0.0
      %4554 = vmatprep.subr.mxu0 0.0
      %4555 = vmatpush2.msra.mxu0 0.0
      %4556 = vmatprep.subr.mxu0 0.0
      %4557 = vmatpush2.msra.mxu0 0.0
      %4558 = vmatprep.subr.mxu0 0.0
      %4559 = vmatpush2.msra.mxu0 0.0
      %4560 = vmatprep.subr.mxu0 0.0
      %4561 = vmatpush2.msra.mxu0 0.0
      %4562 = vmatprep.subr.mxu0 0.0
      %4563 = vmatpush2.msra.mxu0 0.0
      %4564 = vmatprep.subr.mxu0 0.0
      %4565 = vmatpush2.msra.mxu0 0.0
      %4566 = vmatprep.subr.mxu0 0.0
      %4567 = vmatpush2.msra.mxu0 0.0
      %4568 = vmatprep.subr.mxu0 0.0
      %4569 = vmatpush2.msra.mxu0 0.0
      %4570 = vmatprep.subr.mxu0 0.0
      %4571 = vmatpush2.msra.mxu0 0.0
      %4572 = vmatprep.mubr.f32.mxu0 0.0
      %4573 = vmatmul.mubr.f32.gmra.mxu0 %v4033
      %v4574 = vpop.f32.mrf.mxu0
      %v4575 = vadd.f32 0.0, %v4574
      %v4576 = vpop.f32.mrf.mxu0
      %4577 = vmatprep.mubr.f32.mxu0 0.0
      %4578 = vmatmul.mubr.f32.gmra.mxu0 %v4036
      %v4579 = vpop.f32.mrf.mxu0
      %v4580 = vadd.f32 0.0, %v4579
      %v4581 = vpop.f32.mrf.mxu0
      %4582 = vdwg.mxu0
      %s4583 = scalar_lea.vmem %s10, 3
      %v4584 = vld [vmem:[%s4583] sm:$0x1]
      %v4586 = vsel %vm2285, %v4584, 0
      %4588 = vmatprep.subr.mxu0 0.0
      %4589 = vmatpush1.msra.mxu0 0.0
      %4590 = vmatprep.subr.mxu0 0.0
      %4591 = vmatpush1.msra.mxu0 0.0
      %4592 = vmatprep.subr.mxu0 0.0
      %4593 = vmatpush1.msra.mxu0 0.0
      %4594 = vmatprep.subr.mxu0 0.0
      %4595 = vmatpush1.msra.mxu0 0.0
      %4596 = vmatprep.subr.mxu0 0.0
      %4597 = vmatpush1.msra.mxu0 0.0
      %4598 = vmatprep.subr.mxu0 0.0
      %4599 = vmatpush1.msra.mxu0 0.0
      %4600 = vmatprep.subr.mxu0 0.0
      %4601 = vmatpush1.msra.mxu0 0.0
      %4602 = vmatprep.subr.mxu0 0.0
      %4603 = vmatpush1.msra.mxu0 0.0
      %4604 = vmatprep.subr.mxu0 0.0
      %4605 = vmatpush1.msra.mxu0 0.0
      %4606 = vmatprep.subr.mxu0 0.0
      %4607 = vmatpush1.msra.mxu0 0.0
      %4608 = vmatprep.subr.mxu0 0.0
      %4609 = vmatpush1.msra.mxu0 0.0
      %4610 = vmatprep.subr.mxu0 0.0
      %4611 = vmatpush1.msra.mxu0 0.0
      %4612 = vmatprep.subr.mxu0 0.0
      %4613 = vmatpush1.msra.mxu0 0.0
      %4614 = vmatprep.subr.mxu0 0.0
      %4615 = vmatpush1.msra.mxu0 0.0
      %4616 = vmatprep.subr.mxu0 0.0
      %4617 = vmatpush1.msra.mxu0 %v4580
      %4618 = vmatprep.subr.mxu0 0.0
      %4619 = vmatpush1.msra.mxu0 %v4575
      %4620 = vmatprep.subr.mxu0 0.0
      %4621 = vmatpush2.msra.mxu0 0.0
      %4622 = vmatprep.subr.mxu0 0.0
      %4623 = vmatpush2.msra.mxu0 0.0
      %4624 = vmatprep.subr.mxu0 0.0
      %4625 = vmatpush2.msra.mxu0 0.0
      %4626 = vmatprep.subr.mxu0 0.0
      %4627 = vmatpush2.msra.mxu0 0.0
      %4628 = vmatprep.subr.mxu0 0.0
      %4629 = vmatpush2.msra.mxu0 0.0
      %4630 = vmatprep.subr.mxu0 0.0
      %4631 = vmatpush2.msra.mxu0 0.0
      %4632 = vmatprep.subr.mxu0 0.0
      %4633 = vmatpush2.msra.mxu0 0.0
      %4634 = vmatprep.subr.mxu0 0.0
      %4635 = vmatpush2.msra.mxu0 0.0
      %4636 = vmatprep.subr.mxu0 0.0
      %4637 = vmatpush2.msra.mxu0 0.0
      %4638 = vmatprep.subr.mxu0 0.0
      %4639 = vmatpush2.msra.mxu0 0.0
      %4640 = vmatprep.subr.mxu0 0.0
      %4641 = vmatpush2.msra.mxu0 0.0
      %4642 = vmatprep.subr.mxu0 0.0
      %4643 = vmatpush2.msra.mxu0 0.0
      %4644 = vmatprep.subr.mxu0 0.0
      %4645 = vmatpush2.msra.mxu0 0.0
      %4646 = vmatprep.subr.mxu0 0.0
      %4647 = vmatpush2.msra.mxu0 0.0
      %4648 = vmatprep.subr.mxu0 0.0
      %4649 = vmatpush2.msra.mxu0 0.0
      %4650 = vmatprep.subr.mxu0 0.0
      %4651 = vmatpush2.msra.mxu0 0.0
      %4652 = vmatprep.mubr.f32.mxu0 0.0
      %4653 = vmatmul.mubr.f32.gmra.mxu0 %v4586
      %v4654 = vpop.f32.mrf.mxu0
      %v4655 = vadd.f32 0.0, %v4654
      %v4656 = vpop.f32.mrf.mxu0
      %4657 = vdwg.mxu0
      %v4658 = vadd.f32 %v4504, %v4655
      %s4659 = scalar_lea.vmem %s9, 64
      %v4660 = vld [vmem:[%s4659] sm:$0xff]
      %v4661 = vld [vmem:[%s4659 + $0x8] sm:$0xff]
      %4662 = vmatprep.subr.mxu0 0.0
      %4663 = vmatpush1.msra.mxu0 0.0
      %4664 = vmatprep.subr.mxu0 0.0
      %4665 = vmatpush1.msra.mxu0 0.0
      %4666 = vmatprep.subr.mxu0 0.0
      %4667 = vmatpush1.msra.mxu0 0.0
      %4668 = vmatprep.subr.mxu0 0.0
      %4669 = vmatpush1.msra.mxu0 0.0
      %4670 = vmatprep.subr.mxu0 0.0
      %4671 = vmatpush1.msra.mxu0 0.0
      %4672 = vmatprep.subr.mxu0 0.0
      %4673 = vmatpush1.msra.mxu0 0.0
      %4674 = vmatprep.subr.mxu0 0.0
      %4675 = vmatpush1.msra.mxu0 0.0
      %4676 = vmatprep.subr.mxu0 0.0
      %4677 = vmatpush1.msra.mxu0 0.0
      %4678 = vmatprep.subr.mxu0 0.0
      %4679 = vmatpush1.msra.mxu0 0.0
      %4680 = vmatprep.subr.mxu0 0.0
      %4681 = vmatpush1.msra.mxu0 0.0
      %4682 = vmatprep.subr.mxu0 0.0
      %4683 = vmatpush1.msra.mxu0 0.0
      %4684 = vmatprep.subr.mxu0 0.0
      %4685 = vmatpush1.msra.mxu0 0.0
      %4686 = vmatprep.subr.mxu0 0.0
      %4687 = vmatpush1.msra.mxu0 0.0
      %4688 = vmatprep.subr.mxu0 0.0
      %4689 = vmatpush1.msra.mxu0 0.0
      %4690 = vmatprep.subr.mxu0 0.0
      %4691 = vmatpush1.msra.mxu0 %v4661
      %4692 = vmatprep.subr.mxu0 0.0
      %4693 = vmatpush1.msra.mxu0 %v4660
      %4694 = vmatprep.subr.mxu0 0.0
      %4695 = vmatpush2.msra.mxu0 0.0
      %4696 = vmatprep.subr.mxu0 0.0
      %4697 = vmatpush2.msra.mxu0 0.0
      %4698 = vmatprep.subr.mxu0 0.0
      %4699 = vmatpush2.msra.mxu0 0.0
      %4700 = vmatprep.subr.mxu0 0.0
      %4701 = vmatpush2.msra.mxu0 0.0
      %4702 = vmatprep.subr.mxu0 0.0
      %4703 = vmatpush2.msra.mxu0 0.0
      %4704 = vmatprep.subr.mxu0 0.0
      %4705 = vmatpush2.msra.mxu0 0.0
      %4706 = vmatprep.subr.mxu0 0.0
      %4707 = vmatpush2.msra.mxu0 0.0
      %4708 = vmatprep.subr.mxu0 0.0
      %4709 = vmatpush2.msra.mxu0 0.0
      %4710 = vmatprep.subr.mxu0 0.0
      %4711 = vmatpush2.msra.mxu0 0.0
      %4712 = vmatprep.subr.mxu0 0.0
      %4713 = vmatpush2.msra.mxu0 0.0
      %4714 = vmatprep.subr.mxu0 0.0
      %4715 = vmatpush2.msra.mxu0 0.0
      %4716 = vmatprep.subr.mxu0 0.0
      %4717 = vmatpush2.msra.mxu0 0.0
      %4718 = vmatprep.subr.mxu0 0.0
      %4719 = vmatpush2.msra.mxu0 0.0
      %4720 = vmatprep.subr.mxu0 0.0
      %4721 = vmatpush2.msra.mxu0 0.0
      %4722 = vmatprep.subr.mxu0 0.0
      %4723 = vmatpush2.msra.mxu0 0.0
      %4724 = vmatprep.subr.mxu0 0.0
      %4725 = vmatpush2.msra.mxu0 0.0
      %4726 = vmatprep.mubr.f32.mxu0 0.0
      %4727 = vmatmul.mubr.f32.gmra.mxu0 %v4033
      %v4728 = vpop.f32.mrf.mxu0
      %v4729 = vadd.f32 0.0, %v4728
      %v4730 = vpop.f32.mrf.mxu0
      %4731 = vmatprep.mubr.f32.mxu0 0.0
      %4732 = vmatmul.mubr.f32.gmra.mxu0 %v4036
      %v4733 = vpop.f32.mrf.mxu0
      %v4734 = vadd.f32 0.0, %v4733
      %v4735 = vpop.f32.mrf.mxu0
      %4736 = vdwg.mxu0
      %s4737 = scalar_lea.vmem %s10, 4
      %v4738 = vld [vmem:[%s4737] sm:$0x1]
      %v4740 = vsel %vm2285, %v4738, 0
      %4742 = vmatprep.subr.mxu0 0.0
      %4743 = vmatpush1.msra.mxu0 0.0
      %4744 = vmatprep.subr.mxu0 0.0
      %4745 = vmatpush1.msra.mxu0 0.0
      %4746 = vmatprep.subr.mxu0 0.0
      %4747 = vmatpush1.msra.mxu0 0.0
      %4748 = vmatprep.subr.mxu0 0.0
      %4749 = vmatpush1.msra.mxu0 0.0
      %4750 = vmatprep.subr.mxu0 0.0
      %4751 = vmatpush1.msra.mxu0 0.0
      %4752 = vmatprep.subr.mxu0 0.0
      %4753 = vmatpush1.msra.mxu0 0.0
      %4754 = vmatprep.subr.mxu0 0.0
      %4755 = vmatpush1.msra.mxu0 0.0
      %4756 = vmatprep.subr.mxu0 0.0
      %4757 = vmatpush1.msra.mxu0 0.0
      %4758 = vmatprep.subr.mxu0 0.0
      %4759 = vmatpush1.msra.mxu0 0.0
      %4760 = vmatprep.subr.mxu0 0.0
      %4761 = vmatpush1.msra.mxu0 0.0
      %4762 = vmatprep.subr.mxu0 0.0
      %4763 = vmatpush1.msra.mxu0 0.0
      %4764 = vmatprep.subr.mxu0 0.0
      %4765 = vmatpush1.msra.mxu0 0.0
      %4766 = vmatprep.subr.mxu0 0.0
      %4767 = vmatpush1.msra.mxu0 0.0
      %4768 = vmatprep.subr.mxu0 0.0
      %4769 = vmatpush1.msra.mxu0 0.0
      %4770 = vmatprep.subr.mxu0 0.0
      %4771 = vmatpush1.msra.mxu0 %v4734
      %4772 = vmatprep.subr.mxu0 0.0
      %4773 = vmatpush1.msra.mxu0 %v4729
      %4774 = vmatprep.subr.mxu0 0.0
      %4775 = vmatpush2.msra.mxu0 0.0
      %4776 = vmatprep.subr.mxu0 0.0
      %4777 = vmatpush2.msra.mxu0 0.0
      %4778 = vmatprep.subr.mxu0 0.0
      %4779 = vmatpush2.msra.mxu0 0.0
      %4780 = vmatprep.subr.mxu0 0.0
      %4781 = vmatpush2.msra.mxu0 0.0
      %4782 = vmatprep.subr.mxu0 0.0
      %4783 = vmatpush2.msra.mxu0 0.0
      %4784 = vmatprep.subr.mxu0 0.0
      %4785 = vmatpush2.msra.mxu0 0.0
      %4786 = vmatprep.subr.mxu0 0.0
      %4787 = vmatpush2.msra.mxu0 0.0
      %4788 = vmatprep.subr.mxu0 0.0
      %4789 = vmatpush2.msra.mxu0 0.0
      %4790 = vmatprep.subr.mxu0 0.0
      %4791 = vmatpush2.msra.mxu0 0.0
      %4792 = vmatprep.subr.mxu0 0.0
      %4793 = vmatpush2.msra.mxu0 0.0
      %4794 = vmatprep.subr.mxu0 0.0
      %4795 = vmatpush2.msra.mxu0 0.0
      %4796 = vmatprep.subr.mxu0 0.0
      %4797 = vmatpush2.msra.mxu0 0.0
      %4798 = vmatprep.subr.mxu0 0.0
      %4799 = vmatpush2.msra.mxu0 0.0
      %4800 = vmatprep.subr.mxu0 0.0
      %4801 = vmatpush2.msra.mxu0 0.0
      %4802 = vmatprep.subr.mxu0 0.0
      %4803 = vmatpush2.msra.mxu0 0.0
      %4804 = vmatprep.subr.mxu0 0.0
      %4805 = vmatpush2.msra.mxu0 0.0
      %4806 = vmatprep.mubr.f32.mxu0 0.0
      %4807 = vmatmul.mubr.f32.gmra.mxu0 %v4740
      %v4808 = vpop.f32.mrf.mxu0
      %v4809 = vadd.f32 0.0, %v4808
      %v4810 = vpop.f32.mrf.mxu0
      %4811 = vdwg.mxu0
      %v4812 = vadd.f32 %v4658, %v4809
      %s4813 = scalar_lea.vmem %s9, 80
      %v4814 = vld [vmem:[%s4813] sm:$0xff]
      %v4815 = vld [vmem:[%s4813 + $0x8] sm:$0xff]
      %4816 = vmatprep.subr.mxu0 0.0
      %4817 = vmatpush1.msra.mxu0 0.0
      %4818 = vmatprep.subr.mxu0 0.0
      %4819 = vmatpush1.msra.mxu0 0.0
      %4820 = vmatprep.subr.mxu0 0.0
      %4821 = vmatpush1.msra.mxu0 0.0
      %4822 = vmatprep.subr.mxu0 0.0
      %4823 = vmatpush1.msra.mxu0 0.0
      %4824 = vmatprep.subr.mxu0 0.0
      %4825 = vmatpush1.msra.mxu0 0.0
      %4826 = vmatprep.subr.mxu0 0.0
      %4827 = vmatpush1.msra.mxu0 0.0
      %4828 = vmatprep.subr.mxu0 0.0
      %4829 = vmatpush1.msra.mxu0 0.0
      %4830 = vmatprep.subr.mxu0 0.0
      %4831 = vmatpush1.msra.mxu0 0.0
      %4832 = vmatprep.subr.mxu0 0.0
      %4833 = vmatpush1.msra.mxu0 0.0
      %4834 = vmatprep.subr.mxu0 0.0
      %4835 = vmatpush1.msra.mxu0 0.0
      %4836 = vmatprep.subr.mxu0 0.0
      %4837 = vmatpush1.msra.mxu0 0.0
      %4838 = vmatprep.subr.mxu0 0.0
      %4839 = vmatpush1.msra.mxu0 0.0
      %4840 = vmatprep.subr.mxu0 0.0
      %4841 = vmatpush1.msra.mxu0 0.0
      %4842 = vmatprep.subr.mxu0 0.0
      %4843 = vmatpush1.msra.mxu0 0.0
      %4844 = vmatprep.subr.mxu0 0.0
      %4845 = vmatpush1.msra.mxu0 %v4815
      %4846 = vmatprep.subr.mxu0 0.0
      %4847 = vmatpush1.msra.mxu0 %v4814
      %4848 = vmatprep.subr.mxu0 0.0
      %4849 = vmatpush2.msra.mxu0 0.0
      %4850 = vmatprep.subr.mxu0 0.0
      %4851 = vmatpush2.msra.mxu0 0.0
      %4852 = vmatprep.subr.mxu0 0.0
      %4853 = vmatpush2.msra.mxu0 0.0
      %4854 = vmatprep.subr.mxu0 0.0
      %4855 = vmatpush2.msra.mxu0 0.0
      %4856 = vmatprep.subr.mxu0 0.0
      %4857 = vmatpush2.msra.mxu0 0.0
      %4858 = vmatprep.subr.mxu0 0.0
      %4859 = vmatpush2.msra.mxu0 0.0
      %4860 = vmatprep.subr.mxu0 0.0
      %4861 = vmatpush2.msra.mxu0 0.0
      %4862 = vmatprep.subr.mxu0 0.0
      %4863 = vmatpush2.msra.mxu0 0.0
      %4864 = vmatprep.subr.mxu0 0.0
      %4865 = vmatpush2.msra.mxu0 0.0
      %4866 = vmatprep.subr.mxu0 0.0
      %4867 = vmatpush2.msra.mxu0 0.0
      %4868 = vmatprep.subr.mxu0 0.0
      %4869 = vmatpush2.msra.mxu0 0.0
      %4870 = vmatprep.subr.mxu0 0.0
      %4871 = vmatpush2.msra.mxu0 0.0
      %4872 = vmatprep.subr.mxu0 0.0
      %4873 = vmatpush2.msra.mxu0 0.0
      %4874 = vmatprep.subr.mxu0 0.0
      %4875 = vmatpush2.msra.mxu0 0.0
      %4876 = vmatprep.subr.mxu0 0.0
      %4877 = vmatpush2.msra.mxu0 0.0
      %4878 = vmatprep.subr.mxu0 0.0
      %4879 = vmatpush2.msra.mxu0 0.0
      %4880 = vmatprep.mubr.f32.mxu0 0.0
      %4881 = vmatmul.mubr.f32.gmra.mxu0 %v4033
      %v4882 = vpop.f32.mrf.mxu0
      %v4883 = vadd.f32 0.0, %v4882
      %v4884 = vpop.f32.mrf.mxu0
      %4885 = vmatprep.mubr.f32.mxu0 0.0
      %4886 = vmatmul.mubr.f32.gmra.mxu0 %v4036
      %v4887 = vpop.f32.mrf.mxu0
      %v4888 = vadd.f32 0.0, %v4887
      %v4889 = vpop.f32.mrf.mxu0
      %4890 = vdwg.mxu0
      %s4891 = scalar_lea.vmem %s10, 5
      %v4892 = vld [vmem:[%s4891] sm:$0x1]
      %v4894 = vsel %vm2285, %v4892, 0
      %4896 = vmatprep.subr.mxu0 0.0
      %4897 = vmatpush1.msra.mxu0 0.0
      %4898 = vmatprep.subr.mxu0 0.0
      %4899 = vmatpush1.msra.mxu0 0.0
      %4900 = vmatprep.subr.mxu0 0.0
      %4901 = vmatpush1.msra.mxu0 0.0
      %4902 = vmatprep.subr.mxu0 0.0
      %4903 = vmatpush1.msra.mxu0 0.0
      %4904 = vmatprep.subr.mxu0 0.0
      %4905 = vmatpush1.msra.mxu0 0.0
      %4906 = vmatprep.subr.mxu0 0.0
      %4907 = vmatpush1.msra.mxu0 0.0
      %4908 = vmatprep.subr.mxu0 0.0
      %4909 = vmatpush1.msra.mxu0 0.0
      %4910 = vmatprep.subr.mxu0 0.0
      %4911 = vmatpush1.msra.mxu0 0.0
      %4912 = vmatprep.subr.mxu0 0.0
      %4913 = vmatpush1.msra.mxu0 0.0
      %4914 = vmatprep.subr.mxu0 0.0
      %4915 = vmatpush1.msra.mxu0 0.0
      %4916 = vmatprep.subr.mxu0 0.0
      %4917 = vmatpush1.msra.mxu0 0.0
      %4918 = vmatprep.subr.mxu0 0.0
      %4919 = vmatpush1.msra.mxu0 0.0
      %4920 = vmatprep.subr.mxu0 0.0
      %4921 = vmatpush1.msra.mxu0 0.0
      %4922 = vmatprep.subr.mxu0 0.0
      %4923 = vmatpush1.msra.mxu0 0.0
      %4924 = vmatprep.subr.mxu0 0.0
      %4925 = vmatpush1.msra.mxu0 %v4888
      %4926 = vmatprep.subr.mxu0 0.0
      %4927 = vmatpush1.msra.mxu0 %v4883
      %4928 = vmatprep.subr.mxu0 0.0
      %4929 = vmatpush2.msra.mxu0 0.0
      %4930 = vmatprep.subr.mxu0 0.0
      %4931 = vmatpush2.msra.mxu0 0.0
      %4932 = vmatprep.subr.mxu0 0.0
      %4933 = vmatpush2.msra.mxu0 0.0
      %4934 = vmatprep.subr.mxu0 0.0
      %4935 = vmatpush2.msra.mxu0 0.0
      %4936 = vmatprep.subr.mxu0 0.0
      %4937 = vmatpush2.msra.mxu0 0.0
      %4938 = vmatprep.subr.mxu0 0.0
      %4939 = vmatpush2.msra.mxu0 0.0
      %4940 = vmatprep.subr.mxu0 0.0
      %4941 = vmatpush2.msra.mxu0 0.0
      %4942 = vmatprep.subr.mxu0 0.0
      %4943 = vmatpush2.msra.mxu0 0.0
      %4944 = vmatprep.subr.mxu0 0.0
      %4945 = vmatpush2.msra.mxu0 0.0
      %4946 = vmatprep.subr.mxu0 0.0
      %4947 = vmatpush2.msra.mxu0 0.0
      %4948 = vmatprep.subr.mxu0 0.0
      %4949 = vmatpush2.msra.mxu0 0.0
      %4950 = vmatprep.subr.mxu0 0.0
      %4951 = vmatpush2.msra.mxu0 0.0
      %4952 = vmatprep.subr.mxu0 0.0
      %4953 = vmatpush2.msra.mxu0 0.0
      %4954 = vmatprep.subr.mxu0 0.0
      %4955 = vmatpush2.msra.mxu0 0.0
      %4956 = vmatprep.subr.mxu0 0.0
      %4957 = vmatpush2.msra.mxu0 0.0
      %4958 = vmatprep.subr.mxu0 0.0
      %4959 = vmatpush2.msra.mxu0 0.0
      %4960 = vmatprep.mubr.f32.mxu0 0.0
      %4961 = vmatmul.mubr.f32.gmra.mxu0 %v4894
      %v4962 = vpop.f32.mrf.mxu0
      %v4963 = vadd.f32 0.0, %v4962
      %v4964 = vpop.f32.mrf.mxu0
      %4965 = vdwg.mxu0
      %v4966 = vadd.f32 %v4812, %v4963
      %s4967 = scalar_lea.vmem %s9, 96
      %v4968 = vld [vmem:[%s4967] sm:$0xff]
      %v4969 = vld [vmem:[%s4967 + $0x8] sm:$0xff]
      %4970 = vmatprep.subr.mxu0 0.0
      %4971 = vmatpush1.msra.mxu0 0.0
      %4972 = vmatprep.subr.mxu0 0.0
      %4973 = vmatpush1.msra.mxu0 0.0
      %4974 = vmatprep.subr.mxu0 0.0
      %4975 = vmatpush1.msra.mxu0 0.0
      %4976 = vmatprep.subr.mxu0 0.0
      %4977 = vmatpush1.msra.mxu0 0.0
      %4978 = vmatprep.subr.mxu0 0.0
      %4979 = vmatpush1.msra.mxu0 0.0
      %4980 = vmatprep.subr.mxu0 0.0
      %4981 = vmatpush1.msra.mxu0 0.0
      %4982 = vmatprep.subr.mxu0 0.0
      %4983 = vmatpush1.msra.mxu0 0.0
      %4984 = vmatprep.subr.mxu0 0.0
      %4985 = vmatpush1.msra.mxu0 0.0
      %4986 = vmatprep.subr.mxu0 0.0
      %4987 = vmatpush1.msra.mxu0 0.0
      %4988 = vmatprep.subr.mxu0 0.0
      %4989 = vmatpush1.msra.mxu0 0.0
      %4990 = vmatprep.subr.mxu0 0.0
      %4991 = vmatpush1.msra.mxu0 0.0
      %4992 = vmatprep.subr.mxu0 0.0
      %4993 = vmatpush1.msra.mxu0 0.0
      %4994 = vmatprep.subr.mxu0 0.0
      %4995 = vmatpush1.msra.mxu0 0.0
      %4996 = vmatprep.subr.mxu0 0.0
      %4997 = vmatpush1.msra.mxu0 0.0
      %4998 = vmatprep.subr.mxu0 0.0
      %4999 = vmatpush1.msra.mxu0 %v4969
      %5000 = vmatprep.subr.mxu0 0.0
      %5001 = vmatpush1.msra.mxu0 %v4968
      %5002 = vmatprep.subr.mxu0 0.0
      %5003 = vmatpush2.msra.mxu0 0.0
      %5004 = vmatprep.subr.mxu0 0.0
      %5005 = vmatpush2.msra.mxu0 0.0
      %5006 = vmatprep.subr.mxu0 0.0
      %5007 = vmatpush2.msra.mxu0 0.0
      %5008 = vmatprep.subr.mxu0 0.0
      %5009 = vmatpush2.msra.mxu0 0.0
      %5010 = vmatprep.subr.mxu0 0.0
      %5011 = vmatpush2.msra.mxu0 0.0
      %5012 = vmatprep.subr.mxu0 0.0
      %5013 = vmatpush2.msra.mxu0 0.0
      %5014 = vmatprep.subr.mxu0 0.0
      %5015 = vmatpush2.msra.mxu0 0.0
      %5016 = vmatprep.subr.mxu0 0.0
      %5017 = vmatpush2.msra.mxu0 0.0
      %5018 = vmatprep.subr.mxu0 0.0
      %5019 = vmatpush2.msra.mxu0 0.0
      %5020 = vmatprep.subr.mxu0 0.0
      %5021 = vmatpush2.msra.mxu0 0.0
      %5022 = vmatprep.subr.mxu0 0.0
      %5023 = vmatpush2.msra.mxu0 0.0
      %5024 = vmatprep.subr.mxu0 0.0
      %5025 = vmatpush2.msra.mxu0 0.0
      %5026 = vmatprep.subr.mxu0 0.0
      %5027 = vmatpush2.msra.mxu0 0.0
      %5028 = vmatprep.subr.mxu0 0.0
      %5029 = vmatpush2.msra.mxu0 0.0
      %5030 = vmatprep.subr.mxu0 0.0
      %5031 = vmatpush2.msra.mxu0 0.0
      %5032 = vmatprep.subr.mxu0 0.0
      %5033 = vmatpush2.msra.mxu0 0.0
      %5034 = vmatprep.mubr.f32.mxu0 0.0
      %5035 = vmatmul.mubr.f32.gmra.mxu0 %v4033
      %v5036 = vpop.f32.mrf.mxu0
      %v5037 = vadd.f32 0.0, %v5036
      %v5038 = vpop.f32.mrf.mxu0
      %5039 = vmatprep.mubr.f32.mxu0 0.0
      %5040 = vmatmul.mubr.f32.gmra.mxu0 %v4036
      %v5041 = vpop.f32.mrf.mxu0
      %v5042 = vadd.f32 0.0, %v5041
      %v5043 = vpop.f32.mrf.mxu0
      %5044 = vdwg.mxu0
      %s5045 = scalar_lea.vmem %s10, 6
      %v5046 = vld [vmem:[%s5045] sm:$0x1]
      %v5048 = vsel %vm2285, %v5046, 0
      %5050 = vmatprep.subr.mxu0 0.0
      %5051 = vmatpush1.msra.mxu0 0.0
      %5052 = vmatprep.subr.mxu0 0.0
      %5053 = vmatpush1.msra.mxu0 0.0
      %5054 = vmatprep.subr.mxu0 0.0
      %5055 = vmatpush1.msra.mxu0 0.0
      %5056 = vmatprep.subr.mxu0 0.0
      %5057 = vmatpush1.msra.mxu0 0.0
      %5058 = vmatprep.subr.mxu0 0.0
      %5059 = vmatpush1.msra.mxu0 0.0
      %5060 = vmatprep.subr.mxu0 0.0
      %5061 = vmatpush1.msra.mxu0 0.0
      %5062 = vmatprep.subr.mxu0 0.0
      %5063 = vmatpush1.msra.mxu0 0.0
      %5064 = vmatprep.subr.mxu0 0.0
      %5065 = vmatpush1.msra.mxu0 0.0
      %5066 = vmatprep.subr.mxu0 0.0
      %5067 = vmatpush1.msra.mxu0 0.0
      %5068 = vmatprep.subr.mxu0 0.0
      %5069 = vmatpush1.msra.mxu0 0.0
      %5070 = vmatprep.subr.mxu0 0.0
      %5071 = vmatpush1.msra.mxu0 0.0
      %5072 = vmatprep.subr.mxu0 0.0
      %5073 = vmatpush1.msra.mxu0 0.0
      %5074 = vmatprep.subr.mxu0 0.0
      %5075 = vmatpush1.msra.mxu0 0.0
      %5076 = vmatprep.subr.mxu0 0.0
      %5077 = vmatpush1.msra.mxu0 0.0
      %5078 = vmatprep.subr.mxu0 0.0
      %5079 = vmatpush1.msra.mxu0 %v5042
      %5080 = vmatprep.subr.mxu0 0.0
      %5081 = vmatpush1.msra.mxu0 %v5037
      %5082 = vmatprep.subr.mxu0 0.0
      %5083 = vmatpush2.msra.mxu0 0.0
      %5084 = vmatprep.subr.mxu0 0.0
      %5085 = vmatpush2.msra.mxu0 0.0
      %5086 = vmatprep.subr.mxu0 0.0
      %5087 = vmatpush2.msra.mxu0 0.0
      %5088 = vmatprep.subr.mxu0 0.0
      %5089 = vmatpush2.msra.mxu0 0.0
      %5090 = vmatprep.subr.mxu0 0.0
      %5091 = vmatpush2.msra.mxu0 0.0
      %5092 = vmatprep.subr.mxu0 0.0
      %5093 = vmatpush2.msra.mxu0 0.0
      %5094 = vmatprep.subr.mxu0 0.0
      %5095 = vmatpush2.msra.mxu0 0.0
      %5096 = vmatprep.subr.mxu0 0.0
      %5097 = vmatpush2.msra.mxu0 0.0
      %5098 = vmatprep.subr.mxu0 0.0
      %5099 = vmatpush2.msra.mxu0 0.0
      %5100 = vmatprep.subr.mxu0 0.0
      %5101 = vmatpush2.msra.mxu0 0.0
      %5102 = vmatprep.subr.mxu0 0.0
      %5103 = vmatpush2.msra.mxu0 0.0
      %5104 = vmatprep.subr.mxu0 0.0
      %5105 = vmatpush2.msra.mxu0 0.0
      %5106 = vmatprep.subr.mxu0 0.0
      %5107 = vmatpush2.msra.mxu0 0.0
      %5108 = vmatprep.subr.mxu0 0.0
      %5109 = vmatpush2.msra.mxu0 0.0
      %5110 = vmatprep.subr.mxu0 0.0
      %5111 = vmatpush2.msra.mxu0 0.0
      %5112 = vmatprep.subr.mxu0 0.0
      %5113 = vmatpush2.msra.mxu0 0.0
      %5114 = vmatprep.mubr.f32.mxu0 0.0
      %5115 = vmatmul.mubr.f32.gmra.mxu0 %v5048
      %v5116 = vpop.f32.mrf.mxu0
      %v5117 = vadd.f32 0.0, %v5116
      %v5118 = vpop.f32.mrf.mxu0
      %5119 = vdwg.mxu0
      %v5120 = vadd.f32 %v4966, %v5117
      %s5121 = scalar_lea.vmem %s9, 112
      %v5122 = vld [vmem:[%s5121] sm:$0xff]
      %v5123 = vld [vmem:[%s5121 + $0x8] sm:$0xff]
      %5124 = vmatprep.subr.mxu0 0.0
      %5125 = vmatpush1.msra.mxu0 0.0
      %5126 = vmatprep.subr.mxu0 0.0
      %5127 = vmatpush1.msra.mxu0 0.0
      %5128 = vmatprep.subr.mxu0 0.0
      %5129 = vmatpush1.msra.mxu0 0.0
      %5130 = vmatprep.subr.mxu0 0.0
      %5131 = vmatpush1.msra.mxu0 0.0
      %5132 = vmatprep.subr.mxu0 0.0
      %5133 = vmatpush1.msra.mxu0 0.0
      %5134 = vmatprep.subr.mxu0 0.0
      %5135 = vmatpush1.msra.mxu0 0.0
      %5136 = vmatprep.subr.mxu0 0.0
      %5137 = vmatpush1.msra.mxu0 0.0
      %5138 = vmatprep.subr.mxu0 0.0
      %5139 = vmatpush1.msra.mxu0 0.0
      %5140 = vmatprep.subr.mxu0 0.0
      %5141 = vmatpush1.msra.mxu0 0.0
      %5142 = vmatprep.subr.mxu0 0.0
      %5143 = vmatpush1.msra.mxu0 0.0
      %5144 = vmatprep.subr.mxu0 0.0
      %5145 = vmatpush1.msra.mxu0 0.0
      %5146 = vmatprep.subr.mxu0 0.0
      %5147 = vmatpush1.msra.mxu0 0.0
      %5148 = vmatprep.subr.mxu0 0.0
      %5149 = vmatpush1.msra.mxu0 0.0
      %5150 = vmatprep.subr.mxu0 0.0
      %5151 = vmatpush1.msra.mxu0 0.0
      %5152 = vmatprep.subr.mxu0 0.0
      %5153 = vmatpush1.msra.mxu0 %v5123
      %5154 = vmatprep.subr.mxu0 0.0
      %5155 = vmatpush1.msra.mxu0 %v5122
      %5156 = vmatprep.subr.mxu0 0.0
      %5157 = vmatpush2.msra.mxu0 0.0
      %5158 = vmatprep.subr.mxu0 0.0
      %5159 = vmatpush2.msra.mxu0 0.0
      %5160 = vmatprep.subr.mxu0 0.0
      %5161 = vmatpush2.msra.mxu0 0.0
      %5162 = vmatprep.subr.mxu0 0.0
      %5163 = vmatpush2.msra.mxu0 0.0
      %5164 = vmatprep.subr.mxu0 0.0
      %5165 = vmatpush2.msra.mxu0 0.0
      %5166 = vmatprep.subr.mxu0 0.0
      %5167 = vmatpush2.msra.mxu0 0.0
      %5168 = vmatprep.subr.mxu0 0.0
      %5169 = vmatpush2.msra.mxu0 0.0
      %5170 = vmatprep.subr.mxu0 0.0
      %5171 = vmatpush2.msra.mxu0 0.0
      %5172 = vmatprep.subr.mxu0 0.0
      %5173 = vmatpush2.msra.mxu0 0.0
      %5174 = vmatprep.subr.mxu0 0.0
      %5175 = vmatpush2.msra.mxu0 0.0
      %5176 = vmatprep.subr.mxu0 0.0
      %5177 = vmatpush2.msra.mxu0 0.0
      %5178 = vmatprep.subr.mxu0 0.0
      %5179 = vmatpush2.msra.mxu0 0.0
      %5180 = vmatprep.subr.mxu0 0.0
      %5181 = vmatpush2.msra.mxu0 0.0
      %5182 = vmatprep.subr.mxu0 0.0
      %5183 = vmatpush2.msra.mxu0 0.0
      %5184 = vmatprep.subr.mxu0 0.0
      %5185 = vmatpush2.msra.mxu0 0.0
      %5186 = vmatprep.subr.mxu0 0.0
      %5187 = vmatpush2.msra.mxu0 0.0
      %5188 = vmatprep.mubr.f32.mxu0 0.0
      %5189 = vmatmul.mubr.f32.gmra.mxu0 %v4033
      %v5190 = vpop.f32.mrf.mxu0
      %v5191 = vadd.f32 0.0, %v5190
      %v5192 = vpop.f32.mrf.mxu0
      %5193 = vmatprep.mubr.f32.mxu0 0.0
      %5194 = vmatmul.mubr.f32.gmra.mxu0 %v4036
      %v5195 = vpop.f32.mrf.mxu0
      %v5196 = vadd.f32 0.0, %v5195
      %v5197 = vpop.f32.mrf.mxu0
      %5198 = vdwg.mxu0
      %s5199 = scalar_lea.vmem %s10, 7
      %v5200 = vld [vmem:[%s5199] sm:$0x1]
      %v5202 = vsel %vm2285, %v5200, 0
      %5204 = vmatprep.subr.mxu0 0.0
      %5205 = vmatpush1.msra.mxu0 0.0
      %5206 = vmatprep.subr.mxu0 0.0
      %5207 = vmatpush1.msra.mxu0 0.0
      %5208 = vmatprep.subr.mxu0 0.0
      %5209 = vmatpush1.msra.mxu0 0.0
      %5210 = vmatprep.subr.mxu0 0.0
      %5211 = vmatpush1.msra.mxu0 0.0
      %5212 = vmatprep.subr.mxu0 0.0
      %5213 = vmatpush1.msra.mxu0 0.0
      %5214 = vmatprep.subr.mxu0 0.0
      %5215 = vmatpush1.msra.mxu0 0.0
      %5216 = vmatprep.subr.mxu0 0.0
      %5217 = vmatpush1.msra.mxu0 0.0
      %5218 = vmatprep.subr.mxu0 0.0
      %5219 = vmatpush1.msra.mxu0 0.0
      %5220 = vmatprep.subr.mxu0 0.0
      %5221 = vmatpush1.msra.mxu0 0.0
      %5222 = vmatprep.subr.mxu0 0.0
      %5223 = vmatpush1.msra.mxu0 0.0
      %5224 = vmatprep.subr.mxu0 0.0
      %5225 = vmatpush1.msra.mxu0 0.0
      %5226 = vmatprep.subr.mxu0 0.0
      %5227 = vmatpush1.msra.mxu0 0.0
      %5228 = vmatprep.subr.mxu0 0.0
      %5229 = vmatpush1.msra.mxu0 0.0
      %5230 = vmatprep.subr.mxu0 0.0
      %5231 = vmatpush1.msra.mxu0 0.0
      %5232 = vmatprep.subr.mxu0 0.0
      %5233 = vmatpush1.msra.mxu0 %v5196
      %5234 = vmatprep.subr.mxu0 0.0
      %5235 = vmatpush1.msra.mxu0 %v5191
      %5236 = vmatprep.subr.mxu0 0.0
      %5237 = vmatpush2.msra.mxu0 0.0
      %5238 = vmatprep.subr.mxu0 0.0
      %5239 = vmatpush2.msra.mxu0 0.0
      %5240 = vmatprep.subr.mxu0 0.0
      %5241 = vmatpush2.msra.mxu0 0.0
      %5242 = vmatprep.subr.mxu0 0.0
      %5243 = vmatpush2.msra.mxu0 0.0
      %5244 = vmatprep.subr.mxu0 0.0
      %5245 = vmatpush2.msra.mxu0 0.0
      %5246 = vmatprep.subr.mxu0 0.0
      %5247 = vmatpush2.msra.mxu0 0.0
      %5248 = vmatprep.subr.mxu0 0.0
      %5249 = vmatpush2.msra.mxu0 0.0
      %5250 = vmatprep.subr.mxu0 0.0
      %5251 = vmatpush2.msra.mxu0 0.0
      %5252 = vmatprep.subr.mxu0 0.0
      %5253 = vmatpush2.msra.mxu0 0.0
      %5254 = vmatprep.subr.mxu0 0.0
      %5255 = vmatpush2.msra.mxu0 0.0
      %5256 = vmatprep.subr.mxu0 0.0
      %5257 = vmatpush2.msra.mxu0 0.0
      %5258 = vmatprep.subr.mxu0 0.0
      %5259 = vmatpush2.msra.mxu0 0.0
      %5260 = vmatprep.subr.mxu0 0.0
      %5261 = vmatpush2.msra.mxu0 0.0
      %5262 = vmatprep.subr.mxu0 0.0
      %5263 = vmatpush2.msra.mxu0 0.0
      %5264 = vmatprep.subr.mxu0 0.0
      %5265 = vmatpush2.msra.mxu0 0.0
      %5266 = vmatprep.subr.mxu0 0.0
      %5267 = vmatpush2.msra.mxu0 0.0
      %5268 = vmatprep.mubr.f32.mxu0 0.0
      %5269 = vmatmul.mubr.f32.gmra.mxu0 %v5202
      %v5270 = vpop.f32.mrf.mxu0
      %v5271 = vadd.f32 0.0, %v5270
      %v5272 = vpop.f32.mrf.mxu0
      %5273 = vdwg.mxu0
      %v5274 = vadd.f32 %v5120, %v5271
      %s5275 = scalar_lea.vmem %s9, 128
      %v5276 = vld [vmem:[%s5275] sm:$0xff]
      %v5277 = vld [vmem:[%s5275 + $0x8] sm:$0xff]
      %5278 = vmatprep.subr.mxu0 0.0
      %5279 = vmatpush1.msra.mxu0 0.0
      %5280 = vmatprep.subr.mxu0 0.0
      %5281 = vmatpush1.msra.mxu0 0.0
      %5282 = vmatprep.subr.mxu0 0.0
      %5283 = vmatpush1.msra.mxu0 0.0
      %5284 = vmatprep.subr.mxu0 0.0
      %5285 = vmatpush1.msra.mxu0 0.0
      %5286 = vmatprep.subr.mxu0 0.0
      %5287 = vmatpush1.msra.mxu0 0.0
      %5288 = vmatprep.subr.mxu0 0.0
      %5289 = vmatpush1.msra.mxu0 0.0
      %5290 = vmatprep.subr.mxu0 0.0
      %5291 = vmatpush1.msra.mxu0 0.0
      %5292 = vmatprep.subr.mxu0 0.0
      %5293 = vmatpush1.msra.mxu0 0.0
      %5294 = vmatprep.subr.mxu0 0.0
      %5295 = vmatpush1.msra.mxu0 0.0
      %5296 = vmatprep.subr.mxu0 0.0
      %5297 = vmatpush1.msra.mxu0 0.0
      %5298 = vmatprep.subr.mxu0 0.0
      %5299 = vmatpush1.msra.mxu0 0.0
      %5300 = vmatprep.subr.mxu0 0.0
      %5301 = vmatpush1.msra.mxu0 0.0
      %5302 = vmatprep.subr.mxu0 0.0
      %5303 = vmatpush1.msra.mxu0 0.0
      %5304 = vmatprep.subr.mxu0 0.0
      %5305 = vmatpush1.msra.mxu0 0.0
      %5306 = vmatprep.subr.mxu0 0.0
      %5307 = vmatpush1.msra.mxu0 %v5277
      %5308 = vmatprep.subr.mxu0 0.0
      %5309 = vmatpush1.msra.mxu0 %v5276
      %5310 = vmatprep.subr.mxu0 0.0
      %5311 = vmatpush2.msra.mxu0 0.0
      %5312 = vmatprep.subr.mxu0 0.0
      %5313 = vmatpush2.msra.mxu0 0.0
      %5314 = vmatprep.subr.mxu0 0.0
      %5315 = vmatpush2.msra.mxu0 0.0
      %5316 = vmatprep.subr.mxu0 0.0
      %5317 = vmatpush2.msra.mxu0 0.0
      %5318 = vmatprep.subr.mxu0 0.0
      %5319 = vmatpush2.msra.mxu0 0.0
      %5320 = vmatprep.subr.mxu0 0.0
      %5321 = vmatpush2.msra.mxu0 0.0
      %5322 = vmatprep.subr.mxu0 0.0
      %5323 = vmatpush2.msra.mxu0 0.0
      %5324 = vmatprep.subr.mxu0 0.0
      %5325 = vmatpush2.msra.mxu0 0.0
      %5326 = vmatprep.subr.mxu0 0.0
      %5327 = vmatpush2.msra.mxu0 0.0
      %5328 = vmatprep.subr.mxu0 0.0
      %5329 = vmatpush2.msra.mxu0 0.0
      %5330 = vmatprep.subr.mxu0 0.0
      %5331 = vmatpush2.msra.mxu0 0.0
      %5332 = vmatprep.subr.mxu0 0.0
      %5333 = vmatpush2.msra.mxu0 0.0
      %5334 = vmatprep.subr.mxu0 0.0
      %5335 = vmatpush2.msra.mxu0 0.0
      %5336 = vmatprep.subr.mxu0 0.0
      %5337 = vmatpush2.msra.mxu0 0.0
      %5338 = vmatprep.subr.mxu0 0.0
      %5339 = vmatpush2.msra.mxu0 0.0
      %5340 = vmatprep.subr.mxu0 0.0
      %5341 = vmatpush2.msra.mxu0 0.0
      %5342 = vmatprep.mubr.f32.mxu0 0.0
      %5343 = vmatmul.mubr.f32.gmra.mxu0 %v4033
      %v5344 = vpop.f32.mrf.mxu0
      %v5345 = vadd.f32 0.0, %v5344
      %v5346 = vpop.f32.mrf.mxu0
      %5347 = vmatprep.mubr.f32.mxu0 0.0
      %5348 = vmatmul.mubr.f32.gmra.mxu0 %v4036
      %v5349 = vpop.f32.mrf.mxu0
      %v5350 = vadd.f32 0.0, %v5349
      %v5351 = vpop.f32.mrf.mxu0
      %5352 = vdwg.mxu0
      %s5353 = scalar_lea.vmem %s10, 8
      %v5354 = vld [vmem:[%s5353] sm:$0x1]
      %v5356 = vsel %vm2285, %v5354, 0
      %5358 = vmatprep.subr.mxu0 0.0
      %5359 = vmatpush1.msra.mxu0 0.0
      %5360 = vmatprep.subr.mxu0 0.0
      %5361 = vmatpush1.msra.mxu0 0.0
      %5362 = vmatprep.subr.mxu0 0.0
      %5363 = vmatpush1.msra.mxu0 0.0
      %5364 = vmatprep.subr.mxu0 0.0
      %5365 = vmatpush1.msra.mxu0 0.0
      %5366 = vmatprep.subr.mxu0 0.0
      %5367 = vmatpush1.msra.mxu0 0.0
      %5368 = vmatprep.subr.mxu0 0.0
      %5369 = vmatpush1.msra.mxu0 0.0
      %5370 = vmatprep.subr.mxu0 0.0
      %5371 = vmatpush1.msra.mxu0 0.0
      %5372 = vmatprep.subr.mxu0 0.0
      %5373 = vmatpush1.msra.mxu0 0.0
      %5374 = vmatprep.subr.mxu0 0.0
      %5375 = vmatpush1.msra.mxu0 0.0
      %5376 = vmatprep.subr.mxu0 0.0
      %5377 = vmatpush1.msra.mxu0 0.0
      %5378 = vmatprep.subr.mxu0 0.0
      %5379 = vmatpush1.msra.mxu0 0.0
      %5380 = vmatprep.subr.mxu0 0.0
      %5381 = vmatpush1.msra.mxu0 0.0
      %5382 = vmatprep.subr.mxu0 0.0
      %5383 = vmatpush1.msra.mxu0 0.0
      %5384 = vmatprep.subr.mxu0 0.0
      %5385 = vmatpush1.msra.mxu0 0.0
      %5386 = vmatprep.subr.mxu0 0.0
      %5387 = vmatpush1.msra.mxu0 %v5350
      %5388 = vmatprep.subr.mxu0 0.0
      %5389 = vmatpush1.msra.mxu0 %v5345
      %5390 = vmatprep.subr.mxu0 0.0
      %5391 = vmatpush2.msra.mxu0 0.0
      %5392 = vmatprep.subr.mxu0 0.0
      %5393 = vmatpush2.msra.mxu0 0.0
      %5394 = vmatprep.subr.mxu0 0.0
      %5395 = vmatpush2.msra.mxu0 0.0
      %5396 = vmatprep.subr.mxu0 0.0
      %5397 = vmatpush2.msra.mxu0 0.0
      %5398 = vmatprep.subr.mxu0 0.0
      %5399 = vmatpush2.msra.mxu0 0.0
      %5400 = vmatprep.subr.mxu0 0.0
      %5401 = vmatpush2.msra.mxu0 0.0
      %5402 = vmatprep.subr.mxu0 0.0
      %5403 = vmatpush2.msra.mxu0 0.0
      %5404 = vmatprep.subr.mxu0 0.0
      %5405 = vmatpush2.msra.mxu0 0.0
      %5406 = vmatprep.subr.mxu0 0.0
      %5407 = vmatpush2.msra.mxu0 0.0
      %5408 = vmatprep.subr.mxu0 0.0
      %5409 = vmatpush2.msra.mxu0 0.0
      %5410 = vmatprep.subr.mxu0 0.0
      %5411 = vmatpush2.msra.mxu0 0.0
      %5412 = vmatprep.subr.mxu0 0.0
      %5413 = vmatpush2.msra.mxu0 0.0
      %5414 = vmatprep.subr.mxu0 0.0
      %5415 = vmatpush2.msra.mxu0 0.0
      %5416 = vmatprep.subr.mxu0 0.0
      %5417 = vmatpush2.msra.mxu0 0.0
      %5418 = vmatprep.subr.mxu0 0.0
      %5419 = vmatpush2.msra.mxu0 0.0
      %5420 = vmatprep.subr.mxu0 0.0
      %5421 = vmatpush2.msra.mxu0 0.0
      %5422 = vmatprep.mubr.f32.mxu0 0.0
      %5423 = vmatmul.mubr.f32.gmra.mxu0 %v5356
      %v5424 = vpop.f32.mrf.mxu0
      %v5425 = vadd.f32 0.0, %v5424
      %v5426 = vpop.f32.mrf.mxu0
      %5427 = vdwg.mxu0
      %v5428 = vadd.f32 %v5274, %v5425
      %v5429 = vld [vmem:[%s12] sm:$0xff]
      %v5430 = vld [vmem:[%s12 + $0x8] sm:$0xff]
      %v5431 = vld [vmem:[%s12 + $0x10] sm:$0xff]
      %v5432 = vld [vmem:[%s12 + $0x18] sm:$0xff]
      %v5434 = vsel %vm2285, %v5428, 0
      %5436 = vmatprep.subr.mxu0 0.0
      %5437 = vmatpush1.msra.mxu0 0.0
      %5438 = vmatprep.subr.mxu0 0.0
      %5439 = vmatpush1.msra.mxu0 0.0
      %5440 = vmatprep.subr.mxu0 0.0
      %5441 = vmatpush1.msra.mxu0 0.0
      %5442 = vmatprep.subr.mxu0 0.0
      %5443 = vmatpush1.msra.mxu0 0.0
      %5444 = vmatprep.subr.mxu0 0.0
      %5445 = vmatpush1.msra.mxu0 0.0
      %5446 = vmatprep.subr.mxu0 0.0
      %5447 = vmatpush1.msra.mxu0 0.0
      %5448 = vmatprep.subr.mxu0 0.0
      %5449 = vmatpush1.msra.mxu0 0.0
      %5450 = vmatprep.subr.mxu0 0.0
      %5451 = vmatpush1.msra.mxu0 0.0
      %5452 = vmatprep.subr.mxu0 0.0
      %5453 = vmatpush1.msra.mxu0 0.0
      %5454 = vmatprep.subr.mxu0 0.0
      %5455 = vmatpush1.msra.mxu0 0.0
      %5456 = vmatprep.subr.mxu0 0.0
      %5457 = vmatpush1.msra.mxu0 0.0
      %5458 = vmatprep.subr.mxu0 0.0
      %5459 = vmatpush1.msra.mxu0 0.0
      %5460 = vmatprep.subr.mxu0 0.0
      %5461 = vmatpush1.msra.mxu0 0.0
      %5462 = vmatprep.subr.mxu0 0.0
      %5463 = vmatpush1.msra.mxu0 0.0
      %5464 = vmatprep.subr.mxu0 %v5432
      %5465 = vmatpush1.msra.mxu0 %v5431
      %5466 = vmatprep.subr.mxu0 %v5430
      %5467 = vmatpush1.msra.mxu0 %v5429
      %5468 = vmatprep.subr.mxu0 0.0
      %5469 = vmatpush2.msra.mxu0 0.0
      %5470 = vmatprep.subr.mxu0 0.0
      %5471 = vmatpush2.msra.mxu0 0.0
      %5472 = vmatprep.subr.mxu0 0.0
      %5473 = vmatpush2.msra.mxu0 0.0
      %5474 = vmatprep.subr.mxu0 0.0
      %5475 = vmatpush2.msra.mxu0 0.0
      %5476 = vmatprep.subr.mxu0 0.0
      %5477 = vmatpush2.msra.mxu0 0.0
      %5478 = vmatprep.subr.mxu0 0.0
      %5479 = vmatpush2.msra.mxu0 0.0
      %5480 = vmatprep.subr.mxu0 0.0
      %5481 = vmatpush2.msra.mxu0 0.0
      %5482 = vmatprep.subr.mxu0 0.0
      %5483 = vmatpush2.msra.mxu0 0.0
      %5484 = vmatprep.subr.mxu0 0.0
      %5485 = vmatpush2.msra.mxu0 0.0
      %5486 = vmatprep.subr.mxu0 0.0
      %5487 = vmatpush2.msra.mxu0 0.0
      %5488 = vmatprep.subr.mxu0 0.0
      %5489 = vmatpush2.msra.mxu0 0.0
      %5490 = vmatprep.subr.mxu0 0.0
      %5491 = vmatpush2.msra.mxu0 0.0
      %5492 = vmatprep.subr.mxu0 0.0
      %5493 = vmatpush2.msra.mxu0 0.0
      %5494 = vmatprep.subr.mxu0 0.0
      %5495 = vmatpush2.msra.mxu0 0.0
      %5496 = vmatprep.subr.mxu0 0.0
      %5497 = vmatpush2.msra.mxu0 0.0
      %5498 = vmatprep.subr.mxu0 0.0
      %5499 = vmatpush2.msra.mxu0 0.0
      %5500 = vmatprep.mubr.f32.mxu0 0.0
      %5501 = vmatmul.mubr.f32.gmra.mxu0 %v5434
      %v5502 = vpop.f32.mrf.mxu0
      %v5503 = vadd.f32 0.0, %v5502
      %v5504 = vpop.f32.mrf.mxu0
      %v5505 = vadd.f32 0.0, %v5504
      %5506 = vdwg.mxu0
      %v5509 = vcombine.low %v5503, %v5505
      %v5511 = vunpack.c.l.s4 1966171168
      %v5512 = vunpack.c.0.s8 %v5511
      %v5513 = vlaneseq
      %v5514 = vshrl.u32 %v5513, 7
      %v5515 = vsub.s32 %v5512, %v5514
      %v5516 = vrot.slane %v5509, %v5515
      %v5518 = vunpack.c.l.s4 1966171168
      %v5519 = vunpack.c.0.s8 %v5518
      %v5520 = vlaneseq
      %v5521 = vshrl.u32 %v5520, 7
      %v5522 = vsub.s32 %v5519, %v5521
      %v5523 = vrot.slane %v5516, %v5522
      %v5525 = vlaneseq
      %vm5526 = vcmp.ge.s32.totalorder %v5525, 0
      %vm5527 = vcmp.lt.s32.totalorder %v5525, 256
      %vm5528 = vmand %vm5526, %vm5527
      %5529 = vst.msk [vmem:[%s440] sm:$0x3] %vm5528, %v5523
      %p5530 = scmp.lt.s32.totalorder %s26, 1
      %s5531 = scalar_select %p5530, %s26, 1
      %s5532 = smul.addr %s5531, 2
      %s5533 = scalar_lea.vmem %s13, %s5532
      // Predicated region
      $region73: #{_dke_apply.1} parent=71 // pred_check
        %p5534 = pneg %p322
      $region74: #{_dke_apply.1} parent=71 // pred_check_branch
        %5536 = sbr.rel (%p5534) target = $region76
      $region75: #{_dke_apply.1} parent=71 // pred_region
        _
      $region76: #{_dke_apply.1} parent=71 // pred_fallthru
        _
    $region72: #{_dke_apply.1} parent=5 // pred_fallthru
      _
    %p5537 = scmp.le.s32.totalorder 2, %s21
    // Predicated region
    $region77: #{_dke_apply.1} parent=5 // pred_check
      %p5538 = pneg %p5537
    $region78: #{_dke_apply.1} parent=5 // pred_check_branch
      %5540 = sbr.rel (%p5538) target = $region80
    $region79: #{_dke_apply.1} parent=5 // pred_region
      %s5541 = ssub.s32 %s21, 2
      // Predicated region
      $region81: #{_dke_apply.1} parent=79 // pred_check
        %p5542 = pneg %p328
      $region82: #{_dke_apply.1} parent=79 // pred_check_branch
        %5544 = sbr.rel (%p5542) target = $region84
      $region83: #{_dke_apply.1} parent=79 // pred_region
        %p5545 = scmp.lt.s32.totalorder %s27, 1
        %s5546 = scalar_select %p5545, %s27, 1
        %s5547 = smul.addr %s5546, 2
        %s5548 = scalar_lea.vmem %s13, %s5547
      $region84: #{_dke_apply.1} parent=79 // pred_fallthru
        _
    $region80: #{_dke_apply.1} parent=5 // pred_fallthru
      _
  $region6: #{_dke_apply.1} parent=0 // loop_footer
    %s25 = sadd.s32 1, %s21
  $region7: #{_dke_apply.1} parent=0 // loop_footer_branch
    %20 = sbr.rel target = $region3
  $region8: #{_dke_apply.1} parent=0 // loop_exit
    _

</llo_original>
